<compile_context>
chip_gen: v6e
topology: v6e:2x2x1
jax: 0.10.0
libtpu: 0.0.40
codegen_flags: <defaults>
</compile_context>

<pallas_src>
import functools

import jax
import jax.numpy as jnp
import numpy as np
from jax.experimental import pallas as pl
from jax.experimental.pallas import tpu as pltpu


# ----------------------------- Pallas kernel --------------------------------


def _resnet_block_kernel(x_ref, w1_ref, w2_ref, o_ref, *, H, W, C):
    x = x_ref[0]                                   # (H, W, C) f32, unpadded

    # Column-index masks for the reflect boundary fix-ups (built once, reused
    # by both im2col calls).
    col = jax.lax.broadcasted_iota(jnp.int32, (H, W, C), 1)
    first_col = col == 0
    last_col = col == (W - 1)

    def im2col_reflect(a):
        """(H, W, C) f32 -> (H*W, 9*C) bf16 patch matrix for a 3x3 conv with
        1-pixel reflect padding.  Column order (di major, dj, ci) matches the
        wrapper-side w.reshape(9*C, C)."""
        # Width (sublane-axis) taps: XLU rolls + boundary selects; no
        # sublane-unaligned slices and no padded-width intermediate.
        prev_col = pltpu.roll(a, shift=1, axis=1)      # [:, j] = a[:, (j-1)%W]
        next_col = pltpu.roll(a, shift=W - 1, axis=1)  # [:, j] = a[:, (j+1)%W]
        left = jnp.where(first_col, next_col, prev_col)   # col refl(j-1)
        right = jnp.where(last_col, prev_col, next_col)   # col refl(j+1)
        # Cast the MXU operands to bf16 here so the remaining patch-build
        # traffic is half-width; the dot below still accumulates in f32.
        w3 = jnp.concatenate(
            [left.astype(jnp.bfloat16), a.astype(jnp.bfloat16),
             right.astype(jnp.bfloat16)], axis=-1)        # (H, W, 3C)
        # Height taps: leading-axis slices/concats (whole (W, C) tiles).
        up = jnp.concatenate([w3[1:2], w3[:H - 1]], axis=0)        # refl(i-1)
        down = jnp.concatenate([w3[1:], w3[H - 2:H - 1]], axis=0)  # refl(i+1)
        return jnp.concatenate([up, w3, down], axis=-1).reshape(H * W, 9 * C)

    def instance_norm(y, eps=1e-5):
        # Fused one-pass statistics (f32) over the spatial axis of (H*W, C).
        mu = jnp.mean(y, axis=0, keepdims=True)
        ms = jnp.mean(y * y, axis=0, keepdims=True)
        return (y - mu) * jax.lax.rsqrt(ms - mu * mu + eps)

    # conv1: one im2col matmul (bf16 operands, f32 accumulate) + IN + ReLU.
    y1 = jnp.dot(im2col_reflect(x), w1_ref[...],
                 preferred_element_type=jnp.float32)        # (H*W, C) f32
    h = jnp.maximum(instance_norm(y1), 0.0).reshape(H, W, C)

    # conv2: one im2col matmul + IN.
    y2 = jnp.dot(im2col_reflect(h), w2_ref[...],
                 preferred_element_type=jnp.float32)        # (H*W, C) f32
    y2 = instance_norm(y2).reshape(H, W, C)

    # Residual add against the already-resident unpadded input block.
    o_ref[0] = x + y2


def resnet_block_pallas(x_nchw, w1, b1, w2, b2):
    """x_nchw: (B, C, H, W) f32.  w: (3, 3, C, C) HWIO.  b: (C,).

    The biases are accepted for interface parity but not used: a per-channel
    bias under an affine-less InstanceNorm is mathematically a no-op."""
    del b1, b2
    B, C, H, W = x_nchw.shape
    # NOTE: in a full network activations would stay NHWC end-to-end; the
    # transposes only exist because the spec interface is NCHW.
    x = jnp.transpose(x_nchw, (0, 2, 3, 1))                  # -> NHWC
    # Weights as (9C, C) bf16 for the single im2col MXU matmul per conv.
    w1m = w1.reshape(9 * C, C).astype(jnp.bfloat16)
    w2m = w2.reshape(9 * C, C).astype(jnp.bfloat16)

    kernel = functools.partial(_resnet_block_kernel, H=H, W=W, C=C)

    # TODO(synk): for production spatial sizes, tile the grid over H row
    #             strips with a halo and use two-pass InstanceNorm stats (and/
    #             or raise vmem_limit_bytes); full-image im2col is fine here.
    # TODO(synk): on v7x, the 9-accumulated-matmul (MRB) path would avoid
    #             materializing the 9x-wide patch matrix entirely.
    # TODO(synk): pipeline_mode=pl.Buffered(1) on the weight specs would drop
    #             their redundant second pipeline buffer (~0.6 MiB).
    out_nhwc = pl.pallas_call(
        kernel,
        out_shape=jax.ShapeDtypeStruct((B, H, W, C), jnp.float32),
        grid_spec=pltpu.PrefetchScalarGridSpec(
            num_scalar_prefetch=0,
            grid=(B,),
            in_specs=[
                pl.BlockSpec((1, H, W, C), lambda b: (b, 0, 0, 0)),
                pl.BlockSpec((9 * C, C), lambda b: (0, 0)),
                pl.BlockSpec((9 * C, C), lambda b: (0, 0)),
            ],
            out_specs=pl.BlockSpec((1, H, W, C), lambda b: (b, 0, 0, 0)),
        ),
        compiler_params=pltpu.CompilerParams(
            dimension_semantics=("parallel",)),
    )(x, w1m, w2m)

    return jnp.transpose(out_nhwc, (0, 3, 1, 2))             # -> NCHW


# ------------------------------ JAX reference --------------------------------


def resnet_block_ref(x_nchw, w1, b1, w2, b2):
    x = jnp.transpose(x_nchw, (0, 2, 3, 1))

    def conv(y, w, b):
        yp = jnp.pad(y, ((0, 0), (1, 1), (1, 1), (0, 0)), mode="reflect")
        out = jax.lax.conv_general_dilated(
            yp, w, window_strides=(1, 1), padding="VALID",
            dimension_numbers=("NHWC", "HWIO", "NHWC"))
        return out + b.reshape(1, 1, 1, -1)

    def inorm(y, eps=1e-5):
        mu = jnp.mean(y, axis=(1, 2), keepdims=True)
        var = jnp.mean((y - mu) ** 2, axis=(1, 2), keepdims=True)
        return (y - mu) * jax.lax.rsqrt(var + eps)

    h = jnp.maximum(inorm(conv(x, w1, b1)), 0.0)
    h = inorm(conv(h, w2, b2))
    return jnp.transpose(x + h, (0, 3, 1, 2))


# ---------------------------------- main -------------------------------------


if __name__ == "__main__":
    # dim=128: a realistic ResnetBlock width for S3R_Net-style generators that
    # also makes the channel/lane axis fully dense on TPU. Spatial kept small.
    B, C, H, W = 2, 128, 16, 16

    key = jax.random.PRNGKey(0)
    kx, kw1, kb1, kw2, kb2 = jax.random.split(key, 5)

    x = jax.random.normal(kx, (B, C, H, W), dtype=jnp.float32)

    # Deterministic PyTorch-like init: U(-bound, bound), bound = 1/sqrt(fan_in)
    fan_in = C * 3 * 3
    bound = 1.0 / np.sqrt(fan_in)
    w1 = jax.random.uniform(kw1, (3, 3, C, C), jnp.float32, -bound, bound)
    b1 = jax.random.uniform(kb1, (C,), jnp.float32, -bound, bound)
    w2 = jax.random.uniform(kw2, (3, 3, C, C), jnp.float32, -bound, bound)
    b2 = jax.random.uniform(kb2, (C,), jnp.float32, -bound, bound)

    out = jax.block_until_ready(resnet_block_pallas(x, w1, b1, w2, b2))
    ref = jax.block_until_ready(resnet_block_ref(x, w1, b1, w2, b2))

    # Tolerance loosened vs. the all-f32 version: MXU operands are bf16
    # (f32 accumulate), the reference is full f32.
    np.testing.assert_allclose(np.asarray(out), np.asarray(ref),
                               rtol=5e-2, atol=5e-2)
    print("KERNEL_OK")
</pallas_src>

<mosaic_0001>
module attributes {stable_mosaic.version = 11 : i64} {
  func.func @_resnet_block_kernel(%arg0: i32, %arg1: memref<1x16x16x128xf32, #tpu.memory_space<vmem>>, %arg2: memref<1152x128xbf16, #tpu.memory_space<vmem>>, %arg3: memref<1152x128xbf16, #tpu.memory_space<vmem>>, %arg4: memref<1x16x16x128xf32, #tpu.memory_space<vmem>>) attributes {dimension_semantics = [#tpu.dimension_semantics<parallel>], iteration_bounds = array<i64: 2>, scalar_prefetch = 0 : i64, scratch_operands = 0 : i64, tpu.core_type = #tpu.core_type<tc>, window_params = [{transform_indices = @transform_0, window_bounds = array<i64: 1, 16, 16, 128>}, {pipeline_mode = #tpu.pipeline_mode<synchronous>, transform_indices = @transform_1, window_bounds = array<i64: 1152, 128>}, {pipeline_mode = #tpu.pipeline_mode<synchronous>, transform_indices = @transform_2, window_bounds = array<i64: 1152, 128>}, {transform_indices = @transform_3, window_bounds = array<i64: 1, 16, 16, 128>}]} {
    %c0 = arith.constant 0 : index
    %c0_0 = arith.constant 0 : index
    %c0_1 = arith.constant 0 : index
    %c0_2 = arith.constant 0 : index
    %0 = vector.load %arg1[%c0, %c0_0, %c0_1, %c0_2] : memref<1x16x16x128xf32, #tpu.memory_space<vmem>>, vector<1x16x16x128xf32>
    %1 = vector.shape_cast %0 : vector<1x16x16x128xf32> to vector<16x16x128xf32>
    %2 = tpu.iota {dimensions = array<i32: 1>} : vector<16x16x128xi32>
    %c0_i32 = arith.constant 0 : i32
    %3 = vector.broadcast %c0_i32 : i32 to vector<16x16x128xi32>
    %4 = arith.cmpi eq, %2, %3 : vector<16x16x128xi32>
    %c15_i32 = arith.constant 15 : i32
    %5 = vector.broadcast %c15_i32 : i32 to vector<16x16x128xi32>
    %6 = arith.cmpi eq, %2, %5 : vector<16x16x128xi32>
    %c1_i32 = arith.constant 1 : i32
    %7 = tpu.dynamic_rotate %1 by %c1_i32 dim 1 : vector<16x16x128xf32>, i32 -> vector<16x16x128xf32>
    %c15_i32_3 = arith.constant 15 : i32
    %8 = tpu.dynamic_rotate %1 by %c15_i32_3 dim 1 : vector<16x16x128xf32>, i32 -> vector<16x16x128xf32>
    %9 = arith.select %4, %8, %7 : vector<16x16x128xi1>, vector<16x16x128xf32>
    %10 = arith.select %6, %7, %8 : vector<16x16x128xi1>, vector<16x16x128xf32>
    %11 = arith.truncf %9 : vector<16x16x128xf32> to vector<16x16x128xbf16>
    %12 = arith.truncf %1 : vector<16x16x128xf32> to vector<16x16x128xbf16>
    %13 = arith.truncf %10 : vector<16x16x128xf32> to vector<16x16x128xbf16>
    %14 = tpu.concatenate %11, %12, %13 in 2 : vector<16x16x128xbf16>, vector<16x16x128xbf16>, vector<16x16x128xbf16> -> vector<16x16x384xbf16>
    %15 = vector.extract_strided_slice %14 {offsets = [1, 0, 0], sizes = [1, 16, 384], strides = [1, 1, 1]} : vector<16x16x384xbf16> to vector<1x16x384xbf16>
    %16 = vector.extract_strided_slice %14 {offsets = [0, 0, 0], sizes = [15, 16, 384], strides = [1, 1, 1]} : vector<16x16x384xbf16> to vector<15x16x384xbf16>
    %17 = tpu.concatenate %15, %16 in 0 : vector<1x16x384xbf16>, vector<15x16x384xbf16> -> vector<16x16x384xbf16>
    %18 = vector.extract_strided_slice %14 {offsets = [1, 0, 0], sizes = [15, 16, 384], strides = [1, 1, 1]} : vector<16x16x384xbf16> to vector<15x16x384xbf16>
    %19 = vector.extract_strided_slice %14 {offsets = [14, 0, 0], sizes = [1, 16, 384], strides = [1, 1, 1]} : vector<16x16x384xbf16> to vector<1x16x384xbf16>
    %20 = tpu.concatenate %18, %19 in 0 : vector<15x16x384xbf16>, vector<1x16x384xbf16> -> vector<16x16x384xbf16>
    %21 = tpu.concatenate %17, %14, %20 in 2 : vector<16x16x384xbf16>, vector<16x16x384xbf16>, vector<16x16x384xbf16> -> vector<16x16x1152xbf16>
    %22 = vector.shape_cast %21 : vector<16x16x1152xbf16> to vector<256x1152xbf16>
    %c0_4 = arith.constant 0 : index
    %c0_5 = arith.constant 0 : index
    %23 = vector.load %arg2[%c0_4, %c0_5] : memref<1152x128xbf16, #tpu.memory_space<vmem>>, vector<1152x128xbf16>
    %cst = arith.constant dense<0.000000e+00> : vector<256x128xf32>
    %24 = tpu.matmul %22, %23, %cst {dimension_numbers = #tpu.dot_dimension_numbers<[1], [0], [0], [1], [0, 0, 1, 1], [], []>} : vector<256x1152xbf16>, vector<1152x128xbf16>, vector<256x128xf32> -> vector<256x128xf32>
    %cst_6 = arith.constant dense<0.000000e+00> : vector<128xf32>
    %25 = vector.multi_reduction <add>, %24, %cst_6 [0] : vector<256x128xf32> to vector<128xf32>
    %26 = vector.shape_cast %25 : vector<128xf32> to vector<1x128xf32>
    %cst_7 = arith.constant 2.560000e+02 : f32
    %27 = vector.broadcast %cst_7 : f32 to vector<1x128xf32>
    %28 = arith.divf %26, %27 : vector<1x128xf32>
    %29 = arith.mulf %24, %24 : vector<256x128xf32>
    %cst_8 = arith.constant dense<0.000000e+00> : vector<128xf32>
    %30 = vector.multi_reduction <add>, %29, %cst_8 [0] : vector<256x128xf32> to vector<128xf32>
    %31 = vector.shape_cast %30 : vector<128xf32> to vector<1x128xf32>
    %cst_9 = arith.constant 2.560000e+02 : f32
    %32 = vector.broadcast %cst_9 : f32 to vector<1x128xf32>
    %33 = arith.divf %31, %32 : vector<1x128xf32>
    %34 = vector.broadcast %28 : vector<1x128xf32> to vector<256x128xf32>
    %35 = arith.subf %24, %34 : vector<256x128xf32>
    %36 = arith.mulf %28, %28 : vector<1x128xf32>
    %37 = arith.subf %33, %36 : vector<1x128xf32>
    %cst_10 = arith.constant 9.99999974E-6 : f32
    %38 = vector.broadcast %cst_10 : f32 to vector<1x128xf32>
    %39 = arith.addf %37, %38 : vector<1x128xf32>
    %40 = math.rsqrt %39 : vector<1x128xf32>
    %41 = vector.broadcast %40 : vector<1x128xf32> to vector<256x128xf32>
    %42 = arith.mulf %35, %41 : vector<256x128xf32>
    %cst_11 = arith.constant 0.000000e+00 : f32
    %43 = vector.broadcast %cst_11 : f32 to vector<256x128xf32>
    %44 = arith.maximumf %42, %43 : vector<256x128xf32>
    %45 = vector.shape_cast %44 : vector<256x128xf32> to vector<16x16x128xf32>
    %c1_i32_12 = arith.constant 1 : i32
    %46 = tpu.dynamic_rotate %45 by %c1_i32_12 dim 1 : vector<16x16x128xf32>, i32 -> vector<16x16x128xf32>
    %c15_i32_13 = arith.constant 15 : i32
    %47 = tpu.dynamic_rotate %45 by %c15_i32_13 dim 1 : vector<16x16x128xf32>, i32 -> vector<16x16x128xf32>
    %48 = arith.select %4, %47, %46 : vector<16x16x128xi1>, vector<16x16x128xf32>
    %49 = arith.select %6, %46, %47 : vector<16x16x128xi1>, vector<16x16x128xf32>
    %50 = arith.truncf %48 : vector<16x16x128xf32> to vector<16x16x128xbf16>
    %51 = arith.truncf %45 : vector<16x16x128xf32> to vector<16x16x128xbf16>
    %52 = arith.truncf %49 : vector<16x16x128xf32> to vector<16x16x128xbf16>
    %53 = tpu.concatenate %50, %51, %52 in 2 : vector<16x16x128xbf16>, vector<16x16x128xbf16>, vector<16x16x128xbf16> -> vector<16x16x384xbf16>
    %54 = vector.extract_strided_slice %53 {offsets = [1, 0, 0], sizes = [1, 16, 384], strides = [1, 1, 1]} : vector<16x16x384xbf16> to vector<1x16x384xbf16>
    %55 = vector.extract_strided_slice %53 {offsets = [0, 0, 0], sizes = [15, 16, 384], strides = [1, 1, 1]} : vector<16x16x384xbf16> to vector<15x16x384xbf16>
    %56 = tpu.concatenate %54, %55 in 0 : vector<1x16x384xbf16>, vector<15x16x384xbf16> -> vector<16x16x384xbf16>
    %57 = vector.extract_strided_slice %53 {offsets = [1, 0, 0], sizes = [15, 16, 384], strides = [1, 1, 1]} : vector<16x16x384xbf16> to vector<15x16x384xbf16>
    %58 = vector.extract_strided_slice %53 {offsets = [14, 0, 0], sizes = [1, 16, 384], strides = [1, 1, 1]} : vector<16x16x384xbf16> to vector<1x16x384xbf16>
    %59 = tpu.concatenate %57, %58 in 0 : vector<15x16x384xbf16>, vector<1x16x384xbf16> -> vector<16x16x384xbf16>
    %60 = tpu.concatenate %56, %53, %59 in 2 : vector<16x16x384xbf16>, vector<16x16x384xbf16>, vector<16x16x384xbf16> -> vector<16x16x1152xbf16>
    %61 = vector.shape_cast %60 : vector<16x16x1152xbf16> to vector<256x1152xbf16>
    %c0_14 = arith.constant 0 : index
    %c0_15 = arith.constant 0 : index
    %62 = vector.load %arg3[%c0_14, %c0_15] : memref<1152x128xbf16, #tpu.memory_space<vmem>>, vector<1152x128xbf16>
    %cst_16 = arith.constant dense<0.000000e+00> : vector<256x128xf32>
    %63 = tpu.matmul %61, %62, %cst_16 {dimension_numbers = #tpu.dot_dimension_numbers<[1], [0], [0], [1], [0, 0, 1, 1], [], []>} : vector<256x1152xbf16>, vector<1152x128xbf16>, vector<256x128xf32> -> vector<256x128xf32>
    %cst_17 = arith.constant dense<0.000000e+00> : vector<128xf32>
    %64 = vector.multi_reduction <add>, %63, %cst_17 [0] : vector<256x128xf32> to vector<128xf32>
    %65 = vector.shape_cast %64 : vector<128xf32> to vector<1x128xf32>
    %cst_18 = arith.constant 2.560000e+02 : f32
    %66 = vector.broadcast %cst_18 : f32 to vector<1x128xf32>
    %67 = arith.divf %65, %66 : vector<1x128xf32>
    %68 = arith.mulf %63, %63 : vector<256x128xf32>
    %cst_19 = arith.constant dense<0.000000e+00> : vector<128xf32>
    %69 = vector.multi_reduction <add>, %68, %cst_19 [0] : vector<256x128xf32> to vector<128xf32>
    %70 = vector.shape_cast %69 : vector<128xf32> to vector<1x128xf32>
    %cst_20 = arith.constant 2.560000e+02 : f32
    %71 = vector.broadcast %cst_20 : f32 to vector<1x128xf32>
    %72 = arith.divf %70, %71 : vector<1x128xf32>
    %73 = vector.broadcast %67 : vector<1x128xf32> to vector<256x128xf32>
    %74 = arith.subf %63, %73 : vector<256x128xf32>
    %75 = arith.mulf %67, %67 : vector<1x128xf32>
    %76 = arith.subf %72, %75 : vector<1x128xf32>
    %cst_21 = arith.constant 9.99999974E-6 : f32
    %77 = vector.broadcast %cst_21 : f32 to vector<1x128xf32>
    %78 = arith.addf %76, %77 : vector<1x128xf32>
    %79 = math.rsqrt %78 : vector<1x128xf32>
    %80 = vector.broadcast %79 : vector<1x128xf32> to vector<256x128xf32>
    %81 = arith.mulf %74, %80 : vector<256x128xf32>
    %82 = vector.shape_cast %81 : vector<256x128xf32> to vector<16x16x128xf32>
    %83 = arith.addf %1, %82 : vector<16x16x128xf32>
    %c0_22 = arith.constant 0 : index
    %c0_23 = arith.constant 0 : index
    %c0_24 = arith.constant 0 : index
    %c0_25 = arith.constant 0 : index
    %84 = vector.load %arg4[%c0_22, %c0_23, %c0_24, %c0_25] : memref<1x16x16x128xf32, #tpu.memory_space<vmem>>, vector<1x16x16x128xf32>
    %85 = vector.shape_cast %84 : vector<1x16x16x128xf32> to vector<16x16x128xf32>
    %86 = vector.shape_cast %83 : vector<16x16x128xf32> to vector<1x16x16x128xf32>
    tpu.vector_store %arg4[%c0_22, %c0_23, %c0_24, %c0_25], %86 {strides = array<i32>} : memref<1x16x16x128xf32, #tpu.memory_space<vmem>>, vector<1x16x16x128xf32>,
    return
  }
  func.func @transform_0(%arg0: i32) -> (i32, i32, i32, i32) {
    %c0_i32 = arith.constant 0 : i32
    %c0_i32_0 = arith.constant 0 : i32
    %c0_i32_1 = arith.constant 0 : i32
    %c0_i32_2 = arith.constant 0 : i32
    return %arg0, %c0_i32, %c0_i32_0, %c0_i32_1 : i32, i32, i32, i32
  }
  func.func @transform_1(%arg0: i32) -> (i32, i32) {
    %c0_i32 = arith.constant 0 : i32
    %c0_i32_0 = arith.constant 0 : i32
    %c0_i32_1 = arith.constant 0 : i32
    return %c0_i32, %c0_i32_0 : i32, i32
  }
  func.func @transform_2(%arg0: i32) -> (i32, i32) {
    %c0_i32 = arith.constant 0 : i32
    %c0_i32_0 = arith.constant 0 : i32
    %c0_i32_1 = arith.constant 0 : i32
    return %c0_i32, %c0_i32_0 : i32, i32
  }
  func.func @transform_3(%arg0: i32) -> (i32, i32, i32, i32) {
    %c0_i32 = arith.constant 0 : i32
    %c0_i32_0 = arith.constant 0 : i32
    %c0_i32_1 = arith.constant 0 : i32
    %c0_i32_2 = arith.constant 0 : i32
    return %arg0, %c0_i32, %c0_i32_0, %c0_i32_1 : i32, i32, i32, i32
  }
}

</mosaic_0001>

<llo_original>
// kernel: tpu_custom_call.1
$region0: #{tpu_custom_call.1}
  #allocation0 [shape = 'u32[]', space=smem, size = 0x4, offset = 0x4, fixed_abs, tag = 'smem constant byte address 0x4 - core index']
  #allocation1 [shape = 'u32[144,128]{1,0:T(1,128)}', space=vmem, size = 0x12000, scoped, tag = 'internal scratch']
  %s0 = inlined_call_operand.hbm [shape: f32[2,16,16,128], index: 0, kind: input, shape index: {}]
  %s1 = inlined_call_operand.hbm [shape: bf16[1152,128], index: 1, kind: input, shape index: {}]
  %s2 = inlined_call_operand.hbm [shape: bf16[1152,128], index: 2, kind: input, shape index: {}]
  %s3 = inlined_call_operand.hbm [shape: f32[2,16,16,128], index: 3, kind: output, shape index: {}]
  %s4 = sld [smem:[#allocation0]]
  $region57: #{tpu_custom_call.1} parent=0
    _
  %s6 = ssub.s32 1, %s4
  %s7 = scalar_select 0, %s6, %s4
  $region1: #{tpu_custom_call.1} parent=0
    #allocation2 [shape = 'u8[262144]{0}', space=vmem, size = 0x40000, scoped, tag = 'input window, operand 0']
    #allocation3 [shape = 's32[2]{0}', space=sflag, size = 0x8, scoped, tag = 'scoped memory for tpu_custom_call.1']
    #allocation4 [shape = 's32[2]{0}', space=sflag, size = 0x8, scoped, tag = 'scoped memory for tpu_custom_call.1']
    #allocation5 [shape = 'u8[294912]{0}', space=vmem, size = 0x48000, scoped, tag = 'input window, operand 1, single buffered']
    #allocation6 [shape = 's32[1]{0}', space=sflag, size = 0x4, scoped, tag = 'scoped memory for tpu_custom_call.1']
    #allocation7 [shape = 'u8[294912]{0}', space=vmem, size = 0x48000, scoped, tag = 'input window, operand 2, single buffered']
    #allocation8 [shape = 'u8[262144]{0}', space=vmem, size = 0x40000, scoped, tag = 'output window, operand 0']
    %8 = vsyncpa [#allocation3], 0
    %s9 = scalar_lea.sflag [#allocation3], 1
    %10 = vsyncpa %s9, 0
    %11 = vsyncpa [#allocation6], 0
    %12 = vsyncpa [#allocation4], 0
    %s13 = scalar_lea.sflag [#allocation4], 1
    %14 = vsyncpa %s13, 0
    loop: start=0, step=1, limit=4
    $region2: #{tpu_custom_call.1} parent=1 // loop_pre_header
      _
    $region3: #{tpu_custom_call.1} parent=1 // loop_header
      %s16 = sphi 0, %s20
      %p17 = scmp.ge.s32.totalorder %s16, 4
      %s26 = sphi 0, %s28
      %s29 = sphi 0, %s26
      %s30 = sphi 0, %s29
      %s46 = sphi 0, %s30
      %s50 = sphi 0, %s50
      %s52 = sphi 0, %s50
      %s53 = sphi 0, %s52
      %s67 = sphi 0, %s53
      %s71 = sphi 0, %s71
      %s73 = sphi 0, %s71
      %s74 = sphi 0, %s73
      %s88 = sphi 0, %s74
      %s94 = sphi 0, %s96
      %s97 = sphi 0, %s94
      %s98 = sphi 0, %s97
      %s114 = sphi 0, %s98
    $region4: #{tpu_custom_call.1} parent=1 // loop_header_branch
      %19 = sbr.rel (%p17) target = $region8
    $region5: #{tpu_custom_call.1} parent=1 // loop_body
      %s21 = ssub.s32 %s16, 1
      %s22 = ssub.s32 %s16, 2
      %s23 = sadd.s32 %s16, 1
      %s24 = ssub.s32 %s16, %s23
      %p25 = scmp.eq.s32.totalorder %s24, 0
      %s27 = sadd.s32 %s26, 1
      %s28 = scalar_select %p25, %s26, %s27
      %p31 = pneg %p25
      %p32 = scmp.eq.s32.totalorder %s16, 1
      %p33 = por %p31, %p32
      %p34 = scmp.ne.s32.totalorder %s26, %s29
      %p35 = scmp.eq.s32.totalorder %s16, 0
      %p36 = por %p34, %p35
      %p37 = scmp.ne.s32.totalorder %s26, %s29
      %p38 = scmp.eq.s32.totalorder %s21, 1
      %p39 = por %p37, %p38
      %p40 = scmp.ne.s32.totalorder %s29, %s30
      %p41 = scmp.eq.s32.totalorder %s21, 0
      %p42 = por %p40, %p41
      %p43 = scmp.ne.s32.totalorder %s29, %s30
      %p44 = scmp.eq.s32.totalorder %s22, 1
      %p45 = por %p43, %p44
      %p47 = scmp.ne.s32.totalorder %s30, %s46
      %p48 = scmp.eq.s32.totalorder %s22, 0
      %p49 = por %p47, %p48
      %s51 = sadd.s32 %s50, 1
      %p54 = scmp.eq.s32.totalorder %s16, 1
      %p55 = scmp.ne.s32.totalorder %s50, %s52
      %p56 = scmp.eq.s32.totalorder %s16, 0
      %p57 = por %p55, %p56
      %p58 = scmp.ne.s32.totalorder %s50, %s52
      %p59 = scmp.eq.s32.totalorder %s21, 1
      %p60 = por %p58, %p59
      %p61 = scmp.ne.s32.totalorder %s52, %s53
      %p62 = scmp.eq.s32.totalorder %s21, 0
      %p63 = por %p61, %p62
      %p64 = scmp.ne.s32.totalorder %s52, %s53
      %p65 = scmp.eq.s32.totalorder %s22, 1
      %p66 = por %p64, %p65
      %p68 = scmp.ne.s32.totalorder %s53, %s67
      %p69 = scmp.eq.s32.totalorder %s22, 0
      %p70 = por %p68, %p69
      %s72 = sadd.s32 %s71, 1
      %p75 = scmp.eq.s32.totalorder %s16, 1
      %p76 = scmp.ne.s32.totalorder %s71, %s73
      %p77 = scmp.eq.s32.totalorder %s16, 0
      %p78 = por %p76, %p77
      %p79 = scmp.ne.s32.totalorder %s71, %s73
      %p80 = scmp.eq.s32.totalorder %s21, 1
      %p81 = por %p79, %p80
      %p82 = scmp.ne.s32.totalorder %s73, %s74
      %p83 = scmp.eq.s32.totalorder %s21, 0
      %p84 = por %p82, %p83
      %p85 = scmp.ne.s32.totalorder %s73, %s74
      %p86 = scmp.eq.s32.totalorder %s22, 1
      %p87 = por %p85, %p86
      %p89 = scmp.ne.s32.totalorder %s74, %s88
      %p90 = scmp.eq.s32.totalorder %s22, 0
      %p91 = por %p89, %p90
      %s92 = ssub.s32 %s16, %s23
      %p93 = scmp.eq.s32.totalorder %s92, 0
      %s95 = sadd.s32 %s94, 1
      %s96 = scalar_select %p93, %s94, %s95
      %p99 = pneg %p93
      %p100 = scmp.eq.s32.totalorder %s16, 1
      %p101 = por %p99, %p100
      %p102 = scmp.ne.s32.totalorder %s94, %s97
      %p103 = scmp.eq.s32.totalorder %s16, 0
      %p104 = por %p102, %p103
      %p105 = scmp.ne.s32.totalorder %s94, %s97
      %p106 = scmp.eq.s32.totalorder %s21, 1
      %p107 = por %p105, %p106
      %p108 = scmp.ne.s32.totalorder %s97, %s98
      %p109 = scmp.eq.s32.totalorder %s21, 0
      %p110 = por %p108, %p109
      %p111 = scmp.ne.s32.totalorder %s97, %s98
      %p112 = scmp.eq.s32.totalorder %s22, 1
      %p113 = por %p111, %p112
      %p115 = scmp.ne.s32.totalorder %s98, %s114
      %p116 = scmp.eq.s32.totalorder %s22, 0
      %p117 = por %p115, %p116
      %p118 = scmp.le.s32.totalorder 1, %s16
      %p119 = scmp.lt.s32.totalorder %s16, 3
      %p120 = pnand %p118, %p119
      %p121 = pneg %p120
      // Predicated region
      $region9: #{tpu_custom_call.1} parent=5 // pred_check
        _
      $region10: #{tpu_custom_call.1} parent=5 // pred_check_branch
        %123 = sbr.rel (%p120) target = $region12
      $region11: #{tpu_custom_call.1} parent=5 // pred_region
        %s124 = ssub.s32 %s16, 1
        // Predicated region
        $region13: #{tpu_custom_call.1} parent=11 // pred_check
          %p125 = pneg %p63
        $region14: #{tpu_custom_call.1} parent=11 // pred_check_branch
          %127 = sbr.rel (%p125) target = $region16
        $region15: #{tpu_custom_call.1} parent=11 // pred_region
          %s129 = ssub.s32 9216, 9216
          %130 = vsyncadd [#allocation6], %s129
          %s131 = sshll.u32 [#allocation5], 4
          %s132 = int_to_ptr.vmem [resolvable:$true] %s131
          %137 = dma.hbm_to_vmem [thread:$0]  %s1, 9216, %s132, [#allocation6], 64, 64, 4
        $region16: #{tpu_custom_call.1} parent=11 // pred_fallthru
          _
        // Predicated region
        $region17: #{tpu_custom_call.1} parent=11 // pred_check
          %p138 = pneg %p84
        $region18: #{tpu_custom_call.1} parent=11 // pred_check_branch
          %140 = sbr.rel (%p138) target = $region20
        $region19: #{tpu_custom_call.1} parent=11 // pred_region
          %s142 = ssub.s32 9216, 9216
          %143 = vsyncadd [#allocation6], %s142
          %s144 = sshll.u32 [#allocation7], 4
          %s145 = int_to_ptr.vmem [resolvable:$true] %s144
          %150 = dma.hbm_to_vmem [thread:$0]  %s2, 9216, %s145, [#allocation6], 64, 64, 4
        $region20: #{tpu_custom_call.1} parent=11 // pred_fallthru
          _
      $region12: #{tpu_custom_call.1} parent=5 // pred_fallthru
        _
      %p151 = scmp.lt.s32.totalorder %s16, 2
      // Predicated region
      $region21: #{tpu_custom_call.1} parent=5 // pred_check
        %p152 = pneg %p151
      $region22: #{tpu_custom_call.1} parent=5 // pred_check_branch
        %154 = sbr.rel (%p152) target = $region24
      $region23: #{tpu_custom_call.1} parent=5 // pred_region
        // Predicated region
        $region25: #{tpu_custom_call.1} parent=23 // pred_check
          %p155 = pneg %p36
        $region26: #{tpu_custom_call.1} parent=23 // pred_check_branch
          %157 = sbr.rel (%p155) target = $region28
        $region27: #{tpu_custom_call.1} parent=23 // pred_region
          %s158 = sand.u32 %s26, 1
          %s159 = scalar_lea.sflag [#allocation3], %s158
          %s160 = sand.u32 %s26, 1
          %s161 = smul.addr %s160, 256
          %s162 = scalar_lea.vmem [#allocation2], %s161
          %s164 = ssub.s32 4096, 4096
          %165 = vsyncadd %s159, %s164
          %s166 = smul.addr %s16, 32
          %s167 = smul.addr %s166, 128
          %s168 = scalar_lea.hbm %s0, %s167
          %s169 = sshll.u32 %s162, 4
          %s170 = int_to_ptr.vmem [resolvable:$true] %s169
          %175 = dma.hbm_to_vmem [thread:$0]  %s168, 4096, %s170, %s159, 128, 128, 8
        $region28: #{tpu_custom_call.1} parent=23 // pred_fallthru
          _
      $region24: #{tpu_custom_call.1} parent=5 // pred_fallthru
        _
      %p176 = scmp.le.s32.totalorder 1, %s16
      %p177 = scmp.lt.s32.totalorder %s16, 3
      %p178 = pnand %p176, %p177
      %p179 = pneg %p178
      // Predicated region
      $region29: #{tpu_custom_call.1} parent=5 // pred_check
        _
      $region30: #{tpu_custom_call.1} parent=5 // pred_check_branch
        %181 = sbr.rel (%p178) target = $region32
      $region31: #{tpu_custom_call.1} parent=5 // pred_region
        %s182 = ssub.s32 %s16, 1
        %s183 = sand.u32 %s29, 1
        %s184 = scalar_lea.sflag [#allocation3], %s183
        %s185 = sand.u32 %s29, 1
        %s186 = smul.addr %s185, 256
        %s187 = scalar_lea.vmem [#allocation2], %s186
        // Predicated region
        $region33: #{tpu_custom_call.1} parent=31 // pred_check
          %p188 = pneg %p42
        $region34: #{tpu_custom_call.1} parent=31 // pred_check_branch
          %190 = sbr.rel (%p188) target = $region36
        $region35: #{tpu_custom_call.1} parent=31 // pred_region
          %191 = dma.done %s184, 4096
        $region36: #{tpu_custom_call.1} parent=31 // pred_fallthru
          _
        // Predicated region
        $region37: #{tpu_custom_call.1} parent=31 // pred_check
          %p192 = pneg %p63
        $region38: #{tpu_custom_call.1} parent=31 // pred_check_branch
          %194 = sbr.rel (%p192) target = $region40
        $region39: #{tpu_custom_call.1} parent=31 // pred_region
          %195 = dma.done [#allocation6], 9216
        $region40: #{tpu_custom_call.1} parent=31 // pred_fallthru
          _
        // Predicated region
        $region41: #{tpu_custom_call.1} parent=31 // pred_check
          %p196 = pneg %p84
        $region42: #{tpu_custom_call.1} parent=31 // pred_check_branch
          %198 = sbr.rel (%p196) target = $region44
        $region43: #{tpu_custom_call.1} parent=31 // pred_region
          %199 = dma.done [#allocation6], 9216
        $region44: #{tpu_custom_call.1} parent=31 // pred_fallthru
          _
        %s200 = sand.u32 %s29, 1
        %s201 = scalar_lea.sflag [#allocation3], %s200
        %s202 = sand.u32 %s29, 1
        %s203 = smul.addr %s202, 256
        %s204 = scalar_lea.vmem [#allocation2], %s203
        %p205 = pneg %p42
        %p206 = pneg %p39
        %p207 = pneg %p63
        %p208 = pneg %p60
        %p209 = pneg %p84
        %p210 = pneg %p81
        %p211 = pneg %p110
        %p212 = pneg %p107
        %s213 = sand.u32 %s97, 1
        %s214 = scalar_lea.sflag [#allocation4], %s213
        %s215 = sand.u32 %s97, 1
        %s216 = smul.addr %s215, 256
        %s217 = scalar_lea.vmem [#allocation8], %s216
        %v219 = vld [vmem:[%s187] sm:$0xff]
        %v220 = vld [vmem:[%s187 + $0x8] sm:$0xff]
        %v221 = vld [vmem:[%s187 + $0x10] sm:$0xff]
        %v222 = vld [vmem:[%s187 + $0x18] sm:$0xff]
        %v223 = vld [vmem:[%s187 + $0x20] sm:$0xff]
        %v224 = vld [vmem:[%s187 + $0x28] sm:$0xff]
        %v225 = vld [vmem:[%s187 + $0x30] sm:$0xff]
        %v226 = vld [vmem:[%s187 + $0x38] sm:$0xff]
        %v227 = vld [vmem:[%s187 + $0x40] sm:$0xff]
        %v228 = vld [vmem:[%s187 + $0x48] sm:$0xff]
        %v229 = vld [vmem:[%s187 + $0x50] sm:$0xff]
        %v230 = vld [vmem:[%s187 + $0x58] sm:$0xff]
        %v231 = vld [vmem:[%s187 + $0x60] sm:$0xff]
        %v232 = vld [vmem:[%s187 + $0x68] sm:$0xff]
        %v233 = vld [vmem:[%s187 + $0x70] sm:$0xff]
        %v234 = vld [vmem:[%s187 + $0x78] sm:$0xff]
        %v235 = vld [vmem:[%s187 + $0x80] sm:$0xff]
        %v236 = vld [vmem:[%s187 + $0x88] sm:$0xff]
        %v237 = vld [vmem:[%s187 + $0x90] sm:$0xff]
        %v238 = vld [vmem:[%s187 + $0x98] sm:$0xff]
        %v239 = vld [vmem:[%s187 + $0xa0] sm:$0xff]
        %v240 = vld [vmem:[%s187 + $0xa8] sm:$0xff]
        %v241 = vld [vmem:[%s187 + $0xb0] sm:$0xff]
        %v242 = vld [vmem:[%s187 + $0xb8] sm:$0xff]
        %v243 = vld [vmem:[%s187 + $0xc0] sm:$0xff]
        %v244 = vld [vmem:[%s187 + $0xc8] sm:$0xff]
        %v245 = vld [vmem:[%s187 + $0xd0] sm:$0xff]
        %v246 = vld [vmem:[%s187 + $0xd8] sm:$0xff]
        %v247 = vld [vmem:[%s187 + $0xe0] sm:$0xff]
        %v248 = vld [vmem:[%s187 + $0xe8] sm:$0xff]
        %v249 = vld [vmem:[%s187 + $0xf0] sm:$0xff]
        %v250 = vld [vmem:[%s187 + $0xf8] sm:$0xff]
        %v251 = vlaneseq
        %v252 = vshrl.u32 %v251, 7
        %v253 = vadd.s32 %v252, 8
        %vm254 = vcmp.eq.s32.totalorder %v252, 0
        %vm255 = vcmp.eq.s32.totalorder %v253, 0
        %vm256 = vcmp.eq.s32.totalorder %v252, 15
        %vm257 = vcmp.eq.s32.totalorder %v253, 15
        %v258 = vrot.slane %v219, 7
        %v259 = vrot.slane %v221, 7
        %v260 = vrot.slane %v223, 7
        %v261 = vrot.slane %v225, 7
        %v262 = vrot.slane %v227, 7
        %v263 = vrot.slane %v229, 7
        %v264 = vrot.slane %v231, 7
        %v265 = vrot.slane %v233, 7
        %v266 = vrot.slane %v235, 7
        %v267 = vrot.slane %v237, 7
        %v268 = vrot.slane %v239, 7
        %v269 = vrot.slane %v241, 7
        %v270 = vrot.slane %v243, 7
        %v271 = vrot.slane %v245, 7
        %v272 = vrot.slane %v247, 7
        %v273 = vrot.slane %v249, 7
        %v274 = vrot.slane %v220, 7
        %v275 = vrot.slane %v222, 7
        %v276 = vrot.slane %v224, 7
        %v277 = vrot.slane %v226, 7
        %v278 = vrot.slane %v228, 7
        %v279 = vrot.slane %v230, 7
        %v280 = vrot.slane %v232, 7
        %v281 = vrot.slane %v234, 7
        %v282 = vrot.slane %v236, 7
        %v283 = vrot.slane %v238, 7
        %v284 = vrot.slane %v240, 7
        %v285 = vrot.slane %v242, 7
        %v286 = vrot.slane %v244, 7
        %v287 = vrot.slane %v246, 7
        %v288 = vrot.slane %v248, 7
        %v289 = vrot.slane %v250, 7
        %vm290 = vcmp.lt.s32.totalorder %v252, 1
        %v291 = vsel %vm290, %v258, %v274
        %v292 = vsel %vm290, %v259, %v275
        %v293 = vsel %vm290, %v260, %v276
        %v294 = vsel %vm290, %v261, %v277
        %v295 = vsel %vm290, %v262, %v278
        %v296 = vsel %vm290, %v263, %v279
        %v297 = vsel %vm290, %v264, %v280
        %v298 = vsel %vm290, %v265, %v281
        %v299 = vsel %vm290, %v266, %v282
        %v300 = vsel %vm290, %v267, %v283
        %v301 = vsel %vm290, %v268, %v284
        %v302 = vsel %vm290, %v269, %v285
        %v303 = vsel %vm290, %v270, %v286
        %v304 = vsel %vm290, %v271, %v287
        %v305 = vsel %vm290, %v272, %v288
        %v306 = vsel %vm290, %v273, %v289
        %v307 = vsel %vm290, %v274, %v258
        %v308 = vsel %vm290, %v275, %v259
        %v309 = vsel %vm290, %v276, %v260
        %v310 = vsel %vm290, %v277, %v261
        %v311 = vsel %vm290, %v278, %v262
        %v312 = vsel %vm290, %v279, %v263
        %v313 = vsel %vm290, %v280, %v264
        %v314 = vsel %vm290, %v281, %v265
        %v315 = vsel %vm290, %v282, %v266
        %v316 = vsel %vm290, %v283, %v267
        %v317 = vsel %vm290, %v284, %v268
        %v318 = vsel %vm290, %v285, %v269
        %v319 = vsel %vm290, %v286, %v270
        %v320 = vsel %vm290, %v287, %v271
        %v321 = vsel %vm290, %v288, %v272
        %v322 = vsel %vm290, %v289, %v273
        %v323 = vrot.slane %v219, 1
        %v324 = vrot.slane %v221, 1
        %v325 = vrot.slane %v223, 1
        %v326 = vrot.slane %v225, 1
        %v327 = vrot.slane %v227, 1
        %v328 = vrot.slane %v229, 1
        %v329 = vrot.slane %v231, 1
        %v330 = vrot.slane %v233, 1
        %v331 = vrot.slane %v235, 1
        %v332 = vrot.slane %v237, 1
        %v333 = vrot.slane %v239, 1
        %v334 = vrot.slane %v241, 1
        %v335 = vrot.slane %v243, 1
        %v336 = vrot.slane %v245, 1
        %v337 = vrot.slane %v247, 1
        %v338 = vrot.slane %v249, 1
        %v339 = vrot.slane %v220, 1
        %v340 = vrot.slane %v222, 1
        %v341 = vrot.slane %v224, 1
        %v342 = vrot.slane %v226, 1
        %v343 = vrot.slane %v228, 1
        %v344 = vrot.slane %v230, 1
        %v345 = vrot.slane %v232, 1
        %v346 = vrot.slane %v234, 1
        %v347 = vrot.slane %v236, 1
        %v348 = vrot.slane %v238, 1
        %v349 = vrot.slane %v240, 1
        %v350 = vrot.slane %v242, 1
        %v351 = vrot.slane %v244, 1
        %v352 = vrot.slane %v246, 1
        %v353 = vrot.slane %v248, 1
        %v354 = vrot.slane %v250, 1
        %vm355 = vcmp.lt.s32.totalorder %v252, 7
        %v356 = vsel %vm355, %v323, %v339
        %v357 = vsel %vm355, %v324, %v340
        %v358 = vsel %vm355, %v325, %v341
        %v359 = vsel %vm355, %v326, %v342
        %v360 = vsel %vm355, %v327, %v343
        %v361 = vsel %vm355, %v328, %v344
        %v362 = vsel %vm355, %v329, %v345
        %v363 = vsel %vm355, %v330, %v346
        %v364 = vsel %vm355, %v331, %v347
        %v365 = vsel %vm355, %v332, %v348
        %v366 = vsel %vm355, %v333, %v349
        %v367 = vsel %vm355, %v334, %v350
        %v368 = vsel %vm355, %v335, %v351
        %v369 = vsel %vm355, %v336, %v352
        %v370 = vsel %vm355, %v337, %v353
        %v371 = vsel %vm355, %v338, %v354
        %v372 = vsel %vm355, %v339, %v323
        %v373 = vsel %vm355, %v340, %v324
        %v374 = vsel %vm355, %v341, %v325
        %v375 = vsel %vm355, %v342, %v326
        %v376 = vsel %vm355, %v343, %v327
        %v377 = vsel %vm355, %v344, %v328
        %v378 = vsel %vm355, %v345, %v329
        %v379 = vsel %vm355, %v346, %v330
        %v380 = vsel %vm355, %v347, %v331
        %v381 = vsel %vm355, %v348, %v332
        %v382 = vsel %vm355, %v349, %v333
        %v383 = vsel %vm355, %v350, %v334
        %v384 = vsel %vm355, %v351, %v335
        %v385 = vsel %vm355, %v352, %v336
        %v386 = vsel %vm355, %v353, %v337
        %v387 = vsel %vm355, %v354, %v338
        %v388 = vsel %vm254, %v356, %v307
        %v389 = vsel %vm255, %v372, %v291
        %v390 = vsel %vm254, %v357, %v308
        %v391 = vsel %vm255, %v373, %v292
        %v392 = vsel %vm254, %v358, %v309
        %v393 = vsel %vm255, %v374, %v293
        %v394 = vsel %vm254, %v359, %v310
        %v395 = vsel %vm255, %v375, %v294
        %v396 = vsel %vm254, %v360, %v311
        %v397 = vsel %vm255, %v376, %v295
        %v398 = vsel %vm254, %v361, %v312
        %v399 = vsel %vm255, %v377, %v296
        %v400 = vsel %vm254, %v362, %v313
        %v401 = vsel %vm255, %v378, %v297
        %v402 = vsel %vm254, %v363, %v314
        %v403 = vsel %vm255, %v379, %v298
        %v404 = vsel %vm254, %v364, %v315
        %v405 = vsel %vm255, %v380, %v299
        %v406 = vsel %vm254, %v365, %v316
        %v407 = vsel %vm255, %v381, %v300
        %v408 = vsel %vm254, %v366, %v317
        %v409 = vsel %vm255, %v382, %v301
        %v410 = vsel %vm254, %v367, %v318
        %v411 = vsel %vm255, %v383, %v302
        %v412 = vsel %vm254, %v368, %v319
        %v413 = vsel %vm255, %v384, %v303
        %v414 = vsel %vm254, %v369, %v320
        %v415 = vsel %vm255, %v385, %v304
        %v416 = vsel %vm254, %v370, %v321
        %v417 = vsel %vm255, %v386, %v305
        %v418 = vsel %vm254, %v371, %v322
        %v419 = vsel %vm255, %v387, %v306
        %v420 = vsel %vm256, %v307, %v356
        %v421 = vsel %vm257, %v291, %v372
        %v422 = vsel %vm256, %v308, %v357
        %v423 = vsel %vm257, %v292, %v373
        %v424 = vsel %vm256, %v309, %v358
        %v425 = vsel %vm257, %v293, %v374
        %v426 = vsel %vm256, %v310, %v359
        %v427 = vsel %vm257, %v294, %v375
        %v428 = vsel %vm256, %v311, %v360
        %v429 = vsel %vm257, %v295, %v376
        %v430 = vsel %vm256, %v312, %v361
        %v431 = vsel %vm257, %v296, %v377
        %v432 = vsel %vm256, %v313, %v362
        %v433 = vsel %vm257, %v297, %v378
        %v434 = vsel %vm256, %v314, %v363
        %v435 = vsel %vm257, %v298, %v379
        %v436 = vsel %vm256, %v315, %v364
        %v437 = vsel %vm257, %v299, %v380
        %v438 = vsel %vm256, %v316, %v365
        %v439 = vsel %vm257, %v300, %v381
        %v440 = vsel %vm256, %v317, %v366
        %v441 = vsel %vm257, %v301, %v382
        %v442 = vsel %vm256, %v318, %v367
        %v443 = vsel %vm257, %v302, %v383
        %v444 = vsel %vm256, %v319, %v368
        %v445 = vsel %vm257, %v303, %v384
        %v446 = vsel %vm256, %v320, %v369
        %v447 = vsel %vm257, %v304, %v385
        %v448 = vsel %vm256, %v321, %v370
        %v449 = vsel %vm257, %v305, %v386
        %v450 = vsel %vm256, %v322, %v371
        %v451 = vsel %vm257, %v306, %v387
        %v452 = vpack.c.bf16 %v389, %v388
        %v453 = vpack.c.bf16 %v391, %v390
        %v454 = vpack.c.bf16 %v393, %v392
        %v455 = vpack.c.bf16 %v395, %v394
        %v456 = vpack.c.bf16 %v397, %v396
        %v457 = vpack.c.bf16 %v399, %v398
        %v458 = vpack.c.bf16 %v401, %v400
        %v459 = vpack.c.bf16 %v403, %v402
        %v460 = vpack.c.bf16 %v405, %v404
        %v461 = vpack.c.bf16 %v407, %v406
        %v462 = vpack.c.bf16 %v409, %v408
        %v463 = vpack.c.bf16 %v411, %v410
        %v464 = vpack.c.bf16 %v413, %v412
        %v465 = vpack.c.bf16 %v415, %v414
        %v466 = vpack.c.bf16 %v417, %v416
        %v467 = vpack.c.bf16 %v419, %v418
        %v468 = vpack.c.bf16 %v220, %v219
        %v469 = vpack.c.bf16 %v222, %v221
        %v470 = vpack.c.bf16 %v224, %v223
        %v471 = vpack.c.bf16 %v226, %v225
        %v472 = vpack.c.bf16 %v228, %v227
        %v473 = vpack.c.bf16 %v230, %v229
        %v474 = vpack.c.bf16 %v232, %v231
        %v475 = vpack.c.bf16 %v234, %v233
        %v476 = vpack.c.bf16 %v236, %v235
        %v477 = vpack.c.bf16 %v238, %v237
        %v478 = vpack.c.bf16 %v240, %v239
        %v479 = vpack.c.bf16 %v242, %v241
        %v480 = vpack.c.bf16 %v244, %v243
        %v481 = vpack.c.bf16 %v246, %v245
        %v482 = vpack.c.bf16 %v248, %v247
        %v483 = vpack.c.bf16 %v250, %v249
        %v484 = vpack.c.bf16 %v421, %v420
        %v485 = vpack.c.bf16 %v423, %v422
        %v486 = vpack.c.bf16 %v425, %v424
        %v487 = vpack.c.bf16 %v427, %v426
        %v488 = vpack.c.bf16 %v429, %v428
        %v489 = vpack.c.bf16 %v431, %v430
        %v490 = vpack.c.bf16 %v433, %v432
        %v491 = vpack.c.bf16 %v435, %v434
        %v492 = vpack.c.bf16 %v437, %v436
        %v493 = vpack.c.bf16 %v439, %v438
        %v494 = vpack.c.bf16 %v441, %v440
        %v495 = vpack.c.bf16 %v443, %v442
        %v496 = vpack.c.bf16 %v445, %v444
        %v497 = vpack.c.bf16 %v447, %v446
        %v498 = vpack.c.bf16 %v449, %v448
        %v499 = vpack.c.bf16 %v451, %v450
        %v500 = vld [vmem:[#allocation5] sm:$0xf]
        %v501 = vld [vmem:[#allocation5 + $0x4] sm:$0xf]
        %v502 = vld [vmem:[#allocation5 + $0x8] sm:$0xf]
        %v503 = vld [vmem:[#allocation5 + $0xc] sm:$0xf]
        %v504 = vld [vmem:[#allocation5 + $0x10] sm:$0xf]
        %v505 = vld [vmem:[#allocation5 + $0x14] sm:$0xf]
        %v506 = vld [vmem:[#allocation5 + $0x18] sm:$0xf]
        %v507 = vld [vmem:[#allocation5 + $0x1c] sm:$0xf]
        %v508 = vld [vmem:[#allocation5 + $0x20] sm:$0xf]
        %v509 = vld [vmem:[#allocation5 + $0x24] sm:$0xf]
        %v510 = vld [vmem:[#allocation5 + $0x28] sm:$0xf]
        %v511 = vld [vmem:[#allocation5 + $0x2c] sm:$0xf]
        %v512 = vld [vmem:[#allocation5 + $0x30] sm:$0xf]
        %v513 = vld [vmem:[#allocation5 + $0x34] sm:$0xf]
        %v514 = vld [vmem:[#allocation5 + $0x38] sm:$0xf]
        %v515 = vld [vmem:[#allocation5 + $0x3c] sm:$0xf]
        %v516 = vld [vmem:[#allocation5 + $0x40] sm:$0xf]
        %v517 = vld [vmem:[#allocation5 + $0x44] sm:$0xf]
        %v518 = vld [vmem:[#allocation5 + $0x48] sm:$0xf]
        %v519 = vld [vmem:[#allocation5 + $0x4c] sm:$0xf]
        %v520 = vld [vmem:[#allocation5 + $0x50] sm:$0xf]
        %v521 = vld [vmem:[#allocation5 + $0x54] sm:$0xf]
        %v522 = vld [vmem:[#allocation5 + $0x58] sm:$0xf]
        %v523 = vld [vmem:[#allocation5 + $0x5c] sm:$0xf]
        %v524 = vld [vmem:[#allocation5 + $0x60] sm:$0xf]
        %v525 = vld [vmem:[#allocation5 + $0x64] sm:$0xf]
        %v526 = vld [vmem:[#allocation5 + $0x68] sm:$0xf]
        %v527 = vld [vmem:[#allocation5 + $0x6c] sm:$0xf]
        %v528 = vld [vmem:[#allocation5 + $0x70] sm:$0xf]
        %v529 = vld [vmem:[#allocation5 + $0x74] sm:$0xf]
        %v530 = vld [vmem:[#allocation5 + $0x78] sm:$0xf]
        %v531 = vld [vmem:[#allocation5 + $0x7c] sm:$0xf]
        %v532 = vld [vmem:[#allocation5 + $0x80] sm:$0xf]
        %v533 = vld [vmem:[#allocation5 + $0x84] sm:$0xf]
        %v534 = vld [vmem:[#allocation5 + $0x88] sm:$0xf]
        %v535 = vld [vmem:[#allocation5 + $0x8c] sm:$0xf]
        %v536 = vld [vmem:[#allocation5 + $0x90] sm:$0xf]
        %v537 = vld [vmem:[#allocation5 + $0x94] sm:$0xf]
        %v538 = vld [vmem:[#allocation5 + $0x98] sm:$0xf]
        %v539 = vld [vmem:[#allocation5 + $0x9c] sm:$0xf]
        %v540 = vld [vmem:[#allocation5 + $0xa0] sm:$0xf]
        %v541 = vld [vmem:[#allocation5 + $0xa4] sm:$0xf]
        %v542 = vld [vmem:[#allocation5 + $0xa8] sm:$0xf]
        %v543 = vld [vmem:[#allocation5 + $0xac] sm:$0xf]
        %v544 = vld [vmem:[#allocation5 + $0xb0] sm:$0xf]
        %v545 = vld [vmem:[#allocation5 + $0xb4] sm:$0xf]
        %v546 = vld [vmem:[#allocation5 + $0xb8] sm:$0xf]
        %v547 = vld [vmem:[#allocation5 + $0xbc] sm:$0xf]
        %v548 = vld [vmem:[#allocation5 + $0xc0] sm:$0xf]
        %v549 = vld [vmem:[#allocation5 + $0xc4] sm:$0xf]
        %v550 = vld [vmem:[#allocation5 + $0xc8] sm:$0xf]
        %v551 = vld [vmem:[#allocation5 + $0xcc] sm:$0xf]
        %v552 = vld [vmem:[#allocation5 + $0xd0] sm:$0xf]
        %v553 = vld [vmem:[#allocation5 + $0xd4] sm:$0xf]
        %v554 = vld [vmem:[#allocation5 + $0xd8] sm:$0xf]
        %v555 = vld [vmem:[#allocation5 + $0xdc] sm:$0xf]
        %v556 = vld [vmem:[#allocation5 + $0xe0] sm:$0xf]
        %v557 = vld [vmem:[#allocation5 + $0xe4] sm:$0xf]
        %v558 = vld [vmem:[#allocation5 + $0xe8] sm:$0xf]
        %v559 = vld [vmem:[#allocation5 + $0xec] sm:$0xf]
        %v560 = vld [vmem:[#allocation5 + $0xf0] sm:$0xf]
        %v561 = vld [vmem:[#allocation5 + $0xf4] sm:$0xf]
        %v562 = vld [vmem:[#allocation5 + $0xf8] sm:$0xf]
        %v563 = vld [vmem:[#allocation5 + $0xfc] sm:$0xf]
        %v564 = vld [vmem:[#allocation5 + $0x100] sm:$0xf]
        %v565 = vld [vmem:[#allocation5 + $0x104] sm:$0xf]
        %v566 = vld [vmem:[#allocation5 + $0x108] sm:$0xf]
        %v567 = vld [vmem:[#allocation5 + $0x10c] sm:$0xf]
        %v568 = vld [vmem:[#allocation5 + $0x110] sm:$0xf]
        %v569 = vld [vmem:[#allocation5 + $0x114] sm:$0xf]
        %v570 = vld [vmem:[#allocation5 + $0x118] sm:$0xf]
        %v571 = vld [vmem:[#allocation5 + $0x11c] sm:$0xf]
        %v572 = vld [vmem:[#allocation5 + $0x120] sm:$0xf]
        %v573 = vld [vmem:[#allocation5 + $0x124] sm:$0xf]
        %v574 = vld [vmem:[#allocation5 + $0x128] sm:$0xf]
        %v575 = vld [vmem:[#allocation5 + $0x12c] sm:$0xf]
        %v576 = vld [vmem:[#allocation5 + $0x130] sm:$0xf]
        %v577 = vld [vmem:[#allocation5 + $0x134] sm:$0xf]
        %v578 = vld [vmem:[#allocation5 + $0x138] sm:$0xf]
        %v579 = vld [vmem:[#allocation5 + $0x13c] sm:$0xf]
        %v580 = vld [vmem:[#allocation5 + $0x140] sm:$0xf]
        %v581 = vld [vmem:[#allocation5 + $0x144] sm:$0xf]
        %v582 = vld [vmem:[#allocation5 + $0x148] sm:$0xf]
        %v583 = vld [vmem:[#allocation5 + $0x14c] sm:$0xf]
        %v584 = vld [vmem:[#allocation5 + $0x150] sm:$0xf]
        %v585 = vld [vmem:[#allocation5 + $0x154] sm:$0xf]
        %v586 = vld [vmem:[#allocation5 + $0x158] sm:$0xf]
        %v587 = vld [vmem:[#allocation5 + $0x15c] sm:$0xf]
        %v588 = vld [vmem:[#allocation5 + $0x160] sm:$0xf]
        %v589 = vld [vmem:[#allocation5 + $0x164] sm:$0xf]
        %v590 = vld [vmem:[#allocation5 + $0x168] sm:$0xf]
        %v591 = vld [vmem:[#allocation5 + $0x16c] sm:$0xf]
        %v592 = vld [vmem:[#allocation5 + $0x170] sm:$0xf]
        %v593 = vld [vmem:[#allocation5 + $0x174] sm:$0xf]
        %v594 = vld [vmem:[#allocation5 + $0x178] sm:$0xf]
        %v595 = vld [vmem:[#allocation5 + $0x17c] sm:$0xf]
        %v596 = vld [vmem:[#allocation5 + $0x180] sm:$0xf]
        %v597 = vld [vmem:[#allocation5 + $0x184] sm:$0xf]
        %v598 = vld [vmem:[#allocation5 + $0x188] sm:$0xf]
        %v599 = vld [vmem:[#allocation5 + $0x18c] sm:$0xf]
        %v600 = vld [vmem:[#allocation5 + $0x190] sm:$0xf]
        %v601 = vld [vmem:[#allocation5 + $0x194] sm:$0xf]
        %v602 = vld [vmem:[#allocation5 + $0x198] sm:$0xf]
        %v603 = vld [vmem:[#allocation5 + $0x19c] sm:$0xf]
        %v604 = vld [vmem:[#allocation5 + $0x1a0] sm:$0xf]
        %v605 = vld [vmem:[#allocation5 + $0x1a4] sm:$0xf]
        %v606 = vld [vmem:[#allocation5 + $0x1a8] sm:$0xf]
        %v607 = vld [vmem:[#allocation5 + $0x1ac] sm:$0xf]
        %v608 = vld [vmem:[#allocation5 + $0x1b0] sm:$0xf]
        %v609 = vld [vmem:[#allocation5 + $0x1b4] sm:$0xf]
        %v610 = vld [vmem:[#allocation5 + $0x1b8] sm:$0xf]
        %v611 = vld [vmem:[#allocation5 + $0x1bc] sm:$0xf]
        %v612 = vld [vmem:[#allocation5 + $0x1c0] sm:$0xf]
        %v613 = vld [vmem:[#allocation5 + $0x1c4] sm:$0xf]
        %v614 = vld [vmem:[#allocation5 + $0x1c8] sm:$0xf]
        %v615 = vld [vmem:[#allocation5 + $0x1cc] sm:$0xf]
        %v616 = vld [vmem:[#allocation5 + $0x1d0] sm:$0xf]
        %v617 = vld [vmem:[#allocation5 + $0x1d4] sm:$0xf]
        %v618 = vld [vmem:[#allocation5 + $0x1d8] sm:$0xf]
        %v619 = vld [vmem:[#allocation5 + $0x1dc] sm:$0xf]
        %v620 = vld [vmem:[#allocation5 + $0x1e0] sm:$0xf]
        %v621 = vld [vmem:[#allocation5 + $0x1e4] sm:$0xf]
        %v622 = vld [vmem:[#allocation5 + $0x1e8] sm:$0xf]
        %v623 = vld [vmem:[#allocation5 + $0x1ec] sm:$0xf]
        %v624 = vld [vmem:[#allocation5 + $0x1f0] sm:$0xf]
        %v625 = vld [vmem:[#allocation5 + $0x1f4] sm:$0xf]
        %v626 = vld [vmem:[#allocation5 + $0x1f8] sm:$0xf]
        %v627 = vld [vmem:[#allocation5 + $0x1fc] sm:$0xf]
        %v628 = vld [vmem:[#allocation5 + $0x200] sm:$0xf]
        %v629 = vld [vmem:[#allocation5 + $0x204] sm:$0xf]
        %v630 = vld [vmem:[#allocation5 + $0x208] sm:$0xf]
        %v631 = vld [vmem:[#allocation5 + $0x20c] sm:$0xf]
        %v632 = vld [vmem:[#allocation5 + $0x210] sm:$0xf]
        %v633 = vld [vmem:[#allocation5 + $0x214] sm:$0xf]
        %v634 = vld [vmem:[#allocation5 + $0x218] sm:$0xf]
        %v635 = vld [vmem:[#allocation5 + $0x21c] sm:$0xf]
        %v636 = vld [vmem:[#allocation5 + $0x220] sm:$0xf]
        %v637 = vld [vmem:[#allocation5 + $0x224] sm:$0xf]
        %v638 = vld [vmem:[#allocation5 + $0x228] sm:$0xf]
        %v639 = vld [vmem:[#allocation5 + $0x22c] sm:$0xf]
        %v640 = vld [vmem:[#allocation5 + $0x230] sm:$0xf]
        %v641 = vld [vmem:[#allocation5 + $0x234] sm:$0xf]
        %v642 = vld [vmem:[#allocation5 + $0x238] sm:$0xf]
        %v643 = vld [vmem:[#allocation5 + $0x23c] sm:$0xf]
        %v788 = vunpack.c.l.b16 %v500
        %v789 = vunpack.c.l.b16 %v501
        %v790 = vunpack.c.l.b16 %v502
        %v791 = vunpack.c.l.b16 %v503
        %v792 = vunpack.c.l.b16 %v504
        %v793 = vunpack.c.l.b16 %v505
        %v794 = vunpack.c.l.b16 %v506
        %v795 = vunpack.c.l.b16 %v507
        %v796 = vunpack.c.l.b16 %v508
        %v797 = vunpack.c.l.b16 %v509
        %v798 = vunpack.c.l.b16 %v510
        %v799 = vunpack.c.l.b16 %v511
        %v800 = vunpack.c.l.b16 %v512
        %v801 = vunpack.c.l.b16 %v513
        %v802 = vunpack.c.l.b16 %v514
        %v803 = vunpack.c.l.b16 %v515
        %v804 = vunpack.c.l.b16 %v516
        %v805 = vunpack.c.l.b16 %v517
        %v806 = vunpack.c.l.b16 %v518
        %v807 = vunpack.c.l.b16 %v519
        %v808 = vunpack.c.l.b16 %v520
        %v809 = vunpack.c.l.b16 %v521
        %v810 = vunpack.c.l.b16 %v522
        %v811 = vunpack.c.l.b16 %v523
        %v812 = vunpack.c.l.b16 %v524
        %v813 = vunpack.c.l.b16 %v525
        %v814 = vunpack.c.l.b16 %v526
        %v815 = vunpack.c.l.b16 %v527
        %v816 = vunpack.c.l.b16 %v528
        %v817 = vunpack.c.l.b16 %v529
        %v818 = vunpack.c.l.b16 %v530
        %v819 = vunpack.c.l.b16 %v531
        %v820 = vunpack.c.l.b16 %v532
        %v821 = vunpack.c.l.b16 %v533
        %v822 = vunpack.c.l.b16 %v534
        %v823 = vunpack.c.l.b16 %v535
        %v824 = vunpack.c.l.b16 %v536
        %v825 = vunpack.c.l.b16 %v537
        %v826 = vunpack.c.l.b16 %v538
        %v827 = vunpack.c.l.b16 %v539
        %v828 = vunpack.c.l.b16 %v540
        %v829 = vunpack.c.l.b16 %v541
        %v830 = vunpack.c.l.b16 %v542
        %v831 = vunpack.c.l.b16 %v543
        %v832 = vunpack.c.l.b16 %v544
        %v833 = vunpack.c.l.b16 %v545
        %v834 = vunpack.c.l.b16 %v546
        %v835 = vunpack.c.l.b16 %v547
        %v836 = vunpack.c.l.b16 %v548
        %v837 = vunpack.c.l.b16 %v549
        %v838 = vunpack.c.l.b16 %v550
        %v839 = vunpack.c.l.b16 %v551
        %v840 = vunpack.c.l.b16 %v552
        %v841 = vunpack.c.l.b16 %v553
        %v842 = vunpack.c.l.b16 %v554
        %v843 = vunpack.c.l.b16 %v555
        %v844 = vunpack.c.l.b16 %v556
        %v845 = vunpack.c.l.b16 %v557
        %v846 = vunpack.c.l.b16 %v558
        %v847 = vunpack.c.l.b16 %v559
        %v848 = vunpack.c.l.b16 %v560
        %v849 = vunpack.c.l.b16 %v561
        %v850 = vunpack.c.l.b16 %v562
        %v851 = vunpack.c.l.b16 %v563
        %v852 = vunpack.c.l.b16 %v564
        %v853 = vunpack.c.l.b16 %v565
        %v854 = vunpack.c.l.b16 %v566
        %v855 = vunpack.c.l.b16 %v567
        %v856 = vunpack.c.l.b16 %v568
        %v857 = vunpack.c.l.b16 %v569
        %v858 = vunpack.c.l.b16 %v570
        %v859 = vunpack.c.l.b16 %v571
        %v860 = vunpack.c.l.b16 %v572
        %v861 = vunpack.c.l.b16 %v573
        %v862 = vunpack.c.l.b16 %v574
        %v863 = vunpack.c.l.b16 %v575
        %v864 = vunpack.c.l.b16 %v576
        %v865 = vunpack.c.l.b16 %v577
        %v866 = vunpack.c.l.b16 %v578
        %v867 = vunpack.c.l.b16 %v579
        %v868 = vunpack.c.l.b16 %v580
        %v869 = vunpack.c.l.b16 %v581
        %v870 = vunpack.c.l.b16 %v582
        %v871 = vunpack.c.l.b16 %v583
        %v872 = vunpack.c.l.b16 %v584
        %v873 = vunpack.c.l.b16 %v585
        %v874 = vunpack.c.l.b16 %v586
        %v875 = vunpack.c.l.b16 %v587
        %v876 = vunpack.c.l.b16 %v588
        %v877 = vunpack.c.l.b16 %v589
        %v878 = vunpack.c.l.b16 %v590
        %v879 = vunpack.c.l.b16 %v591
        %v880 = vunpack.c.l.b16 %v592
        %v881 = vunpack.c.l.b16 %v593
        %v882 = vunpack.c.l.b16 %v594
        %v883 = vunpack.c.l.b16 %v595
        %v884 = vunpack.c.l.b16 %v596
        %v885 = vunpack.c.l.b16 %v597
        %v886 = vunpack.c.l.b16 %v598
        %v887 = vunpack.c.l.b16 %v599
        %v888 = vunpack.c.l.b16 %v600
        %v889 = vunpack.c.l.b16 %v601
        %v890 = vunpack.c.l.b16 %v602
        %v891 = vunpack.c.l.b16 %v603
        %v892 = vunpack.c.l.b16 %v604
        %v893 = vunpack.c.l.b16 %v605
        %v894 = vunpack.c.l.b16 %v606
        %v895 = vunpack.c.l.b16 %v607
        %v896 = vunpack.c.l.b16 %v608
        %v897 = vunpack.c.l.b16 %v609
        %v898 = vunpack.c.l.b16 %v610
        %v899 = vunpack.c.l.b16 %v611
        %v900 = vunpack.c.l.b16 %v612
        %v901 = vunpack.c.l.b16 %v613
        %v902 = vunpack.c.l.b16 %v614
        %v903 = vunpack.c.l.b16 %v615
        %v904 = vunpack.c.l.b16 %v616
        %v905 = vunpack.c.l.b16 %v617
        %v906 = vunpack.c.l.b16 %v618
        %v907 = vunpack.c.l.b16 %v619
        %v908 = vunpack.c.l.b16 %v620
        %v909 = vunpack.c.l.b16 %v621
        %v910 = vunpack.c.l.b16 %v622
        %v911 = vunpack.c.l.b16 %v623
        %v912 = vunpack.c.l.b16 %v624
        %v913 = vunpack.c.l.b16 %v625
        %v914 = vunpack.c.l.b16 %v626
        %v915 = vunpack.c.l.b16 %v627
        %v916 = vunpack.c.l.b16 %v628
        %v917 = vunpack.c.l.b16 %v629
        %v918 = vunpack.c.l.b16 %v630
        %v919 = vunpack.c.l.b16 %v631
        %v920 = vunpack.c.l.b16 %v632
        %v921 = vunpack.c.l.b16 %v633
        %v922 = vunpack.c.l.b16 %v634
        %v923 = vunpack.c.l.b16 %v635
        %v924 = vunpack.c.l.b16 %v636
        %v925 = vunpack.c.l.b16 %v637
        %v926 = vunpack.c.l.b16 %v638
        %v927 = vunpack.c.l.b16 %v639
        %v928 = vunpack.c.l.b16 %v640
        %v929 = vunpack.c.l.b16 %v641
        %v930 = vunpack.c.l.b16 %v642
        %v931 = vunpack.c.l.b16 %v643
        %v932 = vpack.c.b16 %v789, %v788
        %v933 = vpack.c.b16 %v791, %v790
        %v934 = vpack.c.b16 %v793, %v792
        %v935 = vpack.c.b16 %v795, %v794
        %v936 = vpack.c.b16 %v797, %v796
        %v937 = vpack.c.b16 %v799, %v798
        %v938 = vpack.c.b16 %v801, %v800
        %v939 = vpack.c.b16 %v803, %v802
        %v940 = vpack.c.b16 %v805, %v804
        %v941 = vpack.c.b16 %v807, %v806
        %v942 = vpack.c.b16 %v809, %v808
        %v943 = vpack.c.b16 %v811, %v810
        %v944 = vpack.c.b16 %v813, %v812
        %v945 = vpack.c.b16 %v815, %v814
        %v946 = vpack.c.b16 %v817, %v816
        %v947 = vpack.c.b16 %v819, %v818
        %v948 = vpack.c.b16 %v821, %v820
        %v949 = vpack.c.b16 %v823, %v822
        %v950 = vpack.c.b16 %v825, %v824
        %v951 = vpack.c.b16 %v827, %v826
        %v952 = vpack.c.b16 %v829, %v828
        %v953 = vpack.c.b16 %v831, %v830
        %v954 = vpack.c.b16 %v833, %v832
        %v955 = vpack.c.b16 %v835, %v834
        %v956 = vpack.c.b16 %v837, %v836
        %v957 = vpack.c.b16 %v839, %v838
        %v958 = vpack.c.b16 %v841, %v840
        %v959 = vpack.c.b16 %v843, %v842
        %v960 = vpack.c.b16 %v845, %v844
        %v961 = vpack.c.b16 %v847, %v846
        %v962 = vpack.c.b16 %v849, %v848
        %v963 = vpack.c.b16 %v851, %v850
        %v964 = vpack.c.b16 %v853, %v852
        %v965 = vpack.c.b16 %v855, %v854
        %v966 = vpack.c.b16 %v857, %v856
        %v967 = vpack.c.b16 %v859, %v858
        %v968 = vpack.c.b16 %v861, %v860
        %v969 = vpack.c.b16 %v863, %v862
        %v970 = vpack.c.b16 %v865, %v864
        %v971 = vpack.c.b16 %v867, %v866
        %v972 = vpack.c.b16 %v869, %v868
        %v973 = vpack.c.b16 %v871, %v870
        %v974 = vpack.c.b16 %v873, %v872
        %v975 = vpack.c.b16 %v875, %v874
        %v976 = vpack.c.b16 %v877, %v876
        %v977 = vpack.c.b16 %v879, %v878
        %v978 = vpack.c.b16 %v881, %v880
        %v979 = vpack.c.b16 %v883, %v882
        %v980 = vpack.c.b16 %v885, %v884
        %v981 = vpack.c.b16 %v887, %v886
        %v982 = vpack.c.b16 %v889, %v888
        %v983 = vpack.c.b16 %v891, %v890
        %v984 = vpack.c.b16 %v893, %v892
        %v985 = vpack.c.b16 %v895, %v894
        %v986 = vpack.c.b16 %v897, %v896
        %v987 = vpack.c.b16 %v899, %v898
        %v988 = vpack.c.b16 %v901, %v900
        %v989 = vpack.c.b16 %v903, %v902
        %v990 = vpack.c.b16 %v905, %v904
        %v991 = vpack.c.b16 %v907, %v906
        %v992 = vpack.c.b16 %v909, %v908
        %v993 = vpack.c.b16 %v911, %v910
        %v994 = vpack.c.b16 %v913, %v912
        %v995 = vpack.c.b16 %v915, %v914
        %v996 = vpack.c.b16 %v917, %v916
        %v997 = vpack.c.b16 %v919, %v918
        %v998 = vpack.c.b16 %v921, %v920
        %v999 = vpack.c.b16 %v923, %v922
        %v1000 = vpack.c.b16 %v925, %v924
        %v1001 = vpack.c.b16 %v927, %v926
        %v1002 = vpack.c.b16 %v929, %v928
        %v1003 = vpack.c.b16 %v931, %v930
        %1076 = vmatprep.subr.bf16.mxu0 0
        %1077 = vmatpush1.bf16.msra.mxu0 %v939
        %1078 = vmatprep.subr.bf16.mxu0 0
        %1079 = vmatpush1.bf16.msra.mxu0 %v938
        %1080 = vmatprep.subr.bf16.mxu0 0
        %1081 = vmatpush1.bf16.msra.mxu0 %v937
        %1082 = vmatprep.subr.bf16.mxu0 0
        %1083 = vmatpush1.bf16.msra.mxu0 %v936
        %1084 = vmatprep.subr.bf16.mxu0 0
        %1085 = vmatpush1.bf16.msra.mxu0 %v935
        %1086 = vmatprep.subr.bf16.mxu0 0
        %1087 = vmatpush1.bf16.msra.mxu0 %v934
        %1088 = vmatprep.subr.bf16.mxu0 0
        %1089 = vmatpush1.bf16.msra.mxu0 %v933
        %1090 = vmatprep.subr.bf16.mxu0 0
        %1091 = vmatpush1.bf16.msra.mxu0 %v932
        %1092 = vmatprep.subr.bf16.mxu0 0
        %1093 = vmatpush2.bf16.msra.mxu0 %v947
        %1094 = vmatprep.subr.bf16.mxu0 0
        %1095 = vmatpush2.bf16.msra.mxu0 %v946
        %1096 = vmatprep.subr.bf16.mxu0 0
        %1097 = vmatpush2.bf16.msra.mxu0 %v945
        %1098 = vmatprep.subr.bf16.mxu0 0
        %1099 = vmatpush2.bf16.msra.mxu0 %v944
        %1100 = vmatprep.subr.bf16.mxu0 0
        %1101 = vmatpush2.bf16.msra.mxu0 %v943
        %1102 = vmatprep.subr.bf16.mxu0 0
        %1103 = vmatpush2.bf16.msra.mxu0 %v942
        %1104 = vmatprep.subr.bf16.mxu0 0
        %1105 = vmatpush2.bf16.msra.mxu0 %v941
        %1106 = vmatprep.subr.bf16.mxu0 0
        %1107 = vmatpush2.bf16.msra.mxu0 %v940
        %1108 = vmatprep.mubr.bf16.mxu0 %v469
        %1109 = vmatmul.mubr.bf16.gmra.mxu0 %v453
        %v1110 = vpop.f32.mrf.mxu0
        %v1111 = vadd.f32 0.0, %v1110
        %v1112 = vpop.f32.mrf.mxu0
        %v1113 = vpop.f32.mrf.mxu0
        %v1114 = vadd.f32 0.0, %v1113
        %v1115 = vpop.f32.mrf.mxu0
        %1116 = vmatprep.mubr.bf16.mxu0 %v468
        %1117 = vmatmul.mubr.bf16.gmra.mxu0 %v452
        %v1118 = vpop.f32.mrf.mxu0
        %v1119 = vadd.f32 0.0, %v1118
        %v1120 = vpop.f32.mrf.mxu0
        %v1121 = vpop.f32.mrf.mxu0
        %v1122 = vadd.f32 0.0, %v1121
        %v1123 = vpop.f32.mrf.mxu0
        %1124 = vmatprep.mubr.bf16.mxu0 %v469
        %1125 = vmatmul.mubr.bf16.gmra.mxu0 %v453
        %v1126 = vpop.f32.mrf.mxu0
        %v1127 = vadd.f32 0.0, %v1126
        %v1128 = vpop.f32.mrf.mxu0
        %v1129 = vpop.f32.mrf.mxu0
        %v1130 = vadd.f32 0.0, %v1129
        %v1131 = vpop.f32.mrf.mxu0
        %1132 = vmatprep.mubr.bf16.mxu0 %v470
        %1133 = vmatmul.mubr.bf16.gmra.mxu0 %v454
        %v1134 = vpop.f32.mrf.mxu0
        %v1135 = vadd.f32 0.0, %v1134
        %v1136 = vpop.f32.mrf.mxu0
        %v1137 = vpop.f32.mrf.mxu0
        %v1138 = vadd.f32 0.0, %v1137
        %v1139 = vpop.f32.mrf.mxu0
        %1140 = vmatprep.mubr.bf16.mxu0 %v471
        %1141 = vmatmul.mubr.bf16.gmra.mxu0 %v455
        %v1142 = vpop.f32.mrf.mxu0
        %v1143 = vadd.f32 0.0, %v1142
        %v1144 = vpop.f32.mrf.mxu0
        %v1145 = vpop.f32.mrf.mxu0
        %v1146 = vadd.f32 0.0, %v1145
        %v1147 = vpop.f32.mrf.mxu0
        %1148 = vmatprep.mubr.bf16.mxu0 %v472
        %1149 = vmatmul.mubr.bf16.gmra.mxu0 %v456
        %v1150 = vpop.f32.mrf.mxu0
        %v1151 = vadd.f32 0.0, %v1150
        %v1152 = vpop.f32.mrf.mxu0
        %v1153 = vpop.f32.mrf.mxu0
        %v1154 = vadd.f32 0.0, %v1153
        %v1155 = vpop.f32.mrf.mxu0
        %1156 = vmatprep.mubr.bf16.mxu0 %v473
        %1157 = vmatmul.mubr.bf16.gmra.mxu0 %v457
        %v1158 = vpop.f32.mrf.mxu0
        %v1159 = vadd.f32 0.0, %v1158
        %v1160 = vpop.f32.mrf.mxu0
        %v1161 = vpop.f32.mrf.mxu0
        %v1162 = vadd.f32 0.0, %v1161
        %v1163 = vpop.f32.mrf.mxu0
        %1164 = vmatprep.mubr.bf16.mxu0 %v474
        %1165 = vmatmul.mubr.bf16.gmra.mxu0 %v458
        %v1166 = vpop.f32.mrf.mxu0
        %v1167 = vadd.f32 0.0, %v1166
        %v1168 = vpop.f32.mrf.mxu0
        %v1169 = vpop.f32.mrf.mxu0
        %v1170 = vadd.f32 0.0, %v1169
        %v1171 = vpop.f32.mrf.mxu0
        %1172 = vmatprep.mubr.bf16.mxu0 %v475
        %1173 = vmatmul.mubr.bf16.gmra.mxu0 %v459
        %v1174 = vpop.f32.mrf.mxu0
        %v1175 = vadd.f32 0.0, %v1174
        %v1176 = vpop.f32.mrf.mxu0
        %v1177 = vpop.f32.mrf.mxu0
        %v1178 = vadd.f32 0.0, %v1177
        %v1179 = vpop.f32.mrf.mxu0
        %1180 = vmatprep.mubr.bf16.mxu0 %v476
        %1181 = vmatmul.mubr.bf16.gmra.mxu0 %v460
        %v1182 = vpop.f32.mrf.mxu0
        %v1183 = vadd.f32 0.0, %v1182
        %v1184 = vpop.f32.mrf.mxu0
        %v1185 = vpop.f32.mrf.mxu0
        %v1186 = vadd.f32 0.0, %v1185
        %v1187 = vpop.f32.mrf.mxu0
        %1188 = vmatprep.mubr.bf16.mxu0 %v477
        %1189 = vmatmul.mubr.bf16.gmra.mxu0 %v461
        %v1190 = vpop.f32.mrf.mxu0
        %v1191 = vadd.f32 0.0, %v1190
        %v1192 = vpop.f32.mrf.mxu0
        %v1193 = vpop.f32.mrf.mxu0
        %v1194 = vadd.f32 0.0, %v1193
        %v1195 = vpop.f32.mrf.mxu0
        %1196 = vmatprep.mubr.bf16.mxu0 %v478
        %1197 = vmatmul.mubr.bf16.gmra.mxu0 %v462
        %v1198 = vpop.f32.mrf.mxu0
        %v1199 = vadd.f32 0.0, %v1198
        %v1200 = vpop.f32.mrf.mxu0
        %v1201 = vpop.f32.mrf.mxu0
        %v1202 = vadd.f32 0.0, %v1201
        %v1203 = vpop.f32.mrf.mxu0
        %1204 = vmatprep.mubr.bf16.mxu0 %v479
        %1205 = vmatmul.mubr.bf16.gmra.mxu0 %v463
        %v1206 = vpop.f32.mrf.mxu0
        %v1207 = vadd.f32 0.0, %v1206
        %v1208 = vpop.f32.mrf.mxu0
        %v1209 = vpop.f32.mrf.mxu0
        %v1210 = vadd.f32 0.0, %v1209
        %v1211 = vpop.f32.mrf.mxu0
        %1212 = vmatprep.mubr.bf16.mxu0 %v480
        %1213 = vmatmul.mubr.bf16.gmra.mxu0 %v464
        %v1214 = vpop.f32.mrf.mxu0
        %v1215 = vadd.f32 0.0, %v1214
        %v1216 = vpop.f32.mrf.mxu0
        %v1217 = vpop.f32.mrf.mxu0
        %v1218 = vadd.f32 0.0, %v1217
        %v1219 = vpop.f32.mrf.mxu0
        %1220 = vmatprep.mubr.bf16.mxu0 %v481
        %1221 = vmatmul.mubr.bf16.gmra.mxu0 %v465
        %v1222 = vpop.f32.mrf.mxu0
        %v1223 = vadd.f32 0.0, %v1222
        %v1224 = vpop.f32.mrf.mxu0
        %v1225 = vpop.f32.mrf.mxu0
        %v1226 = vadd.f32 0.0, %v1225
        %v1227 = vpop.f32.mrf.mxu0
        %1228 = vmatprep.mubr.bf16.mxu0 %v482
        %1229 = vmatmul.mubr.bf16.gmra.mxu0 %v466
        %v1230 = vpop.f32.mrf.mxu0
        %v1231 = vadd.f32 0.0, %v1230
        %v1232 = vpop.f32.mrf.mxu0
        %v1233 = vpop.f32.mrf.mxu0
        %v1234 = vadd.f32 0.0, %v1233
        %v1235 = vpop.f32.mrf.mxu0
        %1236 = vdwg.mxu0
        %1237 = vmatprep.subr.bf16.mxu0 0
        %1238 = vmatpush1.bf16.msra.mxu0 %v955
        %1239 = vmatprep.subr.bf16.mxu0 0
        %1240 = vmatpush1.bf16.msra.mxu0 %v954
        %1241 = vmatprep.subr.bf16.mxu0 0
        %1242 = vmatpush1.bf16.msra.mxu0 %v953
        %1243 = vmatprep.subr.bf16.mxu0 0
        %1244 = vmatpush1.bf16.msra.mxu0 %v952
        %1245 = vmatprep.subr.bf16.mxu0 0
        %1246 = vmatpush1.bf16.msra.mxu0 %v951
        %1247 = vmatprep.subr.bf16.mxu0 0
        %1248 = vmatpush1.bf16.msra.mxu0 %v950
        %1249 = vmatprep.subr.bf16.mxu0 0
        %1250 = vmatpush1.bf16.msra.mxu0 %v949
        %1251 = vmatprep.subr.bf16.mxu0 0
        %1252 = vmatpush1.bf16.msra.mxu0 %v948
        %1253 = vmatprep.subr.bf16.mxu0 0
        %1254 = vmatpush2.bf16.msra.mxu0 %v963
        %1255 = vmatprep.subr.bf16.mxu0 0
        %1256 = vmatpush2.bf16.msra.mxu0 %v962
        %1257 = vmatprep.subr.bf16.mxu0 0
        %1258 = vmatpush2.bf16.msra.mxu0 %v961
        %1259 = vmatprep.subr.bf16.mxu0 0
        %1260 = vmatpush2.bf16.msra.mxu0 %v960
        %1261 = vmatprep.subr.bf16.mxu0 0
        %1262 = vmatpush2.bf16.msra.mxu0 %v959
        %1263 = vmatprep.subr.bf16.mxu0 0
        %1264 = vmatpush2.bf16.msra.mxu0 %v958
        %1265 = vmatprep.subr.bf16.mxu0 0
        %1266 = vmatpush2.bf16.msra.mxu0 %v957
        %1267 = vmatprep.subr.bf16.mxu0 0
        %1268 = vmatpush2.bf16.msra.mxu0 %v956
        %1269 = vmatprep.mubr.bf16.mxu0 %v452
        %1270 = vmatmul.mubr.bf16.gmra.mxu0 %v485
        %v1271 = vpop.f32.mrf.mxu0
        %v1272 = vadd.f32 %v1111, %v1271
        %v1273 = vpop.f32.mrf.mxu0
        %v1274 = vpop.f32.mrf.mxu0
        %v1275 = vadd.f32 %v1114, %v1274
        %v1276 = vpop.f32.mrf.mxu0
        %1277 = vmatprep.mubr.bf16.mxu0 %v453
        %1278 = vmatmul.mubr.bf16.gmra.mxu0 %v484
        %v1279 = vpop.f32.mrf.mxu0
        %v1280 = vadd.f32 %v1119, %v1279
        %v1281 = vpop.f32.mrf.mxu0
        %v1282 = vpop.f32.mrf.mxu0
        %v1283 = vadd.f32 %v1122, %v1282
        %v1284 = vpop.f32.mrf.mxu0
        %1285 = vmatprep.mubr.bf16.mxu0 %v454
        %1286 = vmatmul.mubr.bf16.gmra.mxu0 %v485
        %v1287 = vpop.f32.mrf.mxu0
        %v1288 = vadd.f32 %v1127, %v1287
        %v1289 = vpop.f32.mrf.mxu0
        %v1290 = vpop.f32.mrf.mxu0
        %v1291 = vadd.f32 %v1130, %v1290
        %v1292 = vpop.f32.mrf.mxu0
        %1293 = vmatprep.mubr.bf16.mxu0 %v455
        %1294 = vmatmul.mubr.bf16.gmra.mxu0 %v486
        %v1295 = vpop.f32.mrf.mxu0
        %v1296 = vadd.f32 %v1135, %v1295
        %v1297 = vpop.f32.mrf.mxu0
        %v1298 = vpop.f32.mrf.mxu0
        %v1299 = vadd.f32 %v1138, %v1298
        %v1300 = vpop.f32.mrf.mxu0
        %1301 = vmatprep.mubr.bf16.mxu0 %v456
        %1302 = vmatmul.mubr.bf16.gmra.mxu0 %v487
        %v1303 = vpop.f32.mrf.mxu0
        %v1304 = vadd.f32 %v1143, %v1303
        %v1305 = vpop.f32.mrf.mxu0
        %v1306 = vpop.f32.mrf.mxu0
        %v1307 = vadd.f32 %v1146, %v1306
        %v1308 = vpop.f32.mrf.mxu0
        %1309 = vmatprep.mubr.bf16.mxu0 %v457
        %1310 = vmatmul.mubr.bf16.gmra.mxu0 %v488
        %v1311 = vpop.f32.mrf.mxu0
        %v1312 = vadd.f32 %v1151, %v1311
        %v1313 = vpop.f32.mrf.mxu0
        %v1314 = vpop.f32.mrf.mxu0
        %v1315 = vadd.f32 %v1154, %v1314
        %v1316 = vpop.f32.mrf.mxu0
        %1317 = vmatprep.mubr.bf16.mxu0 %v458
        %1318 = vmatmul.mubr.bf16.gmra.mxu0 %v489
        %v1319 = vpop.f32.mrf.mxu0
        %v1320 = vadd.f32 %v1159, %v1319
        %v1321 = vpop.f32.mrf.mxu0
        %v1322 = vpop.f32.mrf.mxu0
        %v1323 = vadd.f32 %v1162, %v1322
        %v1324 = vpop.f32.mrf.mxu0
        %1325 = vmatprep.mubr.bf16.mxu0 %v459
        %1326 = vmatmul.mubr.bf16.gmra.mxu0 %v490
        %v1327 = vpop.f32.mrf.mxu0
        %v1328 = vadd.f32 %v1167, %v1327
        %v1329 = vpop.f32.mrf.mxu0
        %v1330 = vpop.f32.mrf.mxu0
        %v1331 = vadd.f32 %v1170, %v1330
        %v1332 = vpop.f32.mrf.mxu0
        %1333 = vmatprep.mubr.bf16.mxu0 %v460
        %1334 = vmatmul.mubr.bf16.gmra.mxu0 %v491
        %v1335 = vpop.f32.mrf.mxu0
        %v1336 = vadd.f32 %v1175, %v1335
        %v1337 = vpop.f32.mrf.mxu0
        %v1338 = vpop.f32.mrf.mxu0
        %v1339 = vadd.f32 %v1178, %v1338
        %v1340 = vpop.f32.mrf.mxu0
        %1341 = vmatprep.mubr.bf16.mxu0 %v461
        %1342 = vmatmul.mubr.bf16.gmra.mxu0 %v492
        %v1343 = vpop.f32.mrf.mxu0
        %v1344 = vadd.f32 %v1183, %v1343
        %v1345 = vpop.f32.mrf.mxu0
        %v1346 = vpop.f32.mrf.mxu0
        %v1347 = vadd.f32 %v1186, %v1346
        %v1348 = vpop.f32.mrf.mxu0
        %1349 = vmatprep.mubr.bf16.mxu0 %v462
        %1350 = vmatmul.mubr.bf16.gmra.mxu0 %v493
        %v1351 = vpop.f32.mrf.mxu0
        %v1352 = vadd.f32 %v1191, %v1351
        %v1353 = vpop.f32.mrf.mxu0
        %v1354 = vpop.f32.mrf.mxu0
        %v1355 = vadd.f32 %v1194, %v1354
        %v1356 = vpop.f32.mrf.mxu0
        %1357 = vmatprep.mubr.bf16.mxu0 %v463
        %1358 = vmatmul.mubr.bf16.gmra.mxu0 %v494
        %v1359 = vpop.f32.mrf.mxu0
        %v1360 = vadd.f32 %v1199, %v1359
        %v1361 = vpop.f32.mrf.mxu0
        %v1362 = vpop.f32.mrf.mxu0
        %v1363 = vadd.f32 %v1202, %v1362
        %v1364 = vpop.f32.mrf.mxu0
        %1365 = vmatprep.mubr.bf16.mxu0 %v464
        %1366 = vmatmul.mubr.bf16.gmra.mxu0 %v495
        %v1367 = vpop.f32.mrf.mxu0
        %v1368 = vadd.f32 %v1207, %v1367
        %v1369 = vpop.f32.mrf.mxu0
        %v1370 = vpop.f32.mrf.mxu0
        %v1371 = vadd.f32 %v1210, %v1370
        %v1372 = vpop.f32.mrf.mxu0
        %1373 = vmatprep.mubr.bf16.mxu0 %v465
        %1374 = vmatmul.mubr.bf16.gmra.mxu0 %v496
        %v1375 = vpop.f32.mrf.mxu0
        %v1376 = vadd.f32 %v1215, %v1375
        %v1377 = vpop.f32.mrf.mxu0
        %v1378 = vpop.f32.mrf.mxu0
        %v1379 = vadd.f32 %v1218, %v1378
        %v1380 = vpop.f32.mrf.mxu0
        %1381 = vmatprep.mubr.bf16.mxu0 %v466
        %1382 = vmatmul.mubr.bf16.gmra.mxu0 %v497
        %v1383 = vpop.f32.mrf.mxu0
        %v1384 = vadd.f32 %v1223, %v1383
        %v1385 = vpop.f32.mrf.mxu0
        %v1386 = vpop.f32.mrf.mxu0
        %v1387 = vadd.f32 %v1226, %v1386
        %v1388 = vpop.f32.mrf.mxu0
        %1389 = vmatprep.mubr.bf16.mxu0 %v467
        %1390 = vmatmul.mubr.bf16.gmra.mxu0 %v498
        %v1391 = vpop.f32.mrf.mxu0
        %v1392 = vadd.f32 %v1231, %v1391
        %v1393 = vpop.f32.mrf.mxu0
        %v1394 = vpop.f32.mrf.mxu0
        %v1395 = vadd.f32 %v1234, %v1394
        %v1396 = vpop.f32.mrf.mxu0
        %1397 = vdwg.mxu0
        %1398 = vmatprep.subr.bf16.mxu0 0
        %1399 = vmatpush1.bf16.msra.mxu0 %v971
        %1400 = vmatprep.subr.bf16.mxu0 0
        %1401 = vmatpush1.bf16.msra.mxu0 %v970
        %1402 = vmatprep.subr.bf16.mxu0 0
        %1403 = vmatpush1.bf16.msra.mxu0 %v969
        %1404 = vmatprep.subr.bf16.mxu0 0
        %1405 = vmatpush1.bf16.msra.mxu0 %v968
        %1406 = vmatprep.subr.bf16.mxu0 0
        %1407 = vmatpush1.bf16.msra.mxu0 %v967
        %1408 = vmatprep.subr.bf16.mxu0 0
        %1409 = vmatpush1.bf16.msra.mxu0 %v966
        %1410 = vmatprep.subr.bf16.mxu0 0
        %1411 = vmatpush1.bf16.msra.mxu0 %v965
        %1412 = vmatprep.subr.bf16.mxu0 0
        %1413 = vmatpush1.bf16.msra.mxu0 %v964
        %1414 = vmatprep.subr.bf16.mxu0 0
        %1415 = vmatpush2.bf16.msra.mxu0 %v979
        %1416 = vmatprep.subr.bf16.mxu0 0
        %1417 = vmatpush2.bf16.msra.mxu0 %v978
        %1418 = vmatprep.subr.bf16.mxu0 0
        %1419 = vmatpush2.bf16.msra.mxu0 %v977
        %1420 = vmatprep.subr.bf16.mxu0 0
        %1421 = vmatpush2.bf16.msra.mxu0 %v976
        %1422 = vmatprep.subr.bf16.mxu0 0
        %1423 = vmatpush2.bf16.msra.mxu0 %v975
        %1424 = vmatprep.subr.bf16.mxu0 0
        %1425 = vmatpush2.bf16.msra.mxu0 %v974
        %1426 = vmatprep.subr.bf16.mxu0 0
        %1427 = vmatpush2.bf16.msra.mxu0 %v973
        %1428 = vmatprep.subr.bf16.mxu0 0
        %1429 = vmatpush2.bf16.msra.mxu0 %v972
        %1430 = vmatprep.mubr.bf16.mxu0 %v484
        %1431 = vmatmul.mubr.bf16.gmra.mxu0 %v468
        %v1432 = vpop.f32.mrf.mxu0
        %v1433 = vadd.f32 %v1272, %v1432
        %v1434 = vpop.f32.mrf.mxu0
        %v1435 = vpop.f32.mrf.mxu0
        %v1436 = vadd.f32 %v1275, %v1435
        %v1437 = vpop.f32.mrf.mxu0
        %1438 = vmatprep.mubr.bf16.mxu0 %v485
        %1439 = vmatmul.mubr.bf16.gmra.mxu0 %v469
        %v1440 = vpop.f32.mrf.mxu0
        %v1441 = vadd.f32 %v1280, %v1440
        %v1442 = vpop.f32.mrf.mxu0
        %v1443 = vpop.f32.mrf.mxu0
        %v1444 = vadd.f32 %v1283, %v1443
        %v1445 = vpop.f32.mrf.mxu0
        %1446 = vmatprep.mubr.bf16.mxu0 %v486
        %1447 = vmatmul.mubr.bf16.gmra.mxu0 %v470
        %v1448 = vpop.f32.mrf.mxu0
        %v1449 = vadd.f32 %v1288, %v1448
        %v1450 = vpop.f32.mrf.mxu0
        %v1451 = vpop.f32.mrf.mxu0
        %v1452 = vadd.f32 %v1291, %v1451
        %v1453 = vpop.f32.mrf.mxu0
        %1454 = vmatprep.mubr.bf16.mxu0 %v487
        %1455 = vmatmul.mubr.bf16.gmra.mxu0 %v471
        %v1456 = vpop.f32.mrf.mxu0
        %v1457 = vadd.f32 %v1296, %v1456
        %v1458 = vpop.f32.mrf.mxu0
        %v1459 = vpop.f32.mrf.mxu0
        %v1460 = vadd.f32 %v1299, %v1459
        %v1461 = vpop.f32.mrf.mxu0
        %1462 = vmatprep.mubr.bf16.mxu0 %v488
        %1463 = vmatmul.mubr.bf16.gmra.mxu0 %v472
        %v1464 = vpop.f32.mrf.mxu0
        %v1465 = vadd.f32 %v1304, %v1464
        %v1466 = vpop.f32.mrf.mxu0
        %v1467 = vpop.f32.mrf.mxu0
        %v1468 = vadd.f32 %v1307, %v1467
        %v1469 = vpop.f32.mrf.mxu0
        %1470 = vmatprep.mubr.bf16.mxu0 %v489
        %1471 = vmatmul.mubr.bf16.gmra.mxu0 %v473
        %v1472 = vpop.f32.mrf.mxu0
        %v1473 = vadd.f32 %v1312, %v1472
        %v1474 = vpop.f32.mrf.mxu0
        %v1475 = vpop.f32.mrf.mxu0
        %v1476 = vadd.f32 %v1315, %v1475
        %v1477 = vpop.f32.mrf.mxu0
        %1478 = vmatprep.mubr.bf16.mxu0 %v490
        %1479 = vmatmul.mubr.bf16.gmra.mxu0 %v474
        %v1480 = vpop.f32.mrf.mxu0
        %v1481 = vadd.f32 %v1320, %v1480
        %v1482 = vpop.f32.mrf.mxu0
        %v1483 = vpop.f32.mrf.mxu0
        %v1484 = vadd.f32 %v1323, %v1483
        %v1485 = vpop.f32.mrf.mxu0
        %1486 = vmatprep.mubr.bf16.mxu0 %v491
        %1487 = vmatmul.mubr.bf16.gmra.mxu0 %v475
        %v1488 = vpop.f32.mrf.mxu0
        %v1489 = vadd.f32 %v1328, %v1488
        %v1490 = vpop.f32.mrf.mxu0
        %v1491 = vpop.f32.mrf.mxu0
        %v1492 = vadd.f32 %v1331, %v1491
        %v1493 = vpop.f32.mrf.mxu0
        %1494 = vmatprep.mubr.bf16.mxu0 %v492
        %1495 = vmatmul.mubr.bf16.gmra.mxu0 %v476
        %v1496 = vpop.f32.mrf.mxu0
        %v1497 = vadd.f32 %v1336, %v1496
        %v1498 = vpop.f32.mrf.mxu0
        %v1499 = vpop.f32.mrf.mxu0
        %v1500 = vadd.f32 %v1339, %v1499
        %v1501 = vpop.f32.mrf.mxu0
        %1502 = vmatprep.mubr.bf16.mxu0 %v493
        %1503 = vmatmul.mubr.bf16.gmra.mxu0 %v477
        %v1504 = vpop.f32.mrf.mxu0
        %v1505 = vadd.f32 %v1344, %v1504
        %v1506 = vpop.f32.mrf.mxu0
        %v1507 = vpop.f32.mrf.mxu0
        %v1508 = vadd.f32 %v1347, %v1507
        %v1509 = vpop.f32.mrf.mxu0
        %1510 = vmatprep.mubr.bf16.mxu0 %v494
        %1511 = vmatmul.mubr.bf16.gmra.mxu0 %v478
        %v1512 = vpop.f32.mrf.mxu0
        %v1513 = vadd.f32 %v1352, %v1512
        %v1514 = vpop.f32.mrf.mxu0
        %v1515 = vpop.f32.mrf.mxu0
        %v1516 = vadd.f32 %v1355, %v1515
        %v1517 = vpop.f32.mrf.mxu0
        %1518 = vmatprep.mubr.bf16.mxu0 %v495
        %1519 = vmatmul.mubr.bf16.gmra.mxu0 %v479
        %v1520 = vpop.f32.mrf.mxu0
        %v1521 = vadd.f32 %v1360, %v1520
        %v1522 = vpop.f32.mrf.mxu0
        %v1523 = vpop.f32.mrf.mxu0
        %v1524 = vadd.f32 %v1363, %v1523
        %v1525 = vpop.f32.mrf.mxu0
        %1526 = vmatprep.mubr.bf16.mxu0 %v496
        %1527 = vmatmul.mubr.bf16.gmra.mxu0 %v480
        %v1528 = vpop.f32.mrf.mxu0
        %v1529 = vadd.f32 %v1368, %v1528
        %v1530 = vpop.f32.mrf.mxu0
        %v1531 = vpop.f32.mrf.mxu0
        %v1532 = vadd.f32 %v1371, %v1531
        %v1533 = vpop.f32.mrf.mxu0
        %1534 = vmatprep.mubr.bf16.mxu0 %v497
        %1535 = vmatmul.mubr.bf16.gmra.mxu0 %v481
        %v1536 = vpop.f32.mrf.mxu0
        %v1537 = vadd.f32 %v1376, %v1536
        %v1538 = vpop.f32.mrf.mxu0
        %v1539 = vpop.f32.mrf.mxu0
        %v1540 = vadd.f32 %v1379, %v1539
        %v1541 = vpop.f32.mrf.mxu0
        %1542 = vmatprep.mubr.bf16.mxu0 %v498
        %1543 = vmatmul.mubr.bf16.gmra.mxu0 %v482
        %v1544 = vpop.f32.mrf.mxu0
        %v1545 = vadd.f32 %v1384, %v1544
        %v1546 = vpop.f32.mrf.mxu0
        %v1547 = vpop.f32.mrf.mxu0
        %v1548 = vadd.f32 %v1387, %v1547
        %v1549 = vpop.f32.mrf.mxu0
        %1550 = vmatprep.mubr.bf16.mxu0 %v499
        %1551 = vmatmul.mubr.bf16.gmra.mxu0 %v483
        %v1552 = vpop.f32.mrf.mxu0
        %v1553 = vadd.f32 %v1392, %v1552
        %v1554 = vpop.f32.mrf.mxu0
        %v1555 = vpop.f32.mrf.mxu0
        %v1556 = vadd.f32 %v1395, %v1555
        %v1557 = vpop.f32.mrf.mxu0
        %1558 = vdwg.mxu0
        %1559 = vmatprep.subr.bf16.mxu0 0
        %1560 = vmatpush1.bf16.msra.mxu0 %v987
        %1561 = vmatprep.subr.bf16.mxu0 0
        %1562 = vmatpush1.bf16.msra.mxu0 %v986
        %1563 = vmatprep.subr.bf16.mxu0 0
        %1564 = vmatpush1.bf16.msra.mxu0 %v985
        %1565 = vmatprep.subr.bf16.mxu0 0
        %1566 = vmatpush1.bf16.msra.mxu0 %v984
        %1567 = vmatprep.subr.bf16.mxu0 0
        %1568 = vmatpush1.bf16.msra.mxu0 %v983
        %1569 = vmatprep.subr.bf16.mxu0 0
        %1570 = vmatpush1.bf16.msra.mxu0 %v982
        %1571 = vmatprep.subr.bf16.mxu0 0
        %1572 = vmatpush1.bf16.msra.mxu0 %v981
        %1573 = vmatprep.subr.bf16.mxu0 0
        %1574 = vmatpush1.bf16.msra.mxu0 %v980
        %1575 = vmatprep.subr.bf16.mxu0 0
        %1576 = vmatpush2.bf16.msra.mxu0 %v995
        %1577 = vmatprep.subr.bf16.mxu0 0
        %1578 = vmatpush2.bf16.msra.mxu0 %v994
        %1579 = vmatprep.subr.bf16.mxu0 0
        %1580 = vmatpush2.bf16.msra.mxu0 %v993
        %1581 = vmatprep.subr.bf16.mxu0 0
        %1582 = vmatpush2.bf16.msra.mxu0 %v992
        %1583 = vmatprep.subr.bf16.mxu0 0
        %1584 = vmatpush2.bf16.msra.mxu0 %v991
        %1585 = vmatprep.subr.bf16.mxu0 0
        %1586 = vmatpush2.bf16.msra.mxu0 %v990
        %1587 = vmatprep.subr.bf16.mxu0 0
        %1588 = vmatpush2.bf16.msra.mxu0 %v989
        %1589 = vmatprep.subr.bf16.mxu0 0
        %1590 = vmatpush2.bf16.msra.mxu0 %v988
        %1591 = vmatprep.mubr.bf16.mxu0 %v469
        %1592 = vmatmul.mubr.bf16.gmra.mxu0 %v453
        %v1593 = vpop.f32.mrf.mxu0
        %v1594 = vadd.f32 %v1433, %v1593
        %v1595 = vpop.f32.mrf.mxu0
        %v1596 = vpop.f32.mrf.mxu0
        %v1597 = vadd.f32 %v1436, %v1596
        %v1598 = vpop.f32.mrf.mxu0
        %1599 = vmatprep.mubr.bf16.mxu0 %v470
        %1600 = vmatmul.mubr.bf16.gmra.mxu0 %v454
        %v1601 = vpop.f32.mrf.mxu0
        %v1602 = vadd.f32 %v1441, %v1601
        %v1603 = vpop.f32.mrf.mxu0
        %v1604 = vpop.f32.mrf.mxu0
        %v1605 = vadd.f32 %v1444, %v1604
        %v1606 = vpop.f32.mrf.mxu0
        %1607 = vmatprep.mubr.bf16.mxu0 %v471
        %1608 = vmatmul.mubr.bf16.gmra.mxu0 %v455
        %v1609 = vpop.f32.mrf.mxu0
        %v1610 = vadd.f32 %v1449, %v1609
        %v1611 = vpop.f32.mrf.mxu0
        %v1612 = vpop.f32.mrf.mxu0
        %v1613 = vadd.f32 %v1452, %v1612
        %v1614 = vpop.f32.mrf.mxu0
        %1615 = vmatprep.mubr.bf16.mxu0 %v472
        %1616 = vmatmul.mubr.bf16.gmra.mxu0 %v456
        %v1617 = vpop.f32.mrf.mxu0
        %v1618 = vadd.f32 %v1457, %v1617
        %v1619 = vpop.f32.mrf.mxu0
        %v1620 = vpop.f32.mrf.mxu0
        %v1621 = vadd.f32 %v1460, %v1620
        %v1622 = vpop.f32.mrf.mxu0
        %1623 = vmatprep.mubr.bf16.mxu0 %v473
        %1624 = vmatmul.mubr.bf16.gmra.mxu0 %v457
        %v1625 = vpop.f32.mrf.mxu0
        %v1626 = vadd.f32 %v1465, %v1625
        %v1627 = vpop.f32.mrf.mxu0
        %v1628 = vpop.f32.mrf.mxu0
        %v1629 = vadd.f32 %v1468, %v1628
        %v1630 = vpop.f32.mrf.mxu0
        %1631 = vmatprep.mubr.bf16.mxu0 %v474
        %1632 = vmatmul.mubr.bf16.gmra.mxu0 %v458
        %v1633 = vpop.f32.mrf.mxu0
        %v1634 = vadd.f32 %v1473, %v1633
        %v1635 = vpop.f32.mrf.mxu0
        %v1636 = vpop.f32.mrf.mxu0
        %v1637 = vadd.f32 %v1476, %v1636
        %v1638 = vpop.f32.mrf.mxu0
        %1639 = vmatprep.mubr.bf16.mxu0 %v475
        %1640 = vmatmul.mubr.bf16.gmra.mxu0 %v459
        %v1641 = vpop.f32.mrf.mxu0
        %v1642 = vadd.f32 %v1481, %v1641
        %v1643 = vpop.f32.mrf.mxu0
        %v1644 = vpop.f32.mrf.mxu0
        %v1645 = vadd.f32 %v1484, %v1644
        %v1646 = vpop.f32.mrf.mxu0
        %1647 = vmatprep.mubr.bf16.mxu0 %v476
        %1648 = vmatmul.mubr.bf16.gmra.mxu0 %v460
        %v1649 = vpop.f32.mrf.mxu0
        %v1650 = vadd.f32 %v1489, %v1649
        %v1651 = vpop.f32.mrf.mxu0
        %v1652 = vpop.f32.mrf.mxu0
        %v1653 = vadd.f32 %v1492, %v1652
        %v1654 = vpop.f32.mrf.mxu0
        %1655 = vmatprep.mubr.bf16.mxu0 %v477
        %1656 = vmatmul.mubr.bf16.gmra.mxu0 %v461
        %v1657 = vpop.f32.mrf.mxu0
        %v1658 = vadd.f32 %v1497, %v1657
        %v1659 = vpop.f32.mrf.mxu0
        %v1660 = vpop.f32.mrf.mxu0
        %v1661 = vadd.f32 %v1500, %v1660
        %v1662 = vpop.f32.mrf.mxu0
        %1663 = vmatprep.mubr.bf16.mxu0 %v478
        %1664 = vmatmul.mubr.bf16.gmra.mxu0 %v462
        %v1665 = vpop.f32.mrf.mxu0
        %v1666 = vadd.f32 %v1505, %v1665
        %v1667 = vpop.f32.mrf.mxu0
        %v1668 = vpop.f32.mrf.mxu0
        %v1669 = vadd.f32 %v1508, %v1668
        %v1670 = vpop.f32.mrf.mxu0
        %1671 = vmatprep.mubr.bf16.mxu0 %v479
        %1672 = vmatmul.mubr.bf16.gmra.mxu0 %v463
        %v1673 = vpop.f32.mrf.mxu0
        %v1674 = vadd.f32 %v1513, %v1673
        %v1675 = vpop.f32.mrf.mxu0
        %v1676 = vpop.f32.mrf.mxu0
        %v1677 = vadd.f32 %v1516, %v1676
        %v1678 = vpop.f32.mrf.mxu0
        %1679 = vmatprep.mubr.bf16.mxu0 %v480
        %1680 = vmatmul.mubr.bf16.gmra.mxu0 %v464
        %v1681 = vpop.f32.mrf.mxu0
        %v1682 = vadd.f32 %v1521, %v1681
        %v1683 = vpop.f32.mrf.mxu0
        %v1684 = vpop.f32.mrf.mxu0
        %v1685 = vadd.f32 %v1524, %v1684
        %v1686 = vpop.f32.mrf.mxu0
        %1687 = vmatprep.mubr.bf16.mxu0 %v481
        %1688 = vmatmul.mubr.bf16.gmra.mxu0 %v465
        %v1689 = vpop.f32.mrf.mxu0
        %v1690 = vadd.f32 %v1529, %v1689
        %v1691 = vpop.f32.mrf.mxu0
        %v1692 = vpop.f32.mrf.mxu0
        %v1693 = vadd.f32 %v1532, %v1692
        %v1694 = vpop.f32.mrf.mxu0
        %1695 = vmatprep.mubr.bf16.mxu0 %v482
        %1696 = vmatmul.mubr.bf16.gmra.mxu0 %v466
        %v1697 = vpop.f32.mrf.mxu0
        %v1698 = vadd.f32 %v1537, %v1697
        %v1699 = vpop.f32.mrf.mxu0
        %v1700 = vpop.f32.mrf.mxu0
        %v1701 = vadd.f32 %v1540, %v1700
        %v1702 = vpop.f32.mrf.mxu0
        %1703 = vmatprep.mubr.bf16.mxu0 %v483
        %1704 = vmatmul.mubr.bf16.gmra.mxu0 %v467
        %v1705 = vpop.f32.mrf.mxu0
        %v1706 = vadd.f32 %v1545, %v1705
        %v1707 = vpop.f32.mrf.mxu0
        %v1708 = vpop.f32.mrf.mxu0
        %v1709 = vadd.f32 %v1548, %v1708
        %v1710 = vpop.f32.mrf.mxu0
        %1711 = vmatprep.mubr.bf16.mxu0 %v482
        %1712 = vmatmul.mubr.bf16.gmra.mxu0 %v466
        %v1713 = vpop.f32.mrf.mxu0
        %v1714 = vadd.f32 %v1553, %v1713
        %v1715 = vpop.f32.mrf.mxu0
        %v1716 = vpop.f32.mrf.mxu0
        %v1717 = vadd.f32 %v1556, %v1716
        %v1718 = vpop.f32.mrf.mxu0
        %1719 = vdwg.mxu0
        %1720 = vmatprep.subr.bf16.mxu0 0
        %1721 = vmatpush1.bf16.msra.mxu0 %v1003
        %1722 = vmatprep.subr.bf16.mxu0 0
        %1723 = vmatpush1.bf16.msra.mxu0 %v1002
        %1724 = vmatprep.subr.bf16.mxu0 0
        %1725 = vmatpush1.bf16.msra.mxu0 %v1001
        %1726 = vmatprep.subr.bf16.mxu0 0
        %1727 = vmatpush1.bf16.msra.mxu0 %v1000
        %1728 = vmatprep.subr.bf16.mxu0 0
        %1729 = vmatpush1.bf16.msra.mxu0 %v999
        %1730 = vmatprep.subr.bf16.mxu0 0
        %1731 = vmatpush1.bf16.msra.mxu0 %v998
        %1732 = vmatprep.subr.bf16.mxu0 0
        %1733 = vmatpush1.bf16.msra.mxu0 %v997
        %1734 = vmatprep.subr.bf16.mxu0 0
        %1735 = vmatpush1.bf16.msra.mxu0 %v996
        %1736 = vmatprep.subr.bf16.mxu0 0
        %1737 = vmatpush2.bf16.msra.mxu0 0
        %1738 = vmatprep.subr.bf16.mxu0 0
        %1739 = vmatpush2.bf16.msra.mxu0 0
        %1740 = vmatprep.subr.bf16.mxu0 0
        %1741 = vmatpush2.bf16.msra.mxu0 0
        %1742 = vmatprep.subr.bf16.mxu0 0
        %1743 = vmatpush2.bf16.msra.mxu0 0
        %1744 = vmatprep.subr.bf16.mxu0 0
        %1745 = vmatpush2.bf16.msra.mxu0 0
        %1746 = vmatprep.subr.bf16.mxu0 0
        %1747 = vmatpush2.bf16.msra.mxu0 0
        %1748 = vmatprep.subr.bf16.mxu0 0
        %1749 = vmatpush2.bf16.msra.mxu0 0
        %1750 = vmatprep.subr.bf16.mxu0 0
        %1751 = vmatpush2.bf16.msra.mxu0 0
        %1752 = vmatprep.mubr.bf16.mxu0 0
        %1753 = vmatmul.mubr.bf16.gmra.mxu0 %v485
        %v1754 = vpop.f32.mrf.mxu0
        %v1755 = vadd.f32 %v1594, %v1754
        %v1756 = vpop.f32.mrf.mxu0
        %v1757 = vpop.f32.mrf.mxu0
        %v1758 = vadd.f32 %v1597, %v1757
        %v1759 = vpop.f32.mrf.mxu0
        %1760 = vmatprep.mubr.bf16.mxu0 0
        %1761 = vmatmul.mubr.bf16.gmra.mxu0 %v486
        %v1762 = vpop.f32.mrf.mxu0
        %v1763 = vadd.f32 %v1602, %v1762
        %v1764 = vpop.f32.mrf.mxu0
        %v1765 = vpop.f32.mrf.mxu0
        %v1766 = vadd.f32 %v1605, %v1765
        %v1767 = vpop.f32.mrf.mxu0
        %1768 = vmatprep.mubr.bf16.mxu0 0
        %1769 = vmatmul.mubr.bf16.gmra.mxu0 %v487
        %v1770 = vpop.f32.mrf.mxu0
        %v1771 = vadd.f32 %v1610, %v1770
        %v1772 = vpop.f32.mrf.mxu0
        %v1773 = vpop.f32.mrf.mxu0
        %v1774 = vadd.f32 %v1613, %v1773
        %v1775 = vpop.f32.mrf.mxu0
        %1776 = vmatprep.mubr.bf16.mxu0 0
        %1777 = vmatmul.mubr.bf16.gmra.mxu0 %v488
        %v1778 = vpop.f32.mrf.mxu0
        %v1779 = vadd.f32 %v1618, %v1778
        %v1780 = vpop.f32.mrf.mxu0
        %v1781 = vpop.f32.mrf.mxu0
        %v1782 = vadd.f32 %v1621, %v1781
        %v1783 = vpop.f32.mrf.mxu0
        %1784 = vmatprep.mubr.bf16.mxu0 0
        %1785 = vmatmul.mubr.bf16.gmra.mxu0 %v489
        %v1786 = vpop.f32.mrf.mxu0
        %v1787 = vadd.f32 %v1626, %v1786
        %v1788 = vpop.f32.mrf.mxu0
        %v1789 = vpop.f32.mrf.mxu0
        %v1790 = vadd.f32 %v1629, %v1789
        %v1791 = vpop.f32.mrf.mxu0
        %1792 = vmatprep.mubr.bf16.mxu0 0
        %1793 = vmatmul.mubr.bf16.gmra.mxu0 %v490
        %v1794 = vpop.f32.mrf.mxu0
        %v1795 = vadd.f32 %v1634, %v1794
        %v1796 = vpop.f32.mrf.mxu0
        %v1797 = vpop.f32.mrf.mxu0
        %v1798 = vadd.f32 %v1637, %v1797
        %v1799 = vpop.f32.mrf.mxu0
        %1800 = vmatprep.mubr.bf16.mxu0 0
        %1801 = vmatmul.mubr.bf16.gmra.mxu0 %v491
        %v1802 = vpop.f32.mrf.mxu0
        %v1803 = vadd.f32 %v1642, %v1802
        %v1804 = vpop.f32.mrf.mxu0
        %v1805 = vpop.f32.mrf.mxu0
        %v1806 = vadd.f32 %v1645, %v1805
        %v1807 = vpop.f32.mrf.mxu0
        %1808 = vmatprep.mubr.bf16.mxu0 0
        %1809 = vmatmul.mubr.bf16.gmra.mxu0 %v492
        %v1810 = vpop.f32.mrf.mxu0
        %v1811 = vadd.f32 %v1650, %v1810
        %v1812 = vpop.f32.mrf.mxu0
        %v1813 = vpop.f32.mrf.mxu0
        %v1814 = vadd.f32 %v1653, %v1813
        %v1815 = vpop.f32.mrf.mxu0
        %1816 = vmatprep.mubr.bf16.mxu0 0
        %1817 = vmatmul.mubr.bf16.gmra.mxu0 %v493
        %v1818 = vpop.f32.mrf.mxu0
        %v1819 = vadd.f32 %v1658, %v1818
        %v1820 = vpop.f32.mrf.mxu0
        %v1821 = vpop.f32.mrf.mxu0
        %v1822 = vadd.f32 %v1661, %v1821
        %v1823 = vpop.f32.mrf.mxu0
        %1824 = vmatprep.mubr.bf16.mxu0 0
        %1825 = vmatmul.mubr.bf16.gmra.mxu0 %v494
        %v1826 = vpop.f32.mrf.mxu0
        %v1827 = vadd.f32 %v1666, %v1826
        %v1828 = vpop.f32.mrf.mxu0
        %v1829 = vpop.f32.mrf.mxu0
        %v1830 = vadd.f32 %v1669, %v1829
        %v1831 = vpop.f32.mrf.mxu0
        %1832 = vmatprep.mubr.bf16.mxu0 0
        %1833 = vmatmul.mubr.bf16.gmra.mxu0 %v495
        %v1834 = vpop.f32.mrf.mxu0
        %v1835 = vadd.f32 %v1674, %v1834
        %v1836 = vpop.f32.mrf.mxu0
        %v1837 = vpop.f32.mrf.mxu0
        %v1838 = vadd.f32 %v1677, %v1837
        %v1839 = vpop.f32.mrf.mxu0
        %1840 = vmatprep.mubr.bf16.mxu0 0
        %1841 = vmatmul.mubr.bf16.gmra.mxu0 %v496
        %v1842 = vpop.f32.mrf.mxu0
        %v1843 = vadd.f32 %v1682, %v1842
        %v1844 = vpop.f32.mrf.mxu0
        %v1845 = vpop.f32.mrf.mxu0
        %v1846 = vadd.f32 %v1685, %v1845
        %v1847 = vpop.f32.mrf.mxu0
        %1848 = vmatprep.mubr.bf16.mxu0 0
        %1849 = vmatmul.mubr.bf16.gmra.mxu0 %v497
        %v1850 = vpop.f32.mrf.mxu0
        %v1851 = vadd.f32 %v1690, %v1850
        %v1852 = vpop.f32.mrf.mxu0
        %v1853 = vpop.f32.mrf.mxu0
        %v1854 = vadd.f32 %v1693, %v1853
        %v1855 = vpop.f32.mrf.mxu0
        %1856 = vmatprep.mubr.bf16.mxu0 0
        %1857 = vmatmul.mubr.bf16.gmra.mxu0 %v498
        %v1858 = vpop.f32.mrf.mxu0
        %v1859 = vadd.f32 %v1698, %v1858
        %v1860 = vpop.f32.mrf.mxu0
        %v1861 = vpop.f32.mrf.mxu0
        %v1862 = vadd.f32 %v1701, %v1861
        %v1863 = vpop.f32.mrf.mxu0
        %1864 = vmatprep.mubr.bf16.mxu0 0
        %1865 = vmatmul.mubr.bf16.gmra.mxu0 %v499
        %v1866 = vpop.f32.mrf.mxu0
        %v1867 = vadd.f32 %v1706, %v1866
        %v1868 = vpop.f32.mrf.mxu0
        %v1869 = vpop.f32.mrf.mxu0
        %v1870 = vadd.f32 %v1709, %v1869
        %v1871 = vpop.f32.mrf.mxu0
        %1872 = vmatprep.mubr.bf16.mxu0 0
        %1873 = vmatmul.mubr.bf16.gmra.mxu0 %v498
        %v1874 = vpop.f32.mrf.mxu0
        %v1875 = vadd.f32 %v1714, %v1874
        %v1876 = vpop.f32.mrf.mxu0
        %v1877 = vpop.f32.mrf.mxu0
        %v1878 = vadd.f32 %v1717, %v1877
        %v1879 = vpop.f32.mrf.mxu0
        %1880 = vdwg.mxu0
        %v1881 = vadd.f32 %v1755, %v1758
        %v1882 = vadd.f32 %v1881, %v1763
        %v1883 = vadd.f32 %v1882, %v1766
        %v1884 = vadd.f32 %v1883, %v1771
        %v1885 = vadd.f32 %v1884, %v1774
        %v1886 = vadd.f32 %v1885, %v1779
        %v1887 = vadd.f32 %v1886, %v1782
        %v1888 = vadd.f32 %v1887, %v1787
        %v1889 = vadd.f32 %v1888, %v1790
        %v1890 = vadd.f32 %v1889, %v1795
        %v1891 = vadd.f32 %v1890, %v1798
        %v1892 = vadd.f32 %v1891, %v1803
        %v1893 = vadd.f32 %v1892, %v1806
        %v1894 = vadd.f32 %v1893, %v1811
        %v1895 = vadd.f32 %v1894, %v1814
        %v1896 = vadd.f32 %v1895, %v1819
        %v1897 = vadd.f32 %v1896, %v1822
        %v1898 = vadd.f32 %v1897, %v1827
        %v1899 = vadd.f32 %v1898, %v1830
        %v1900 = vadd.f32 %v1899, %v1835
        %v1901 = vadd.f32 %v1900, %v1838
        %v1902 = vadd.f32 %v1901, %v1843
        %v1903 = vadd.f32 %v1902, %v1846
        %v1904 = vadd.f32 %v1903, %v1851
        %v1905 = vadd.f32 %v1904, %v1854
        %v1906 = vadd.f32 %v1905, %v1859
        %v1907 = vadd.f32 %v1906, %v1862
        %v1908 = vadd.f32 %v1907, %v1867
        %v1909 = vadd.f32 %v1908, %v1870
        %v1910 = vadd.f32 %v1909, %v1875
        %v1911 = vadd.f32 %v1910, %v1878
        %v1912 = vrot.slane %v1911, 4
        %v1913 = vadd.f32 %v1911, %v1912
        %v1914 = vrot.slane %v1913, 2
        %v1915 = vadd.f32 %v1913, %v1914
        %v1916 = vrot.slane %v1915, 1
        %v1917 = vadd.f32 %v1915, %v1916
        %v1918 = vrcp.pop 256.0
        %v1919 = vmul.f32 %v1917, %v1918
        %v1920 = vmul.f32 %v1755, %v1755
        %v1921 = vmul.f32 %v1758, %v1758
        %v1922 = vmul.f32 %v1763, %v1763
        %v1923 = vmul.f32 %v1766, %v1766
        %v1924 = vmul.f32 %v1771, %v1771
        %v1925 = vmul.f32 %v1774, %v1774
        %v1926 = vmul.f32 %v1779, %v1779
        %v1927 = vmul.f32 %v1782, %v1782
        %v1928 = vmul.f32 %v1787, %v1787
        %v1929 = vmul.f32 %v1790, %v1790
        %v1930 = vmul.f32 %v1795, %v1795
        %v1931 = vmul.f32 %v1798, %v1798
        %v1932 = vmul.f32 %v1803, %v1803
        %v1933 = vmul.f32 %v1806, %v1806
        %v1934 = vmul.f32 %v1811, %v1811
        %v1935 = vmul.f32 %v1814, %v1814
        %v1936 = vmul.f32 %v1819, %v1819
        %v1937 = vmul.f32 %v1822, %v1822
        %v1938 = vmul.f32 %v1827, %v1827
        %v1939 = vmul.f32 %v1830, %v1830
        %v1940 = vmul.f32 %v1835, %v1835
        %v1941 = vmul.f32 %v1838, %v1838
        %v1942 = vmul.f32 %v1843, %v1843
        %v1943 = vmul.f32 %v1846, %v1846
        %v1944 = vmul.f32 %v1851, %v1851
        %v1945 = vmul.f32 %v1854, %v1854
        %v1946 = vmul.f32 %v1859, %v1859
        %v1947 = vmul.f32 %v1862, %v1862
        %v1948 = vmul.f32 %v1867, %v1867
        %v1949 = vmul.f32 %v1870, %v1870
        %v1950 = vmul.f32 %v1875, %v1875
        %v1951 = vmul.f32 %v1878, %v1878
        %v1952 = vadd.f32 %v1920, %v1921
        %v1953 = vadd.f32 %v1952, %v1922
        %v1954 = vadd.f32 %v1953, %v1923
        %v1955 = vadd.f32 %v1954, %v1924
        %v1956 = vadd.f32 %v1955, %v1925
        %v1957 = vadd.f32 %v1956, %v1926
        %v1958 = vadd.f32 %v1957, %v1927
        %v1959 = vadd.f32 %v1958, %v1928
        %v1960 = vadd.f32 %v1959, %v1929
        %v1961 = vadd.f32 %v1960, %v1930
        %v1962 = vadd.f32 %v1961, %v1931
        %v1963 = vadd.f32 %v1962, %v1932
        %v1964 = vadd.f32 %v1963, %v1933
        %v1965 = vadd.f32 %v1964, %v1934
        %v1966 = vadd.f32 %v1965, %v1935
        %v1967 = vadd.f32 %v1966, %v1936
        %v1968 = vadd.f32 %v1967, %v1937
        %v1969 = vadd.f32 %v1968, %v1938
        %v1970 = vadd.f32 %v1969, %v1939
        %v1971 = vadd.f32 %v1970, %v1940
        %v1972 = vadd.f32 %v1971, %v1941
        %v1973 = vadd.f32 %v1972, %v1942
        %v1974 = vadd.f32 %v1973, %v1943
        %v1975 = vadd.f32 %v1974, %v1944
        %v1976 = vadd.f32 %v1975, %v1945
        %v1977 = vadd.f32 %v1976, %v1946
        %v1978 = vadd.f32 %v1977, %v1947
        %v1979 = vadd.f32 %v1978, %v1948
        %v1980 = vadd.f32 %v1979, %v1949
        %v1981 = vadd.f32 %v1980, %v1950
        %v1982 = vadd.f32 %v1981, %v1951
        %v1983 = vrot.slane %v1982, 4
        %v1984 = vadd.f32 %v1982, %v1983
        %v1985 = vrot.slane %v1984, 2
        %v1986 = vadd.f32 %v1984, %v1985
        %v1987 = vrot.slane %v1986, 1
        %v1988 = vadd.f32 %v1986, %v1987
        %v1989 = vmul.f32 %v1988, %v1918
        %v1990 = vsub.f32 %v1755, %v1919
        %v1991 = vsub.f32 %v1758, %v1919
        %v1992 = vsub.f32 %v1763, %v1919
        %v1993 = vsub.f32 %v1766, %v1919
        %v1994 = vsub.f32 %v1771, %v1919
        %v1995 = vsub.f32 %v1774, %v1919
        %v1996 = vsub.f32 %v1779, %v1919
        %v1997 = vsub.f32 %v1782, %v1919
        %v1998 = vsub.f32 %v1787, %v1919
        %v1999 = vsub.f32 %v1790, %v1919
        %v2000 = vsub.f32 %v1795, %v1919
        %v2001 = vsub.f32 %v1798, %v1919
        %v2002 = vsub.f32 %v1803, %v1919
        %v2003 = vsub.f32 %v1806, %v1919
        %v2004 = vsub.f32 %v1811, %v1919
        %v2005 = vsub.f32 %v1814, %v1919
        %v2006 = vsub.f32 %v1819, %v1919
        %v2007 = vsub.f32 %v1822, %v1919
        %v2008 = vsub.f32 %v1827, %v1919
        %v2009 = vsub.f32 %v1830, %v1919
        %v2010 = vsub.f32 %v1835, %v1919
        %v2011 = vsub.f32 %v1838, %v1919
        %v2012 = vsub.f32 %v1843, %v1919
        %v2013 = vsub.f32 %v1846, %v1919
        %v2014 = vsub.f32 %v1851, %v1919
        %v2015 = vsub.f32 %v1854, %v1919
        %v2016 = vsub.f32 %v1859, %v1919
        %v2017 = vsub.f32 %v1862, %v1919
        %v2018 = vsub.f32 %v1867, %v1919
        %v2019 = vsub.f32 %v1870, %v1919
        %v2020 = vsub.f32 %v1875, %v1919
        %v2021 = vsub.f32 %v1878, %v1919
        %v2022 = vmul.f32 %v1919, %v1919
        %v2023 = vsub.f32 %v1989, %v2022
        %v2024 = vadd.f32 %v2023, 1e-05
        %v2025 = vrsqrt.pop %v2024
        %v2026 = vmul.f32 %v1990, %v2025
        %v2027 = vmul.f32 %v1991, %v2025
        %v2028 = vmul.f32 %v1992, %v2025
        %v2029 = vmul.f32 %v1993, %v2025
        %v2030 = vmul.f32 %v1994, %v2025
        %v2031 = vmul.f32 %v1995, %v2025
        %v2032 = vmul.f32 %v1996, %v2025
        %v2033 = vmul.f32 %v1997, %v2025
        %v2034 = vmul.f32 %v1998, %v2025
        %v2035 = vmul.f32 %v1999, %v2025
        %v2036 = vmul.f32 %v2000, %v2025
        %v2037 = vmul.f32 %v2001, %v2025
        %v2038 = vmul.f32 %v2002, %v2025
        %v2039 = vmul.f32 %v2003, %v2025
        %v2040 = vmul.f32 %v2004, %v2025
        %v2041 = vmul.f32 %v2005, %v2025
        %v2042 = vmul.f32 %v2006, %v2025
        %v2043 = vmul.f32 %v2007, %v2025
        %v2044 = vmul.f32 %v2008, %v2025
        %v2045 = vmul.f32 %v2009, %v2025
        %v2046 = vmul.f32 %v2010, %v2025
        %v2047 = vmul.f32 %v2011, %v2025
        %v2048 = vmul.f32 %v2012, %v2025
        %v2049 = vmul.f32 %v2013, %v2025
        %v2050 = vmul.f32 %v2014, %v2025
        %v2051 = vmul.f32 %v2015, %v2025
        %v2052 = vmul.f32 %v2016, %v2025
        %v2053 = vmul.f32 %v2017, %v2025
        %v2054 = vmul.f32 %v2018, %v2025
        %v2055 = vmul.f32 %v2019, %v2025
        %v2056 = vmul.f32 %v2020, %v2025
        %v2057 = vmul.f32 %v2021, %v2025
        %v2058 = vmax.f32 %v2026, 0.0
        %v2059 = vmax.f32 %v2027, 0.0
        %v2060 = vmax.f32 %v2028, 0.0
        %v2061 = vmax.f32 %v2029, 0.0
        %v2062 = vmax.f32 %v2030, 0.0
        %v2063 = vmax.f32 %v2031, 0.0
        %v2064 = vmax.f32 %v2032, 0.0
        %v2065 = vmax.f32 %v2033, 0.0
        %v2066 = vmax.f32 %v2034, 0.0
        %v2067 = vmax.f32 %v2035, 0.0
        %v2068 = vmax.f32 %v2036, 0.0
        %v2069 = vmax.f32 %v2037, 0.0
        %v2070 = vmax.f32 %v2038, 0.0
        %v2071 = vmax.f32 %v2039, 0.0
        %v2072 = vmax.f32 %v2040, 0.0
        %v2073 = vmax.f32 %v2041, 0.0
        %v2074 = vmax.f32 %v2042, 0.0
        %v2075 = vmax.f32 %v2043, 0.0
        %v2076 = vmax.f32 %v2044, 0.0
        %v2077 = vmax.f32 %v2045, 0.0
        %v2078 = vmax.f32 %v2046, 0.0
        %v2079 = vmax.f32 %v2047, 0.0
        %v2080 = vmax.f32 %v2048, 0.0
        %v2081 = vmax.f32 %v2049, 0.0
        %v2082 = vmax.f32 %v2050, 0.0
        %v2083 = vmax.f32 %v2051, 0.0
        %v2084 = vmax.f32 %v2052, 0.0
        %v2085 = vmax.f32 %v2053, 0.0
        %v2086 = vmax.f32 %v2054, 0.0
        %v2087 = vmax.f32 %v2055, 0.0
        %v2088 = vmax.f32 %v2056, 0.0
        %v2089 = vmax.f32 %v2057, 0.0
        %v2090 = vrot.slane %v2058, 7
        %v2091 = vrot.slane %v2060, 7
        %v2092 = vrot.slane %v2062, 7
        %v2093 = vrot.slane %v2064, 7
        %v2094 = vrot.slane %v2066, 7
        %v2095 = vrot.slane %v2068, 7
        %v2096 = vrot.slane %v2070, 7
        %v2097 = vrot.slane %v2072, 7
        %v2098 = vrot.slane %v2074, 7
        %v2099 = vrot.slane %v2076, 7
        %v2100 = vrot.slane %v2078, 7
        %v2101 = vrot.slane %v2080, 7
        %v2102 = vrot.slane %v2082, 7
        %v2103 = vrot.slane %v2084, 7
        %v2104 = vrot.slane %v2086, 7
        %v2105 = vrot.slane %v2088, 7
        %v2106 = vrot.slane %v2059, 7
        %v2107 = vrot.slane %v2061, 7
        %v2108 = vrot.slane %v2063, 7
        %v2109 = vrot.slane %v2065, 7
        %v2110 = vrot.slane %v2067, 7
        %v2111 = vrot.slane %v2069, 7
        %v2112 = vrot.slane %v2071, 7
        %v2113 = vrot.slane %v2073, 7
        %v2114 = vrot.slane %v2075, 7
        %v2115 = vrot.slane %v2077, 7
        %v2116 = vrot.slane %v2079, 7
        %v2117 = vrot.slane %v2081, 7
        %v2118 = vrot.slane %v2083, 7
        %v2119 = vrot.slane %v2085, 7
        %v2120 = vrot.slane %v2087, 7
        %v2121 = vrot.slane %v2089, 7
        %v2122 = vsel %vm290, %v2090, %v2106
        %v2123 = vsel %vm290, %v2091, %v2107
        %v2124 = vsel %vm290, %v2092, %v2108
        %v2125 = vsel %vm290, %v2093, %v2109
        %v2126 = vsel %vm290, %v2094, %v2110
        %v2127 = vsel %vm290, %v2095, %v2111
        %v2128 = vsel %vm290, %v2096, %v2112
        %v2129 = vsel %vm290, %v2097, %v2113
        %v2130 = vsel %vm290, %v2098, %v2114
        %v2131 = vsel %vm290, %v2099, %v2115
        %v2132 = vsel %vm290, %v2100, %v2116
        %v2133 = vsel %vm290, %v2101, %v2117
        %v2134 = vsel %vm290, %v2102, %v2118
        %v2135 = vsel %vm290, %v2103, %v2119
        %v2136 = vsel %vm290, %v2104, %v2120
        %v2137 = vsel %vm290, %v2105, %v2121
        %v2138 = vsel %vm290, %v2106, %v2090
        %v2139 = vsel %vm290, %v2107, %v2091
        %v2140 = vsel %vm290, %v2108, %v2092
        %v2141 = vsel %vm290, %v2109, %v2093
        %v2142 = vsel %vm290, %v2110, %v2094
        %v2143 = vsel %vm290, %v2111, %v2095
        %v2144 = vsel %vm290, %v2112, %v2096
        %v2145 = vsel %vm290, %v2113, %v2097
        %v2146 = vsel %vm290, %v2114, %v2098
        %v2147 = vsel %vm290, %v2115, %v2099
        %v2148 = vsel %vm290, %v2116, %v2100
        %v2149 = vsel %vm290, %v2117, %v2101
        %v2150 = vsel %vm290, %v2118, %v2102
        %v2151 = vsel %vm290, %v2119, %v2103
        %v2152 = vsel %vm290, %v2120, %v2104
        %v2153 = vsel %vm290, %v2121, %v2105
        %v2154 = vrot.slane %v2058, 1
        %v2155 = vrot.slane %v2060, 1
        %v2156 = vrot.slane %v2062, 1
        %v2157 = vrot.slane %v2064, 1
        %v2158 = vrot.slane %v2066, 1
        %v2159 = vrot.slane %v2068, 1
        %v2160 = vrot.slane %v2070, 1
        %v2161 = vrot.slane %v2072, 1
        %v2162 = vrot.slane %v2074, 1
        %v2163 = vrot.slane %v2076, 1
        %v2164 = vrot.slane %v2078, 1
        %v2165 = vrot.slane %v2080, 1
        %v2166 = vrot.slane %v2082, 1
        %v2167 = vrot.slane %v2084, 1
        %v2168 = vrot.slane %v2086, 1
        %v2169 = vrot.slane %v2088, 1
        %v2170 = vrot.slane %v2059, 1
        %v2171 = vrot.slane %v2061, 1
        %v2172 = vrot.slane %v2063, 1
        %v2173 = vrot.slane %v2065, 1
        %v2174 = vrot.slane %v2067, 1
        %v2175 = vrot.slane %v2069, 1
        %v2176 = vrot.slane %v2071, 1
        %v2177 = vrot.slane %v2073, 1
        %v2178 = vrot.slane %v2075, 1
        %v2179 = vrot.slane %v2077, 1
        %v2180 = vrot.slane %v2079, 1
        %v2181 = vrot.slane %v2081, 1
        %v2182 = vrot.slane %v2083, 1
        %v2183 = vrot.slane %v2085, 1
        %v2184 = vrot.slane %v2087, 1
        %v2185 = vrot.slane %v2089, 1
        %v2186 = vsel %vm355, %v2154, %v2170
        %v2187 = vsel %vm355, %v2155, %v2171
        %v2188 = vsel %vm355, %v2156, %v2172
        %v2189 = vsel %vm355, %v2157, %v2173
        %v2190 = vsel %vm355, %v2158, %v2174
        %v2191 = vsel %vm355, %v2159, %v2175
        %v2192 = vsel %vm355, %v2160, %v2176
        %v2193 = vsel %vm355, %v2161, %v2177
        %v2194 = vsel %vm355, %v2162, %v2178
        %v2195 = vsel %vm355, %v2163, %v2179
        %v2196 = vsel %vm355, %v2164, %v2180
        %v2197 = vsel %vm355, %v2165, %v2181
        %v2198 = vsel %vm355, %v2166, %v2182
        %v2199 = vsel %vm355, %v2167, %v2183
        %v2200 = vsel %vm355, %v2168, %v2184
        %v2201 = vsel %vm355, %v2169, %v2185
        %v2202 = vsel %vm355, %v2170, %v2154
        %v2203 = vsel %vm355, %v2171, %v2155
        %v2204 = vsel %vm355, %v2172, %v2156
        %v2205 = vsel %vm355, %v2173, %v2157
        %v2206 = vsel %vm355, %v2174, %v2158
        %v2207 = vsel %vm355, %v2175, %v2159
        %v2208 = vsel %vm355, %v2176, %v2160
        %v2209 = vsel %vm355, %v2177, %v2161
        %v2210 = vsel %vm355, %v2178, %v2162
        %v2211 = vsel %vm355, %v2179, %v2163
        %v2212 = vsel %vm355, %v2180, %v2164
        %v2213 = vsel %vm355, %v2181, %v2165
        %v2214 = vsel %vm355, %v2182, %v2166
        %v2215 = vsel %vm355, %v2183, %v2167
        %v2216 = vsel %vm355, %v2184, %v2168
        %v2217 = vsel %vm355, %v2185, %v2169
        %v2218 = vsel %vm254, %v2186, %v2138
        %v2219 = vsel %vm255, %v2202, %v2122
        %v2220 = vsel %vm254, %v2187, %v2139
        %v2221 = vsel %vm255, %v2203, %v2123
        %v2222 = vsel %vm254, %v2188, %v2140
        %v2223 = vsel %vm255, %v2204, %v2124
        %v2224 = vsel %vm254, %v2189, %v2141
        %v2225 = vsel %vm255, %v2205, %v2125
        %v2226 = vsel %vm254, %v2190, %v2142
        %v2227 = vsel %vm255, %v2206, %v2126
        %v2228 = vsel %vm254, %v2191, %v2143
        %v2229 = vsel %vm255, %v2207, %v2127
        %v2230 = vsel %vm254, %v2192, %v2144
        %v2231 = vsel %vm255, %v2208, %v2128
        %v2232 = vsel %vm254, %v2193, %v2145
        %v2233 = vsel %vm255, %v2209, %v2129
        %v2234 = vsel %vm254, %v2194, %v2146
        %v2235 = vsel %vm255, %v2210, %v2130
        %v2236 = vsel %vm254, %v2195, %v2147
        %v2237 = vsel %vm255, %v2211, %v2131
        %v2238 = vsel %vm254, %v2196, %v2148
        %v2239 = vsel %vm255, %v2212, %v2132
        %v2240 = vsel %vm254, %v2197, %v2149
        %v2241 = vsel %vm255, %v2213, %v2133
        %v2242 = vsel %vm254, %v2198, %v2150
        %v2243 = vsel %vm255, %v2214, %v2134
        %v2244 = vsel %vm254, %v2199, %v2151
        %v2245 = vsel %vm255, %v2215, %v2135
        %v2246 = vsel %vm254, %v2200, %v2152
        %v2247 = vsel %vm255, %v2216, %v2136
        %v2248 = vsel %vm254, %v2201, %v2153
        %v2249 = vsel %vm255, %v2217, %v2137
        %v2250 = vsel %vm256, %v2138, %v2186
        %v2251 = vsel %vm257, %v2122, %v2202
        %v2252 = vsel %vm256, %v2139, %v2187
        %v2253 = vsel %vm257, %v2123, %v2203
        %v2254 = vsel %vm256, %v2140, %v2188
        %v2255 = vsel %vm257, %v2124, %v2204
        %v2256 = vsel %vm256, %v2141, %v2189
        %v2257 = vsel %vm257, %v2125, %v2205
        %v2258 = vsel %vm256, %v2142, %v2190
        %v2259 = vsel %vm257, %v2126, %v2206
        %v2260 = vsel %vm256, %v2143, %v2191
        %v2261 = vsel %vm257, %v2127, %v2207
        %v2262 = vsel %vm256, %v2144, %v2192
        %v2263 = vsel %vm257, %v2128, %v2208
        %v2264 = vsel %vm256, %v2145, %v2193
        %v2265 = vsel %vm257, %v2129, %v2209
        %v2266 = vsel %vm256, %v2146, %v2194
        %v2267 = vsel %vm257, %v2130, %v2210
        %v2268 = vsel %vm256, %v2147, %v2195
        %v2269 = vsel %vm257, %v2131, %v2211
        %v2270 = vsel %vm256, %v2148, %v2196
        %v2271 = vsel %vm257, %v2132, %v2212
        %v2272 = vsel %vm256, %v2149, %v2197
        %v2273 = vsel %vm257, %v2133, %v2213
        %v2274 = vsel %vm256, %v2150, %v2198
        %v2275 = vsel %vm257, %v2134, %v2214
        %v2276 = vsel %vm256, %v2151, %v2199
        %v2277 = vsel %vm257, %v2135, %v2215
        %v2278 = vsel %vm256, %v2152, %v2200
        %v2279 = vsel %vm257, %v2136, %v2216
        %v2280 = vsel %vm256, %v2153, %v2201
        %v2281 = vsel %vm257, %v2137, %v2217
        %v2282 = vpack.c.bf16 %v2219, %v2218
        %v2283 = vpack.c.bf16 %v2221, %v2220
        %v2284 = vpack.c.bf16 %v2223, %v2222
        %v2285 = vpack.c.bf16 %v2225, %v2224
        %v2286 = vpack.c.bf16 %v2227, %v2226
        %v2287 = vpack.c.bf16 %v2229, %v2228
        %v2288 = vpack.c.bf16 %v2231, %v2230
        %v2289 = vpack.c.bf16 %v2233, %v2232
        %v2290 = vpack.c.bf16 %v2235, %v2234
        %v2291 = vpack.c.bf16 %v2237, %v2236
        %v2292 = vpack.c.bf16 %v2239, %v2238
        %v2293 = vpack.c.bf16 %v2241, %v2240
        %v2294 = vpack.c.bf16 %v2243, %v2242
        %v2295 = vpack.c.bf16 %v2245, %v2244
        %v2296 = vpack.c.bf16 %v2247, %v2246
        %v2297 = vpack.c.bf16 %v2249, %v2248
        %v2298 = vpack.c.bf16 %v2059, %v2058
        %v2299 = vpack.c.bf16 %v2061, %v2060
        %v2300 = vpack.c.bf16 %v2063, %v2062
        %v2301 = vpack.c.bf16 %v2065, %v2064
        %v2302 = vpack.c.bf16 %v2067, %v2066
        %v2303 = vpack.c.bf16 %v2069, %v2068
        %v2304 = vpack.c.bf16 %v2071, %v2070
        %v2305 = vpack.c.bf16 %v2073, %v2072
        %v2306 = vpack.c.bf16 %v2075, %v2074
        %v2307 = vpack.c.bf16 %v2077, %v2076
        %v2308 = vpack.c.bf16 %v2079, %v2078
        %v2309 = vpack.c.bf16 %v2081, %v2080
        %v2310 = vpack.c.bf16 %v2083, %v2082
        %v2311 = vpack.c.bf16 %v2085, %v2084
        %v2312 = vpack.c.bf16 %v2087, %v2086
        %v2313 = vpack.c.bf16 %v2089, %v2088
        %v2314 = vpack.c.bf16 %v2251, %v2250
        %v2315 = vpack.c.bf16 %v2253, %v2252
        %v2316 = vpack.c.bf16 %v2255, %v2254
        %v2317 = vpack.c.bf16 %v2257, %v2256
        %v2318 = vpack.c.bf16 %v2259, %v2258
        %v2319 = vpack.c.bf16 %v2261, %v2260
        %v2320 = vpack.c.bf16 %v2263, %v2262
        %v2321 = vpack.c.bf16 %v2265, %v2264
        %v2322 = vpack.c.bf16 %v2267, %v2266
        %v2323 = vpack.c.bf16 %v2269, %v2268
        %v2324 = vpack.c.bf16 %v2271, %v2270
        %v2325 = vpack.c.bf16 %v2273, %v2272
        %v2326 = vpack.c.bf16 %v2275, %v2274
        %v2327 = vpack.c.bf16 %v2277, %v2276
        %v2328 = vpack.c.bf16 %v2279, %v2278
        %v2329 = vpack.c.bf16 %v2281, %v2280
        %v2330 = vld [vmem:[#allocation7] sm:$0xf]
        %v2331 = vld [vmem:[#allocation7 + $0x4] sm:$0xf]
        %v2332 = vld [vmem:[#allocation7 + $0x8] sm:$0xf]
        %v2333 = vld [vmem:[#allocation7 + $0xc] sm:$0xf]
        %v2334 = vld [vmem:[#allocation7 + $0x10] sm:$0xf]
        %v2335 = vld [vmem:[#allocation7 + $0x14] sm:$0xf]
        %v2336 = vld [vmem:[#allocation7 + $0x18] sm:$0xf]
        %v2337 = vld [vmem:[#allocation7 + $0x1c] sm:$0xf]
        %v2338 = vld [vmem:[#allocation7 + $0x20] sm:$0xf]
        %v2339 = vld [vmem:[#allocation7 + $0x24] sm:$0xf]
        %v2340 = vld [vmem:[#allocation7 + $0x28] sm:$0xf]
        %v2341 = vld [vmem:[#allocation7 + $0x2c] sm:$0xf]
        %v2342 = vld [vmem:[#allocation7 + $0x30] sm:$0xf]
        %v2343 = vld [vmem:[#allocation7 + $0x34] sm:$0xf]
        %v2344 = vld [vmem:[#allocation7 + $0x38] sm:$0xf]
        %v2345 = vld [vmem:[#allocation7 + $0x3c] sm:$0xf]
        %v2346 = vld [vmem:[#allocation7 + $0x40] sm:$0xf]
        %v2347 = vld [vmem:[#allocation7 + $0x44] sm:$0xf]
        %v2348 = vld [vmem:[#allocation7 + $0x48] sm:$0xf]
        %v2349 = vld [vmem:[#allocation7 + $0x4c] sm:$0xf]
        %v2350 = vld [vmem:[#allocation7 + $0x50] sm:$0xf]
        %v2351 = vld [vmem:[#allocation7 + $0x54] sm:$0xf]
        %v2352 = vld [vmem:[#allocation7 + $0x58] sm:$0xf]
        %v2353 = vld [vmem:[#allocation7 + $0x5c] sm:$0xf]
        %v2354 = vld [vmem:[#allocation7 + $0x60] sm:$0xf]
        %v2355 = vld [vmem:[#allocation7 + $0x64] sm:$0xf]
        %v2356 = vld [vmem:[#allocation7 + $0x68] sm:$0xf]
        %v2357 = vld [vmem:[#allocation7 + $0x6c] sm:$0xf]
        %v2358 = vld [vmem:[#allocation7 + $0x70] sm:$0xf]
        %v2359 = vld [vmem:[#allocation7 + $0x74] sm:$0xf]
        %v2360 = vld [vmem:[#allocation7 + $0x78] sm:$0xf]
        %v2361 = vld [vmem:[#allocation7 + $0x7c] sm:$0xf]
        %v2362 = vld [vmem:[#allocation7 + $0x80] sm:$0xf]
        %v2363 = vld [vmem:[#allocation7 + $0x84] sm:$0xf]
        %v2364 = vld [vmem:[#allocation7 + $0x88] sm:$0xf]
        %v2365 = vld [vmem:[#allocation7 + $0x8c] sm:$0xf]
        %v2366 = vld [vmem:[#allocation7 + $0x90] sm:$0xf]
        %v2367 = vld [vmem:[#allocation7 + $0x94] sm:$0xf]
        %v2368 = vld [vmem:[#allocation7 + $0x98] sm:$0xf]
        %v2369 = vld [vmem:[#allocation7 + $0x9c] sm:$0xf]
        %v2370 = vld [vmem:[#allocation7 + $0xa0] sm:$0xf]
        %v2371 = vld [vmem:[#allocation7 + $0xa4] sm:$0xf]
        %v2372 = vld [vmem:[#allocation7 + $0xa8] sm:$0xf]
        %v2373 = vld [vmem:[#allocation7 + $0xac] sm:$0xf]
        %v2374 = vld [vmem:[#allocation7 + $0xb0] sm:$0xf]
        %v2375 = vld [vmem:[#allocation7 + $0xb4] sm:$0xf]
        %v2376 = vld [vmem:[#allocation7 + $0xb8] sm:$0xf]
        %v2377 = vld [vmem:[#allocation7 + $0xbc] sm:$0xf]
        %v2378 = vld [vmem:[#allocation7 + $0xc0] sm:$0xf]
        %v2379 = vld [vmem:[#allocation7 + $0xc4] sm:$0xf]
        %v2380 = vld [vmem:[#allocation7 + $0xc8] sm:$0xf]
        %v2381 = vld [vmem:[#allocation7 + $0xcc] sm:$0xf]
        %v2382 = vld [vmem:[#allocation7 + $0xd0] sm:$0xf]
        %v2383 = vld [vmem:[#allocation7 + $0xd4] sm:$0xf]
        %v2384 = vld [vmem:[#allocation7 + $0xd8] sm:$0xf]
        %v2385 = vld [vmem:[#allocation7 + $0xdc] sm:$0xf]
        %v2386 = vld [vmem:[#allocation7 + $0xe0] sm:$0xf]
        %v2387 = vld [vmem:[#allocation7 + $0xe4] sm:$0xf]
        %v2388 = vld [vmem:[#allocation7 + $0xe8] sm:$0xf]
        %v2389 = vld [vmem:[#allocation7 + $0xec] sm:$0xf]
        %v2390 = vld [vmem:[#allocation7 + $0xf0] sm:$0xf]
        %v2391 = vld [vmem:[#allocation7 + $0xf4] sm:$0xf]
        %v2392 = vld [vmem:[#allocation7 + $0xf8] sm:$0xf]
        %v2393 = vld [vmem:[#allocation7 + $0xfc] sm:$0xf]
        %v2394 = vld [vmem:[#allocation7 + $0x100] sm:$0xf]
        %v2395 = vld [vmem:[#allocation7 + $0x104] sm:$0xf]
        %v2396 = vld [vmem:[#allocation7 + $0x108] sm:$0xf]
        %v2397 = vld [vmem:[#allocation7 + $0x10c] sm:$0xf]
        %v2398 = vld [vmem:[#allocation7 + $0x110] sm:$0xf]
        %v2399 = vld [vmem:[#allocation7 + $0x114] sm:$0xf]
        %v2400 = vld [vmem:[#allocation7 + $0x118] sm:$0xf]
        %v2401 = vld [vmem:[#allocation7 + $0x11c] sm:$0xf]
        %v2402 = vld [vmem:[#allocation7 + $0x120] sm:$0xf]
        %v2403 = vld [vmem:[#allocation7 + $0x124] sm:$0xf]
        %v2404 = vld [vmem:[#allocation7 + $0x128] sm:$0xf]
        %v2405 = vld [vmem:[#allocation7 + $0x12c] sm:$0xf]
        %v2406 = vld [vmem:[#allocation7 + $0x130] sm:$0xf]
        %v2407 = vld [vmem:[#allocation7 + $0x134] sm:$0xf]
        %v2408 = vld [vmem:[#allocation7 + $0x138] sm:$0xf]
        %v2409 = vld [vmem:[#allocation7 + $0x13c] sm:$0xf]
        %v2410 = vld [vmem:[#allocation7 + $0x140] sm:$0xf]
        %v2411 = vld [vmem:[#allocation7 + $0x144] sm:$0xf]
        %v2412 = vld [vmem:[#allocation7 + $0x148] sm:$0xf]
        %v2413 = vld [vmem:[#allocation7 + $0x14c] sm:$0xf]
        %v2414 = vld [vmem:[#allocation7 + $0x150] sm:$0xf]
        %v2415 = vld [vmem:[#allocation7 + $0x154] sm:$0xf]
        %v2416 = vld [vmem:[#allocation7 + $0x158] sm:$0xf]
        %v2417 = vld [vmem:[#allocation7 + $0x15c] sm:$0xf]
        %v2418 = vld [vmem:[#allocation7 + $0x160] sm:$0xf]
        %v2419 = vld [vmem:[#allocation7 + $0x164] sm:$0xf]
        %v2420 = vld [vmem:[#allocation7 + $0x168] sm:$0xf]
        %v2421 = vld [vmem:[#allocation7 + $0x16c] sm:$0xf]
        %v2422 = vld [vmem:[#allocation7 + $0x170] sm:$0xf]
        %v2423 = vld [vmem:[#allocation7 + $0x174] sm:$0xf]
        %v2424 = vld [vmem:[#allocation7 + $0x178] sm:$0xf]
        %v2425 = vld [vmem:[#allocation7 + $0x17c] sm:$0xf]
        %v2426 = vld [vmem:[#allocation7 + $0x180] sm:$0xf]
        %v2427 = vld [vmem:[#allocation7 + $0x184] sm:$0xf]
        %v2428 = vld [vmem:[#allocation7 + $0x188] sm:$0xf]
        %v2429 = vld [vmem:[#allocation7 + $0x18c] sm:$0xf]
        %v2430 = vld [vmem:[#allocation7 + $0x190] sm:$0xf]
        %v2431 = vld [vmem:[#allocation7 + $0x194] sm:$0xf]
        %v2432 = vld [vmem:[#allocation7 + $0x198] sm:$0xf]
        %v2433 = vld [vmem:[#allocation7 + $0x19c] sm:$0xf]
        %v2434 = vld [vmem:[#allocation7 + $0x1a0] sm:$0xf]
        %v2435 = vld [vmem:[#allocation7 + $0x1a4] sm:$0xf]
        %v2436 = vld [vmem:[#allocation7 + $0x1a8] sm:$0xf]
        %v2437 = vld [vmem:[#allocation7 + $0x1ac] sm:$0xf]
        %v2438 = vld [vmem:[#allocation7 + $0x1b0] sm:$0xf]
        %v2439 = vld [vmem:[#allocation7 + $0x1b4] sm:$0xf]
        %v2440 = vld [vmem:[#allocation7 + $0x1b8] sm:$0xf]
        %v2441 = vld [vmem:[#allocation7 + $0x1bc] sm:$0xf]
        %v2442 = vld [vmem:[#allocation7 + $0x1c0] sm:$0xf]
        %v2443 = vld [vmem:[#allocation7 + $0x1c4] sm:$0xf]
        %v2444 = vld [vmem:[#allocation7 + $0x1c8] sm:$0xf]
        %v2445 = vld [vmem:[#allocation7 + $0x1cc] sm:$0xf]
        %v2446 = vld [vmem:[#allocation7 + $0x1d0] sm:$0xf]
        %v2447 = vld [vmem:[#allocation7 + $0x1d4] sm:$0xf]
        %v2448 = vld [vmem:[#allocation7 + $0x1d8] sm:$0xf]
        %v2449 = vld [vmem:[#allocation7 + $0x1dc] sm:$0xf]
        %v2450 = vld [vmem:[#allocation7 + $0x1e0] sm:$0xf]
        %v2451 = vld [vmem:[#allocation7 + $0x1e4] sm:$0xf]
        %v2452 = vld [vmem:[#allocation7 + $0x1e8] sm:$0xf]
        %v2453 = vld [vmem:[#allocation7 + $0x1ec] sm:$0xf]
        %v2454 = vld [vmem:[#allocation7 + $0x1f0] sm:$0xf]
        %v2455 = vld [vmem:[#allocation7 + $0x1f4] sm:$0xf]
        %v2456 = vld [vmem:[#allocation7 + $0x1f8] sm:$0xf]
        %v2457 = vld [vmem:[#allocation7 + $0x1fc] sm:$0xf]
        %v2458 = vld [vmem:[#allocation7 + $0x200] sm:$0xf]
        %v2459 = vld [vmem:[#allocation7 + $0x204] sm:$0xf]
        %v2460 = vld [vmem:[#allocation7 + $0x208] sm:$0xf]
        %v2461 = vld [vmem:[#allocation7 + $0x20c] sm:$0xf]
        %v2462 = vld [vmem:[#allocation7 + $0x210] sm:$0xf]
        %v2463 = vld [vmem:[#allocation7 + $0x214] sm:$0xf]
        %v2464 = vld [vmem:[#allocation7 + $0x218] sm:$0xf]
        %v2465 = vld [vmem:[#allocation7 + $0x21c] sm:$0xf]
        %v2466 = vld [vmem:[#allocation7 + $0x220] sm:$0xf]
        %v2467 = vld [vmem:[#allocation7 + $0x224] sm:$0xf]
        %v2468 = vld [vmem:[#allocation7 + $0x228] sm:$0xf]
        %v2469 = vld [vmem:[#allocation7 + $0x22c] sm:$0xf]
        %v2470 = vld [vmem:[#allocation7 + $0x230] sm:$0xf]
        %v2471 = vld [vmem:[#allocation7 + $0x234] sm:$0xf]
        %v2472 = vld [vmem:[#allocation7 + $0x238] sm:$0xf]
        %v2473 = vld [vmem:[#allocation7 + $0x23c] sm:$0xf]
        %v2618 = vunpack.c.l.b16 %v2330
        %v2619 = vunpack.c.l.b16 %v2331
        %v2620 = vunpack.c.l.b16 %v2332
        %v2621 = vunpack.c.l.b16 %v2333
        %v2622 = vunpack.c.l.b16 %v2334
        %v2623 = vunpack.c.l.b16 %v2335
        %v2624 = vunpack.c.l.b16 %v2336
        %v2625 = vunpack.c.l.b16 %v2337
        %v2626 = vunpack.c.l.b16 %v2338
        %v2627 = vunpack.c.l.b16 %v2339
        %v2628 = vunpack.c.l.b16 %v2340
        %v2629 = vunpack.c.l.b16 %v2341
        %v2630 = vunpack.c.l.b16 %v2342
        %v2631 = vunpack.c.l.b16 %v2343
        %v2632 = vunpack.c.l.b16 %v2344
        %v2633 = vunpack.c.l.b16 %v2345
        %v2634 = vunpack.c.l.b16 %v2346
        %v2635 = vunpack.c.l.b16 %v2347
        %v2636 = vunpack.c.l.b16 %v2348
        %v2637 = vunpack.c.l.b16 %v2349
        %v2638 = vunpack.c.l.b16 %v2350
        %v2639 = vunpack.c.l.b16 %v2351
        %v2640 = vunpack.c.l.b16 %v2352
        %v2641 = vunpack.c.l.b16 %v2353
        %v2642 = vunpack.c.l.b16 %v2354
        %v2643 = vunpack.c.l.b16 %v2355
        %v2644 = vunpack.c.l.b16 %v2356
        %v2645 = vunpack.c.l.b16 %v2357
        %v2646 = vunpack.c.l.b16 %v2358
        %v2647 = vunpack.c.l.b16 %v2359
        %v2648 = vunpack.c.l.b16 %v2360
        %v2649 = vunpack.c.l.b16 %v2361
        %v2650 = vunpack.c.l.b16 %v2362
        %v2651 = vunpack.c.l.b16 %v2363
        %v2652 = vunpack.c.l.b16 %v2364
        %v2653 = vunpack.c.l.b16 %v2365
        %v2654 = vunpack.c.l.b16 %v2366
        %v2655 = vunpack.c.l.b16 %v2367
        %v2656 = vunpack.c.l.b16 %v2368
        %v2657 = vunpack.c.l.b16 %v2369
        %v2658 = vunpack.c.l.b16 %v2370
        %v2659 = vunpack.c.l.b16 %v2371
        %v2660 = vunpack.c.l.b16 %v2372
        %v2661 = vunpack.c.l.b16 %v2373
        %v2662 = vunpack.c.l.b16 %v2374
        %v2663 = vunpack.c.l.b16 %v2375
        %v2664 = vunpack.c.l.b16 %v2376
        %v2665 = vunpack.c.l.b16 %v2377
        %v2666 = vunpack.c.l.b16 %v2378
        %v2667 = vunpack.c.l.b16 %v2379
        %v2668 = vunpack.c.l.b16 %v2380
        %v2669 = vunpack.c.l.b16 %v2381
        %v2670 = vunpack.c.l.b16 %v2382
        %v2671 = vunpack.c.l.b16 %v2383
        %v2672 = vunpack.c.l.b16 %v2384
        %v2673 = vunpack.c.l.b16 %v2385
        %v2674 = vunpack.c.l.b16 %v2386
        %v2675 = vunpack.c.l.b16 %v2387
        %v2676 = vunpack.c.l.b16 %v2388
        %v2677 = vunpack.c.l.b16 %v2389
        %v2678 = vunpack.c.l.b16 %v2390
        %v2679 = vunpack.c.l.b16 %v2391
        %v2680 = vunpack.c.l.b16 %v2392
        %v2681 = vunpack.c.l.b16 %v2393
        %v2682 = vunpack.c.l.b16 %v2394
        %v2683 = vunpack.c.l.b16 %v2395
        %v2684 = vunpack.c.l.b16 %v2396
        %v2685 = vunpack.c.l.b16 %v2397
        %v2686 = vunpack.c.l.b16 %v2398
        %v2687 = vunpack.c.l.b16 %v2399
        %v2688 = vunpack.c.l.b16 %v2400
        %v2689 = vunpack.c.l.b16 %v2401
        %v2690 = vunpack.c.l.b16 %v2402
        %v2691 = vunpack.c.l.b16 %v2403
        %v2692 = vunpack.c.l.b16 %v2404
        %v2693 = vunpack.c.l.b16 %v2405
        %v2694 = vunpack.c.l.b16 %v2406
        %v2695 = vunpack.c.l.b16 %v2407
        %v2696 = vunpack.c.l.b16 %v2408
        %v2697 = vunpack.c.l.b16 %v2409
        %v2698 = vunpack.c.l.b16 %v2410
        %v2699 = vunpack.c.l.b16 %v2411
        %v2700 = vunpack.c.l.b16 %v2412
        %v2701 = vunpack.c.l.b16 %v2413
        %v2702 = vunpack.c.l.b16 %v2414
        %v2703 = vunpack.c.l.b16 %v2415
        %v2704 = vunpack.c.l.b16 %v2416
        %v2705 = vunpack.c.l.b16 %v2417
        %v2706 = vunpack.c.l.b16 %v2418
        %v2707 = vunpack.c.l.b16 %v2419
        %v2708 = vunpack.c.l.b16 %v2420
        %v2709 = vunpack.c.l.b16 %v2421
        %v2710 = vunpack.c.l.b16 %v2422
        %v2711 = vunpack.c.l.b16 %v2423
        %v2712 = vunpack.c.l.b16 %v2424
        %v2713 = vunpack.c.l.b16 %v2425
        %v2714 = vunpack.c.l.b16 %v2426
        %v2715 = vunpack.c.l.b16 %v2427
        %v2716 = vunpack.c.l.b16 %v2428
        %v2717 = vunpack.c.l.b16 %v2429
        %v2718 = vunpack.c.l.b16 %v2430
        %v2719 = vunpack.c.l.b16 %v2431
        %v2720 = vunpack.c.l.b16 %v2432
        %v2721 = vunpack.c.l.b16 %v2433
        %v2722 = vunpack.c.l.b16 %v2434
        %v2723 = vunpack.c.l.b16 %v2435
        %v2724 = vunpack.c.l.b16 %v2436
        %v2725 = vunpack.c.l.b16 %v2437
        %v2726 = vunpack.c.l.b16 %v2438
        %v2727 = vunpack.c.l.b16 %v2439
        %v2728 = vunpack.c.l.b16 %v2440
        %v2729 = vunpack.c.l.b16 %v2441
        %v2730 = vunpack.c.l.b16 %v2442
        %v2731 = vunpack.c.l.b16 %v2443
        %v2732 = vunpack.c.l.b16 %v2444
        %v2733 = vunpack.c.l.b16 %v2445
        %v2734 = vunpack.c.l.b16 %v2446
        %v2735 = vunpack.c.l.b16 %v2447
        %v2736 = vunpack.c.l.b16 %v2448
        %v2737 = vunpack.c.l.b16 %v2449
        %v2738 = vunpack.c.l.b16 %v2450
        %v2739 = vunpack.c.l.b16 %v2451
        %v2740 = vunpack.c.l.b16 %v2452
        %v2741 = vunpack.c.l.b16 %v2453
        %v2742 = vunpack.c.l.b16 %v2454
        %v2743 = vunpack.c.l.b16 %v2455
        %v2744 = vunpack.c.l.b16 %v2456
        %v2745 = vunpack.c.l.b16 %v2457
        %v2746 = vunpack.c.l.b16 %v2458
        %v2747 = vunpack.c.l.b16 %v2459
        %v2748 = vunpack.c.l.b16 %v2460
        %v2749 = vunpack.c.l.b16 %v2461
        %v2750 = vunpack.c.l.b16 %v2462
        %v2751 = vunpack.c.l.b16 %v2463
        %v2752 = vunpack.c.l.b16 %v2464
        %v2753 = vunpack.c.l.b16 %v2465
        %v2754 = vunpack.c.l.b16 %v2466
        %v2755 = vunpack.c.l.b16 %v2467
        %v2756 = vunpack.c.l.b16 %v2468
        %v2757 = vunpack.c.l.b16 %v2469
        %v2758 = vunpack.c.l.b16 %v2470
        %v2759 = vunpack.c.l.b16 %v2471
        %v2760 = vunpack.c.l.b16 %v2472
        %v2761 = vunpack.c.l.b16 %v2473
        %v2762 = vpack.c.b16 %v2619, %v2618
        %v2763 = vpack.c.b16 %v2621, %v2620
        %v2764 = vpack.c.b16 %v2623, %v2622
        %v2765 = vpack.c.b16 %v2625, %v2624
        %v2766 = vpack.c.b16 %v2627, %v2626
        %v2767 = vpack.c.b16 %v2629, %v2628
        %v2768 = vpack.c.b16 %v2631, %v2630
        %v2769 = vpack.c.b16 %v2633, %v2632
        %v2770 = vpack.c.b16 %v2635, %v2634
        %v2771 = vpack.c.b16 %v2637, %v2636
        %v2772 = vpack.c.b16 %v2639, %v2638
        %v2773 = vpack.c.b16 %v2641, %v2640
        %v2774 = vpack.c.b16 %v2643, %v2642
        %v2775 = vpack.c.b16 %v2645, %v2644
        %v2776 = vpack.c.b16 %v2647, %v2646
        %v2777 = vpack.c.b16 %v2649, %v2648
        %v2778 = vpack.c.b16 %v2651, %v2650
        %v2779 = vpack.c.b16 %v2653, %v2652
        %v2780 = vpack.c.b16 %v2655, %v2654
        %v2781 = vpack.c.b16 %v2657, %v2656
        %v2782 = vpack.c.b16 %v2659, %v2658
        %v2783 = vpack.c.b16 %v2661, %v2660
        %v2784 = vpack.c.b16 %v2663, %v2662
        %v2785 = vpack.c.b16 %v2665, %v2664
        %v2786 = vpack.c.b16 %v2667, %v2666
        %v2787 = vpack.c.b16 %v2669, %v2668
        %v2788 = vpack.c.b16 %v2671, %v2670
        %v2789 = vpack.c.b16 %v2673, %v2672
        %v2790 = vpack.c.b16 %v2675, %v2674
        %v2791 = vpack.c.b16 %v2677, %v2676
        %v2792 = vpack.c.b16 %v2679, %v2678
        %v2793 = vpack.c.b16 %v2681, %v2680
        %v2794 = vpack.c.b16 %v2683, %v2682
        %v2795 = vpack.c.b16 %v2685, %v2684
        %v2796 = vpack.c.b16 %v2687, %v2686
        %v2797 = vpack.c.b16 %v2689, %v2688
        %v2798 = vpack.c.b16 %v2691, %v2690
        %v2799 = vpack.c.b16 %v2693, %v2692
        %v2800 = vpack.c.b16 %v2695, %v2694
        %v2801 = vpack.c.b16 %v2697, %v2696
        %v2802 = vpack.c.b16 %v2699, %v2698
        %v2803 = vpack.c.b16 %v2701, %v2700
        %v2804 = vpack.c.b16 %v2703, %v2702
        %v2805 = vpack.c.b16 %v2705, %v2704
        %v2806 = vpack.c.b16 %v2707, %v2706
        %v2807 = vpack.c.b16 %v2709, %v2708
        %v2808 = vpack.c.b16 %v2711, %v2710
        %v2809 = vpack.c.b16 %v2713, %v2712
        %v2810 = vpack.c.b16 %v2715, %v2714
        %v2811 = vpack.c.b16 %v2717, %v2716
        %v2812 = vpack.c.b16 %v2719, %v2718
        %v2813 = vpack.c.b16 %v2721, %v2720
        %v2814 = vpack.c.b16 %v2723, %v2722
        %v2815 = vpack.c.b16 %v2725, %v2724
        %v2816 = vpack.c.b16 %v2727, %v2726
        %v2817 = vpack.c.b16 %v2729, %v2728
        %v2818 = vpack.c.b16 %v2731, %v2730
        %v2819 = vpack.c.b16 %v2733, %v2732
        %v2820 = vpack.c.b16 %v2735, %v2734
        %v2821 = vpack.c.b16 %v2737, %v2736
        %v2822 = vpack.c.b16 %v2739, %v2738
        %v2823 = vpack.c.b16 %v2741, %v2740
        %v2824 = vpack.c.b16 %v2743, %v2742
        %v2825 = vpack.c.b16 %v2745, %v2744
        %v2826 = vpack.c.b16 %v2747, %v2746
        %v2827 = vpack.c.b16 %v2749, %v2748
        %v2828 = vpack.c.b16 %v2751, %v2750
        %v2829 = vpack.c.b16 %v2753, %v2752
        %v2830 = vpack.c.b16 %v2755, %v2754
        %v2831 = vpack.c.b16 %v2757, %v2756
        %v2832 = vpack.c.b16 %v2759, %v2758
        %v2833 = vpack.c.b16 %v2761, %v2760
        %2906 = vmatprep.subr.bf16.mxu0 0
        %2907 = vmatpush1.bf16.msra.mxu0 %v2769
        %2908 = vmatprep.subr.bf16.mxu0 0
        %2909 = vmatpush1.bf16.msra.mxu0 %v2768
        %2910 = vmatprep.subr.bf16.mxu0 0
        %2911 = vmatpush1.bf16.msra.mxu0 %v2767
        %2912 = vmatprep.subr.bf16.mxu0 0
        %2913 = vmatpush1.bf16.msra.mxu0 %v2766
        %2914 = vmatprep.subr.bf16.mxu0 0
        %2915 = vmatpush1.bf16.msra.mxu0 %v2765
        %2916 = vmatprep.subr.bf16.mxu0 0
        %2917 = vmatpush1.bf16.msra.mxu0 %v2764
        %2918 = vmatprep.subr.bf16.mxu0 0
        %2919 = vmatpush1.bf16.msra.mxu0 %v2763
        %2920 = vmatprep.subr.bf16.mxu0 0
        %2921 = vmatpush1.bf16.msra.mxu0 %v2762
        %2922 = vmatprep.subr.bf16.mxu0 0
        %2923 = vmatpush2.bf16.msra.mxu0 %v2777
        %2924 = vmatprep.subr.bf16.mxu0 0
        %2925 = vmatpush2.bf16.msra.mxu0 %v2776
        %2926 = vmatprep.subr.bf16.mxu0 0
        %2927 = vmatpush2.bf16.msra.mxu0 %v2775
        %2928 = vmatprep.subr.bf16.mxu0 0
        %2929 = vmatpush2.bf16.msra.mxu0 %v2774
        %2930 = vmatprep.subr.bf16.mxu0 0
        %2931 = vmatpush2.bf16.msra.mxu0 %v2773
        %2932 = vmatprep.subr.bf16.mxu0 0
        %2933 = vmatpush2.bf16.msra.mxu0 %v2772
        %2934 = vmatprep.subr.bf16.mxu0 0
        %2935 = vmatpush2.bf16.msra.mxu0 %v2771
        %2936 = vmatprep.subr.bf16.mxu0 0
        %2937 = vmatpush2.bf16.msra.mxu0 %v2770
        %2938 = vmatprep.mubr.bf16.mxu0 %v2299
        %2939 = vmatmul.mubr.bf16.gmra.mxu0 %v2283
        %v2940 = vpop.f32.mrf.mxu0
        %v2941 = vadd.f32 0.0, %v2940
        %v2942 = vpop.f32.mrf.mxu0
        %v2943 = vpop.f32.mrf.mxu0
        %v2944 = vadd.f32 0.0, %v2943
        %v2945 = vpop.f32.mrf.mxu0
        %2946 = vmatprep.mubr.bf16.mxu0 %v2298
        %2947 = vmatmul.mubr.bf16.gmra.mxu0 %v2282
        %v2948 = vpop.f32.mrf.mxu0
        %v2949 = vadd.f32 0.0, %v2948
        %v2950 = vpop.f32.mrf.mxu0
        %v2951 = vpop.f32.mrf.mxu0
        %v2952 = vadd.f32 0.0, %v2951
        %v2953 = vpop.f32.mrf.mxu0
        %2954 = vmatprep.mubr.bf16.mxu0 %v2299
        %2955 = vmatmul.mubr.bf16.gmra.mxu0 %v2283
        %v2956 = vpop.f32.mrf.mxu0
        %v2957 = vadd.f32 0.0, %v2956
        %v2958 = vpop.f32.mrf.mxu0
        %v2959 = vpop.f32.mrf.mxu0
        %v2960 = vadd.f32 0.0, %v2959
        %v2961 = vpop.f32.mrf.mxu0
        %2962 = vmatprep.mubr.bf16.mxu0 %v2300
        %2963 = vmatmul.mubr.bf16.gmra.mxu0 %v2284
        %v2964 = vpop.f32.mrf.mxu0
        %v2965 = vadd.f32 0.0, %v2964
        %v2966 = vpop.f32.mrf.mxu0
        %v2967 = vpop.f32.mrf.mxu0
        %v2968 = vadd.f32 0.0, %v2967
        %v2969 = vpop.f32.mrf.mxu0
        %2970 = vmatprep.mubr.bf16.mxu0 %v2301
        %2971 = vmatmul.mubr.bf16.gmra.mxu0 %v2285
        %v2972 = vpop.f32.mrf.mxu0
        %v2973 = vadd.f32 0.0, %v2972
        %v2974 = vpop.f32.mrf.mxu0
        %v2975 = vpop.f32.mrf.mxu0
        %v2976 = vadd.f32 0.0, %v2975
        %v2977 = vpop.f32.mrf.mxu0
        %2978 = vmatprep.mubr.bf16.mxu0 %v2302
        %2979 = vmatmul.mubr.bf16.gmra.mxu0 %v2286
        %v2980 = vpop.f32.mrf.mxu0
        %v2981 = vadd.f32 0.0, %v2980
        %v2982 = vpop.f32.mrf.mxu0
        %v2983 = vpop.f32.mrf.mxu0
        %v2984 = vadd.f32 0.0, %v2983
        %v2985 = vpop.f32.mrf.mxu0
        %2986 = vmatprep.mubr.bf16.mxu0 %v2303
        %2987 = vmatmul.mubr.bf16.gmra.mxu0 %v2287
        %v2988 = vpop.f32.mrf.mxu0
        %v2989 = vadd.f32 0.0, %v2988
        %v2990 = vpop.f32.mrf.mxu0
        %v2991 = vpop.f32.mrf.mxu0
        %v2992 = vadd.f32 0.0, %v2991
        %v2993 = vpop.f32.mrf.mxu0
        %2994 = vmatprep.mubr.bf16.mxu0 %v2304
        %2995 = vmatmul.mubr.bf16.gmra.mxu0 %v2288
        %v2996 = vpop.f32.mrf.mxu0
        %v2997 = vadd.f32 0.0, %v2996
        %v2998 = vpop.f32.mrf.mxu0
        %v2999 = vpop.f32.mrf.mxu0
        %v3000 = vadd.f32 0.0, %v2999
        %v3001 = vpop.f32.mrf.mxu0
        %3002 = vmatprep.mubr.bf16.mxu0 %v2305
        %3003 = vmatmul.mubr.bf16.gmra.mxu0 %v2289
        %v3004 = vpop.f32.mrf.mxu0
        %v3005 = vadd.f32 0.0, %v3004
        %v3006 = vpop.f32.mrf.mxu0
        %v3007 = vpop.f32.mrf.mxu0
        %v3008 = vadd.f32 0.0, %v3007
        %v3009 = vpop.f32.mrf.mxu0
        %3010 = vmatprep.mubr.bf16.mxu0 %v2306
        %3011 = vmatmul.mubr.bf16.gmra.mxu0 %v2290
        %v3012 = vpop.f32.mrf.mxu0
        %v3013 = vadd.f32 0.0, %v3012
        %v3014 = vpop.f32.mrf.mxu0
        %v3015 = vpop.f32.mrf.mxu0
        %v3016 = vadd.f32 0.0, %v3015
        %v3017 = vpop.f32.mrf.mxu0
        %3018 = vmatprep.mubr.bf16.mxu0 %v2307
        %3019 = vmatmul.mubr.bf16.gmra.mxu0 %v2291
        %v3020 = vpop.f32.mrf.mxu0
        %v3021 = vadd.f32 0.0, %v3020
        %v3022 = vpop.f32.mrf.mxu0
        %v3023 = vpop.f32.mrf.mxu0
        %v3024 = vadd.f32 0.0, %v3023
        %v3025 = vpop.f32.mrf.mxu0
        %3026 = vmatprep.mubr.bf16.mxu0 %v2308
        %3027 = vmatmul.mubr.bf16.gmra.mxu0 %v2292
        %v3028 = vpop.f32.mrf.mxu0
        %v3029 = vadd.f32 0.0, %v3028
        %v3030 = vpop.f32.mrf.mxu0
        %v3031 = vpop.f32.mrf.mxu0
        %v3032 = vadd.f32 0.0, %v3031
        %v3033 = vpop.f32.mrf.mxu0
        %3034 = vmatprep.mubr.bf16.mxu0 %v2309
        %3035 = vmatmul.mubr.bf16.gmra.mxu0 %v2293
        %v3036 = vpop.f32.mrf.mxu0
        %v3037 = vadd.f32 0.0, %v3036
        %v3038 = vpop.f32.mrf.mxu0
        %v3039 = vpop.f32.mrf.mxu0
        %v3040 = vadd.f32 0.0, %v3039
        %v3041 = vpop.f32.mrf.mxu0
        %3042 = vmatprep.mubr.bf16.mxu0 %v2310
        %3043 = vmatmul.mubr.bf16.gmra.mxu0 %v2294
        %v3044 = vpop.f32.mrf.mxu0
        %v3045 = vadd.f32 0.0, %v3044
        %v3046 = vpop.f32.mrf.mxu0
        %v3047 = vpop.f32.mrf.mxu0
        %v3048 = vadd.f32 0.0, %v3047
        %v3049 = vpop.f32.mrf.mxu0
        %3050 = vmatprep.mubr.bf16.mxu0 %v2311
        %3051 = vmatmul.mubr.bf16.gmra.mxu0 %v2295
        %v3052 = vpop.f32.mrf.mxu0
        %v3053 = vadd.f32 0.0, %v3052
        %v3054 = vpop.f32.mrf.mxu0
        %v3055 = vpop.f32.mrf.mxu0
        %v3056 = vadd.f32 0.0, %v3055
        %v3057 = vpop.f32.mrf.mxu0
        %3058 = vmatprep.mubr.bf16.mxu0 %v2312
        %3059 = vmatmul.mubr.bf16.gmra.mxu0 %v2296
        %v3060 = vpop.f32.mrf.mxu0
        %v3061 = vadd.f32 0.0, %v3060
        %v3062 = vpop.f32.mrf.mxu0
        %v3063 = vpop.f32.mrf.mxu0
        %v3064 = vadd.f32 0.0, %v3063
        %v3065 = vpop.f32.mrf.mxu0
        %3066 = vdwg.mxu0
        %3067 = vmatprep.subr.bf16.mxu0 0
        %3068 = vmatpush1.bf16.msra.mxu0 %v2785
        %3069 = vmatprep.subr.bf16.mxu0 0
        %3070 = vmatpush1.bf16.msra.mxu0 %v2784
        %3071 = vmatprep.subr.bf16.mxu0 0
        %3072 = vmatpush1.bf16.msra.mxu0 %v2783
        %3073 = vmatprep.subr.bf16.mxu0 0
        %3074 = vmatpush1.bf16.msra.mxu0 %v2782
        %3075 = vmatprep.subr.bf16.mxu0 0
        %3076 = vmatpush1.bf16.msra.mxu0 %v2781
        %3077 = vmatprep.subr.bf16.mxu0 0
        %3078 = vmatpush1.bf16.msra.mxu0 %v2780
        %3079 = vmatprep.subr.bf16.mxu0 0
        %3080 = vmatpush1.bf16.msra.mxu0 %v2779
        %3081 = vmatprep.subr.bf16.mxu0 0
        %3082 = vmatpush1.bf16.msra.mxu0 %v2778
        %3083 = vmatprep.subr.bf16.mxu0 0
        %3084 = vmatpush2.bf16.msra.mxu0 %v2793
        %3085 = vmatprep.subr.bf16.mxu0 0
        %3086 = vmatpush2.bf16.msra.mxu0 %v2792
        %3087 = vmatprep.subr.bf16.mxu0 0
        %3088 = vmatpush2.bf16.msra.mxu0 %v2791
        %3089 = vmatprep.subr.bf16.mxu0 0
        %3090 = vmatpush2.bf16.msra.mxu0 %v2790
        %3091 = vmatprep.subr.bf16.mxu0 0
        %3092 = vmatpush2.bf16.msra.mxu0 %v2789
        %3093 = vmatprep.subr.bf16.mxu0 0
        %3094 = vmatpush2.bf16.msra.mxu0 %v2788
        %3095 = vmatprep.subr.bf16.mxu0 0
        %3096 = vmatpush2.bf16.msra.mxu0 %v2787
        %3097 = vmatprep.subr.bf16.mxu0 0
        %3098 = vmatpush2.bf16.msra.mxu0 %v2786
        %3099 = vmatprep.mubr.bf16.mxu0 %v2282
        %3100 = vmatmul.mubr.bf16.gmra.mxu0 %v2315
        %v3101 = vpop.f32.mrf.mxu0
        %v3102 = vadd.f32 %v2941, %v3101
        %v3103 = vpop.f32.mrf.mxu0
        %v3104 = vpop.f32.mrf.mxu0
        %v3105 = vadd.f32 %v2944, %v3104
        %v3106 = vpop.f32.mrf.mxu0
        %3107 = vmatprep.mubr.bf16.mxu0 %v2283
        %3108 = vmatmul.mubr.bf16.gmra.mxu0 %v2314
        %v3109 = vpop.f32.mrf.mxu0
        %v3110 = vadd.f32 %v2949, %v3109
        %v3111 = vpop.f32.mrf.mxu0
        %v3112 = vpop.f32.mrf.mxu0
        %v3113 = vadd.f32 %v2952, %v3112
        %v3114 = vpop.f32.mrf.mxu0
        %3115 = vmatprep.mubr.bf16.mxu0 %v2284
        %3116 = vmatmul.mubr.bf16.gmra.mxu0 %v2315
        %v3117 = vpop.f32.mrf.mxu0
        %v3118 = vadd.f32 %v2957, %v3117
        %v3119 = vpop.f32.mrf.mxu0
        %v3120 = vpop.f32.mrf.mxu0
        %v3121 = vadd.f32 %v2960, %v3120
        %v3122 = vpop.f32.mrf.mxu0
        %3123 = vmatprep.mubr.bf16.mxu0 %v2285
        %3124 = vmatmul.mubr.bf16.gmra.mxu0 %v2316
        %v3125 = vpop.f32.mrf.mxu0
        %v3126 = vadd.f32 %v2965, %v3125
        %v3127 = vpop.f32.mrf.mxu0
        %v3128 = vpop.f32.mrf.mxu0
        %v3129 = vadd.f32 %v2968, %v3128
        %v3130 = vpop.f32.mrf.mxu0
        %3131 = vmatprep.mubr.bf16.mxu0 %v2286
        %3132 = vmatmul.mubr.bf16.gmra.mxu0 %v2317
        %v3133 = vpop.f32.mrf.mxu0
        %v3134 = vadd.f32 %v2973, %v3133
        %v3135 = vpop.f32.mrf.mxu0
        %v3136 = vpop.f32.mrf.mxu0
        %v3137 = vadd.f32 %v2976, %v3136
        %v3138 = vpop.f32.mrf.mxu0
        %3139 = vmatprep.mubr.bf16.mxu0 %v2287
        %3140 = vmatmul.mubr.bf16.gmra.mxu0 %v2318
        %v3141 = vpop.f32.mrf.mxu0
        %v3142 = vadd.f32 %v2981, %v3141
        %v3143 = vpop.f32.mrf.mxu0
        %v3144 = vpop.f32.mrf.mxu0
        %v3145 = vadd.f32 %v2984, %v3144
        %v3146 = vpop.f32.mrf.mxu0
        %3147 = vmatprep.mubr.bf16.mxu0 %v2288
        %3148 = vmatmul.mubr.bf16.gmra.mxu0 %v2319
        %v3149 = vpop.f32.mrf.mxu0
        %v3150 = vadd.f32 %v2989, %v3149
        %v3151 = vpop.f32.mrf.mxu0
        %v3152 = vpop.f32.mrf.mxu0
        %v3153 = vadd.f32 %v2992, %v3152
        %v3154 = vpop.f32.mrf.mxu0
        %3155 = vmatprep.mubr.bf16.mxu0 %v2289
        %3156 = vmatmul.mubr.bf16.gmra.mxu0 %v2320
        %v3157 = vpop.f32.mrf.mxu0
        %v3158 = vadd.f32 %v2997, %v3157
        %v3159 = vpop.f32.mrf.mxu0
        %v3160 = vpop.f32.mrf.mxu0
        %v3161 = vadd.f32 %v3000, %v3160
        %v3162 = vpop.f32.mrf.mxu0
        %3163 = vmatprep.mubr.bf16.mxu0 %v2290
        %3164 = vmatmul.mubr.bf16.gmra.mxu0 %v2321
        %v3165 = vpop.f32.mrf.mxu0
        %v3166 = vadd.f32 %v3005, %v3165
        %v3167 = vpop.f32.mrf.mxu0
        %v3168 = vpop.f32.mrf.mxu0
        %v3169 = vadd.f32 %v3008, %v3168
        %v3170 = vpop.f32.mrf.mxu0
        %3171 = vmatprep.mubr.bf16.mxu0 %v2291
        %3172 = vmatmul.mubr.bf16.gmra.mxu0 %v2322
        %v3173 = vpop.f32.mrf.mxu0
        %v3174 = vadd.f32 %v3013, %v3173
        %v3175 = vpop.f32.mrf.mxu0
        %v3176 = vpop.f32.mrf.mxu0
        %v3177 = vadd.f32 %v3016, %v3176
        %v3178 = vpop.f32.mrf.mxu0
        %3179 = vmatprep.mubr.bf16.mxu0 %v2292
        %3180 = vmatmul.mubr.bf16.gmra.mxu0 %v2323
        %v3181 = vpop.f32.mrf.mxu0
        %v3182 = vadd.f32 %v3021, %v3181
        %v3183 = vpop.f32.mrf.mxu0
        %v3184 = vpop.f32.mrf.mxu0
        %v3185 = vadd.f32 %v3024, %v3184
        %v3186 = vpop.f32.mrf.mxu0
        %3187 = vmatprep.mubr.bf16.mxu0 %v2293
        %3188 = vmatmul.mubr.bf16.gmra.mxu0 %v2324
        %v3189 = vpop.f32.mrf.mxu0
        %v3190 = vadd.f32 %v3029, %v3189
        %v3191 = vpop.f32.mrf.mxu0
        %v3192 = vpop.f32.mrf.mxu0
        %v3193 = vadd.f32 %v3032, %v3192
        %v3194 = vpop.f32.mrf.mxu0
        %3195 = vmatprep.mubr.bf16.mxu0 %v2294
        %3196 = vmatmul.mubr.bf16.gmra.mxu0 %v2325
        %v3197 = vpop.f32.mrf.mxu0
        %v3198 = vadd.f32 %v3037, %v3197
        %v3199 = vpop.f32.mrf.mxu0
        %v3200 = vpop.f32.mrf.mxu0
        %v3201 = vadd.f32 %v3040, %v3200
        %v3202 = vpop.f32.mrf.mxu0
        %3203 = vmatprep.mubr.bf16.mxu0 %v2295
        %3204 = vmatmul.mubr.bf16.gmra.mxu0 %v2326
        %v3205 = vpop.f32.mrf.mxu0
        %v3206 = vadd.f32 %v3045, %v3205
        %v3207 = vpop.f32.mrf.mxu0
        %v3208 = vpop.f32.mrf.mxu0
        %v3209 = vadd.f32 %v3048, %v3208
        %v3210 = vpop.f32.mrf.mxu0
        %3211 = vmatprep.mubr.bf16.mxu0 %v2296
        %3212 = vmatmul.mubr.bf16.gmra.mxu0 %v2327
        %v3213 = vpop.f32.mrf.mxu0
        %v3214 = vadd.f32 %v3053, %v3213
        %v3215 = vpop.f32.mrf.mxu0
        %v3216 = vpop.f32.mrf.mxu0
        %v3217 = vadd.f32 %v3056, %v3216
        %v3218 = vpop.f32.mrf.mxu0
        %3219 = vmatprep.mubr.bf16.mxu0 %v2297
        %3220 = vmatmul.mubr.bf16.gmra.mxu0 %v2328
        %v3221 = vpop.f32.mrf.mxu0
        %v3222 = vadd.f32 %v3061, %v3221
        %v3223 = vpop.f32.mrf.mxu0
        %v3224 = vpop.f32.mrf.mxu0
        %v3225 = vadd.f32 %v3064, %v3224
        %v3226 = vpop.f32.mrf.mxu0
        %3227 = vdwg.mxu0
        %3228 = vmatprep.subr.bf16.mxu0 0
        %3229 = vmatpush1.bf16.msra.mxu0 %v2801
        %3230 = vmatprep.subr.bf16.mxu0 0
        %3231 = vmatpush1.bf16.msra.mxu0 %v2800
        %3232 = vmatprep.subr.bf16.mxu0 0
        %3233 = vmatpush1.bf16.msra.mxu0 %v2799
        %3234 = vmatprep.subr.bf16.mxu0 0
        %3235 = vmatpush1.bf16.msra.mxu0 %v2798
        %3236 = vmatprep.subr.bf16.mxu0 0
        %3237 = vmatpush1.bf16.msra.mxu0 %v2797
        %3238 = vmatprep.subr.bf16.mxu0 0
        %3239 = vmatpush1.bf16.msra.mxu0 %v2796
        %3240 = vmatprep.subr.bf16.mxu0 0
        %3241 = vmatpush1.bf16.msra.mxu0 %v2795
        %3242 = vmatprep.subr.bf16.mxu0 0
        %3243 = vmatpush1.bf16.msra.mxu0 %v2794
        %3244 = vmatprep.subr.bf16.mxu0 0
        %3245 = vmatpush2.bf16.msra.mxu0 %v2809
        %3246 = vmatprep.subr.bf16.mxu0 0
        %3247 = vmatpush2.bf16.msra.mxu0 %v2808
        %3248 = vmatprep.subr.bf16.mxu0 0
        %3249 = vmatpush2.bf16.msra.mxu0 %v2807
        %3250 = vmatprep.subr.bf16.mxu0 0
        %3251 = vmatpush2.bf16.msra.mxu0 %v2806
        %3252 = vmatprep.subr.bf16.mxu0 0
        %3253 = vmatpush2.bf16.msra.mxu0 %v2805
        %3254 = vmatprep.subr.bf16.mxu0 0
        %3255 = vmatpush2.bf16.msra.mxu0 %v2804
        %3256 = vmatprep.subr.bf16.mxu0 0
        %3257 = vmatpush2.bf16.msra.mxu0 %v2803
        %3258 = vmatprep.subr.bf16.mxu0 0
        %3259 = vmatpush2.bf16.msra.mxu0 %v2802
        %3260 = vmatprep.mubr.bf16.mxu0 %v2314
        %3261 = vmatmul.mubr.bf16.gmra.mxu0 %v2298
        %v3262 = vpop.f32.mrf.mxu0
        %v3263 = vadd.f32 %v3102, %v3262
        %v3264 = vpop.f32.mrf.mxu0
        %v3265 = vpop.f32.mrf.mxu0
        %v3266 = vadd.f32 %v3105, %v3265
        %v3267 = vpop.f32.mrf.mxu0
        %3268 = vmatprep.mubr.bf16.mxu0 %v2315
        %3269 = vmatmul.mubr.bf16.gmra.mxu0 %v2299
        %v3270 = vpop.f32.mrf.mxu0
        %v3271 = vadd.f32 %v3110, %v3270
        %v3272 = vpop.f32.mrf.mxu0
        %v3273 = vpop.f32.mrf.mxu0
        %v3274 = vadd.f32 %v3113, %v3273
        %v3275 = vpop.f32.mrf.mxu0
        %3276 = vmatprep.mubr.bf16.mxu0 %v2316
        %3277 = vmatmul.mubr.bf16.gmra.mxu0 %v2300
        %v3278 = vpop.f32.mrf.mxu0
        %v3279 = vadd.f32 %v3118, %v3278
        %v3280 = vpop.f32.mrf.mxu0
        %v3281 = vpop.f32.mrf.mxu0
        %v3282 = vadd.f32 %v3121, %v3281
        %v3283 = vpop.f32.mrf.mxu0
        %3284 = vmatprep.mubr.bf16.mxu0 %v2317
        %3285 = vmatmul.mubr.bf16.gmra.mxu0 %v2301
        %v3286 = vpop.f32.mrf.mxu0
        %v3287 = vadd.f32 %v3126, %v3286
        %v3288 = vpop.f32.mrf.mxu0
        %v3289 = vpop.f32.mrf.mxu0
        %v3290 = vadd.f32 %v3129, %v3289
        %v3291 = vpop.f32.mrf.mxu0
        %3292 = vmatprep.mubr.bf16.mxu0 %v2318
        %3293 = vmatmul.mubr.bf16.gmra.mxu0 %v2302
        %v3294 = vpop.f32.mrf.mxu0
        %v3295 = vadd.f32 %v3134, %v3294
        %v3296 = vpop.f32.mrf.mxu0
        %v3297 = vpop.f32.mrf.mxu0
        %v3298 = vadd.f32 %v3137, %v3297
        %v3299 = vpop.f32.mrf.mxu0
        %3300 = vmatprep.mubr.bf16.mxu0 %v2319
        %3301 = vmatmul.mubr.bf16.gmra.mxu0 %v2303
        %v3302 = vpop.f32.mrf.mxu0
        %v3303 = vadd.f32 %v3142, %v3302
        %v3304 = vpop.f32.mrf.mxu0
        %v3305 = vpop.f32.mrf.mxu0
        %v3306 = vadd.f32 %v3145, %v3305
        %v3307 = vpop.f32.mrf.mxu0
        %3308 = vmatprep.mubr.bf16.mxu0 %v2320
        %3309 = vmatmul.mubr.bf16.gmra.mxu0 %v2304
        %v3310 = vpop.f32.mrf.mxu0
        %v3311 = vadd.f32 %v3150, %v3310
        %v3312 = vpop.f32.mrf.mxu0
        %v3313 = vpop.f32.mrf.mxu0
        %v3314 = vadd.f32 %v3153, %v3313
        %v3315 = vpop.f32.mrf.mxu0
        %3316 = vmatprep.mubr.bf16.mxu0 %v2321
        %3317 = vmatmul.mubr.bf16.gmra.mxu0 %v2305
        %v3318 = vpop.f32.mrf.mxu0
        %v3319 = vadd.f32 %v3158, %v3318
        %v3320 = vpop.f32.mrf.mxu0
        %v3321 = vpop.f32.mrf.mxu0
        %v3322 = vadd.f32 %v3161, %v3321
        %v3323 = vpop.f32.mrf.mxu0
        %3324 = vmatprep.mubr.bf16.mxu0 %v2322
        %3325 = vmatmul.mubr.bf16.gmra.mxu0 %v2306
        %v3326 = vpop.f32.mrf.mxu0
        %v3327 = vadd.f32 %v3166, %v3326
        %v3328 = vpop.f32.mrf.mxu0
        %v3329 = vpop.f32.mrf.mxu0
        %v3330 = vadd.f32 %v3169, %v3329
        %v3331 = vpop.f32.mrf.mxu0
        %3332 = vmatprep.mubr.bf16.mxu0 %v2323
        %3333 = vmatmul.mubr.bf16.gmra.mxu0 %v2307
        %v3334 = vpop.f32.mrf.mxu0
        %v3335 = vadd.f32 %v3174, %v3334
        %v3336 = vpop.f32.mrf.mxu0
        %v3337 = vpop.f32.mrf.mxu0
        %v3338 = vadd.f32 %v3177, %v3337
        %v3339 = vpop.f32.mrf.mxu0
        %3340 = vmatprep.mubr.bf16.mxu0 %v2324
        %3341 = vmatmul.mubr.bf16.gmra.mxu0 %v2308
        %v3342 = vpop.f32.mrf.mxu0
        %v3343 = vadd.f32 %v3182, %v3342
        %v3344 = vpop.f32.mrf.mxu0
        %v3345 = vpop.f32.mrf.mxu0
        %v3346 = vadd.f32 %v3185, %v3345
        %v3347 = vpop.f32.mrf.mxu0
        %3348 = vmatprep.mubr.bf16.mxu0 %v2325
        %3349 = vmatmul.mubr.bf16.gmra.mxu0 %v2309
        %v3350 = vpop.f32.mrf.mxu0
        %v3351 = vadd.f32 %v3190, %v3350
        %v3352 = vpop.f32.mrf.mxu0
        %v3353 = vpop.f32.mrf.mxu0
        %v3354 = vadd.f32 %v3193, %v3353
        %v3355 = vpop.f32.mrf.mxu0
        %3356 = vmatprep.mubr.bf16.mxu0 %v2326
        %3357 = vmatmul.mubr.bf16.gmra.mxu0 %v2310
        %v3358 = vpop.f32.mrf.mxu0
        %v3359 = vadd.f32 %v3198, %v3358
        %v3360 = vpop.f32.mrf.mxu0
        %v3361 = vpop.f32.mrf.mxu0
        %v3362 = vadd.f32 %v3201, %v3361
        %v3363 = vpop.f32.mrf.mxu0
        %3364 = vmatprep.mubr.bf16.mxu0 %v2327
        %3365 = vmatmul.mubr.bf16.gmra.mxu0 %v2311
        %v3366 = vpop.f32.mrf.mxu0
        %v3367 = vadd.f32 %v3206, %v3366
        %v3368 = vpop.f32.mrf.mxu0
        %v3369 = vpop.f32.mrf.mxu0
        %v3370 = vadd.f32 %v3209, %v3369
        %v3371 = vpop.f32.mrf.mxu0
        %3372 = vmatprep.mubr.bf16.mxu0 %v2328
        %3373 = vmatmul.mubr.bf16.gmra.mxu0 %v2312
        %v3374 = vpop.f32.mrf.mxu0
        %v3375 = vadd.f32 %v3214, %v3374
        %v3376 = vpop.f32.mrf.mxu0
        %v3377 = vpop.f32.mrf.mxu0
        %v3378 = vadd.f32 %v3217, %v3377
        %v3379 = vpop.f32.mrf.mxu0
        %3380 = vmatprep.mubr.bf16.mxu0 %v2329
        %3381 = vmatmul.mubr.bf16.gmra.mxu0 %v2313
        %v3382 = vpop.f32.mrf.mxu0
        %v3383 = vadd.f32 %v3222, %v3382
        %v3384 = vpop.f32.mrf.mxu0
        %v3385 = vpop.f32.mrf.mxu0
        %v3386 = vadd.f32 %v3225, %v3385
        %v3387 = vpop.f32.mrf.mxu0
        %3388 = vdwg.mxu0
        %3389 = vmatprep.subr.bf16.mxu0 0
        %3390 = vmatpush1.bf16.msra.mxu0 %v2817
        %3391 = vmatprep.subr.bf16.mxu0 0
        %3392 = vmatpush1.bf16.msra.mxu0 %v2816
        %3393 = vmatprep.subr.bf16.mxu0 0
        %3394 = vmatpush1.bf16.msra.mxu0 %v2815
        %3395 = vmatprep.subr.bf16.mxu0 0
        %3396 = vmatpush1.bf16.msra.mxu0 %v2814
        %3397 = vmatprep.subr.bf16.mxu0 0
        %3398 = vmatpush1.bf16.msra.mxu0 %v2813
        %3399 = vmatprep.subr.bf16.mxu0 0
        %3400 = vmatpush1.bf16.msra.mxu0 %v2812
        %3401 = vmatprep.subr.bf16.mxu0 0
        %3402 = vmatpush1.bf16.msra.mxu0 %v2811
        %3403 = vmatprep.subr.bf16.mxu0 0
        %3404 = vmatpush1.bf16.msra.mxu0 %v2810
        %3405 = vmatprep.subr.bf16.mxu0 0
        %3406 = vmatpush2.bf16.msra.mxu0 %v2825
        %3407 = vmatprep.subr.bf16.mxu0 0
        %3408 = vmatpush2.bf16.msra.mxu0 %v2824
        %3409 = vmatprep.subr.bf16.mxu0 0
        %3410 = vmatpush2.bf16.msra.mxu0 %v2823
        %3411 = vmatprep.subr.bf16.mxu0 0
        %3412 = vmatpush2.bf16.msra.mxu0 %v2822
        %3413 = vmatprep.subr.bf16.mxu0 0
        %3414 = vmatpush2.bf16.msra.mxu0 %v2821
        %3415 = vmatprep.subr.bf16.mxu0 0
        %3416 = vmatpush2.bf16.msra.mxu0 %v2820
        %3417 = vmatprep.subr.bf16.mxu0 0
        %3418 = vmatpush2.bf16.msra.mxu0 %v2819
        %3419 = vmatprep.subr.bf16.mxu0 0
        %3420 = vmatpush2.bf16.msra.mxu0 %v2818
        %3421 = vmatprep.mubr.bf16.mxu0 %v2299
        %3422 = vmatmul.mubr.bf16.gmra.mxu0 %v2283
        %v3423 = vpop.f32.mrf.mxu0
        %v3424 = vadd.f32 %v3263, %v3423
        %v3425 = vpop.f32.mrf.mxu0
        %v3426 = vpop.f32.mrf.mxu0
        %v3427 = vadd.f32 %v3266, %v3426
        %v3428 = vpop.f32.mrf.mxu0
        %3429 = vmatprep.mubr.bf16.mxu0 %v2300
        %3430 = vmatmul.mubr.bf16.gmra.mxu0 %v2284
        %v3431 = vpop.f32.mrf.mxu0
        %v3432 = vadd.f32 %v3271, %v3431
        %v3433 = vpop.f32.mrf.mxu0
        %v3434 = vpop.f32.mrf.mxu0
        %v3435 = vadd.f32 %v3274, %v3434
        %v3436 = vpop.f32.mrf.mxu0
        %3437 = vmatprep.mubr.bf16.mxu0 %v2301
        %3438 = vmatmul.mubr.bf16.gmra.mxu0 %v2285
        %v3439 = vpop.f32.mrf.mxu0
        %v3440 = vadd.f32 %v3279, %v3439
        %v3441 = vpop.f32.mrf.mxu0
        %v3442 = vpop.f32.mrf.mxu0
        %v3443 = vadd.f32 %v3282, %v3442
        %v3444 = vpop.f32.mrf.mxu0
        %3445 = vmatprep.mubr.bf16.mxu0 %v2302
        %3446 = vmatmul.mubr.bf16.gmra.mxu0 %v2286
        %v3447 = vpop.f32.mrf.mxu0
        %v3448 = vadd.f32 %v3287, %v3447
        %v3449 = vpop.f32.mrf.mxu0
        %v3450 = vpop.f32.mrf.mxu0
        %v3451 = vadd.f32 %v3290, %v3450
        %v3452 = vpop.f32.mrf.mxu0
        %3453 = vmatprep.mubr.bf16.mxu0 %v2303
        %3454 = vmatmul.mubr.bf16.gmra.mxu0 %v2287
        %v3455 = vpop.f32.mrf.mxu0
        %v3456 = vadd.f32 %v3295, %v3455
        %v3457 = vpop.f32.mrf.mxu0
        %v3458 = vpop.f32.mrf.mxu0
        %v3459 = vadd.f32 %v3298, %v3458
        %v3460 = vpop.f32.mrf.mxu0
        %3461 = vmatprep.mubr.bf16.mxu0 %v2304
        %3462 = vmatmul.mubr.bf16.gmra.mxu0 %v2288
        %v3463 = vpop.f32.mrf.mxu0
        %v3464 = vadd.f32 %v3303, %v3463
        %v3465 = vpop.f32.mrf.mxu0
        %v3466 = vpop.f32.mrf.mxu0
        %v3467 = vadd.f32 %v3306, %v3466
        %v3468 = vpop.f32.mrf.mxu0
        %3469 = vmatprep.mubr.bf16.mxu0 %v2305
        %3470 = vmatmul.mubr.bf16.gmra.mxu0 %v2289
        %v3471 = vpop.f32.mrf.mxu0
        %v3472 = vadd.f32 %v3311, %v3471
        %v3473 = vpop.f32.mrf.mxu0
        %v3474 = vpop.f32.mrf.mxu0
        %v3475 = vadd.f32 %v3314, %v3474
        %v3476 = vpop.f32.mrf.mxu0
        %3477 = vmatprep.mubr.bf16.mxu0 %v2306
        %3478 = vmatmul.mubr.bf16.gmra.mxu0 %v2290
        %v3479 = vpop.f32.mrf.mxu0
        %v3480 = vadd.f32 %v3319, %v3479
        %v3481 = vpop.f32.mrf.mxu0
        %v3482 = vpop.f32.mrf.mxu0
        %v3483 = vadd.f32 %v3322, %v3482
        %v3484 = vpop.f32.mrf.mxu0
        %3485 = vmatprep.mubr.bf16.mxu0 %v2307
        %3486 = vmatmul.mubr.bf16.gmra.mxu0 %v2291
        %v3487 = vpop.f32.mrf.mxu0
        %v3488 = vadd.f32 %v3327, %v3487
        %v3489 = vpop.f32.mrf.mxu0
        %v3490 = vpop.f32.mrf.mxu0
        %v3491 = vadd.f32 %v3330, %v3490
        %v3492 = vpop.f32.mrf.mxu0
        %3493 = vmatprep.mubr.bf16.mxu0 %v2308
        %3494 = vmatmul.mubr.bf16.gmra.mxu0 %v2292
        %v3495 = vpop.f32.mrf.mxu0
        %v3496 = vadd.f32 %v3335, %v3495
        %v3497 = vpop.f32.mrf.mxu0
        %v3498 = vpop.f32.mrf.mxu0
        %v3499 = vadd.f32 %v3338, %v3498
        %v3500 = vpop.f32.mrf.mxu0
        %3501 = vmatprep.mubr.bf16.mxu0 %v2309
        %3502 = vmatmul.mubr.bf16.gmra.mxu0 %v2293
        %v3503 = vpop.f32.mrf.mxu0
        %v3504 = vadd.f32 %v3343, %v3503
        %v3505 = vpop.f32.mrf.mxu0
        %v3506 = vpop.f32.mrf.mxu0
        %v3507 = vadd.f32 %v3346, %v3506
        %v3508 = vpop.f32.mrf.mxu0
        %3509 = vmatprep.mubr.bf16.mxu0 %v2310
        %3510 = vmatmul.mubr.bf16.gmra.mxu0 %v2294
        %v3511 = vpop.f32.mrf.mxu0
        %v3512 = vadd.f32 %v3351, %v3511
        %v3513 = vpop.f32.mrf.mxu0
        %v3514 = vpop.f32.mrf.mxu0
        %v3515 = vadd.f32 %v3354, %v3514
        %v3516 = vpop.f32.mrf.mxu0
        %3517 = vmatprep.mubr.bf16.mxu0 %v2311
        %3518 = vmatmul.mubr.bf16.gmra.mxu0 %v2295
        %v3519 = vpop.f32.mrf.mxu0
        %v3520 = vadd.f32 %v3359, %v3519
        %v3521 = vpop.f32.mrf.mxu0
        %v3522 = vpop.f32.mrf.mxu0
        %v3523 = vadd.f32 %v3362, %v3522
        %v3524 = vpop.f32.mrf.mxu0
        %3525 = vmatprep.mubr.bf16.mxu0 %v2312
        %3526 = vmatmul.mubr.bf16.gmra.mxu0 %v2296
        %v3527 = vpop.f32.mrf.mxu0
        %v3528 = vadd.f32 %v3367, %v3527
        %v3529 = vpop.f32.mrf.mxu0
        %v3530 = vpop.f32.mrf.mxu0
        %v3531 = vadd.f32 %v3370, %v3530
        %v3532 = vpop.f32.mrf.mxu0
        %3533 = vmatprep.mubr.bf16.mxu0 %v2313
        %3534 = vmatmul.mubr.bf16.gmra.mxu0 %v2297
        %v3535 = vpop.f32.mrf.mxu0
        %v3536 = vadd.f32 %v3375, %v3535
        %v3537 = vpop.f32.mrf.mxu0
        %v3538 = vpop.f32.mrf.mxu0
        %v3539 = vadd.f32 %v3378, %v3538
        %v3540 = vpop.f32.mrf.mxu0
        %3541 = vmatprep.mubr.bf16.mxu0 %v2312
        %3542 = vmatmul.mubr.bf16.gmra.mxu0 %v2296
        %v3543 = vpop.f32.mrf.mxu0
        %v3544 = vadd.f32 %v3383, %v3543
        %v3545 = vpop.f32.mrf.mxu0
        %v3546 = vpop.f32.mrf.mxu0
        %v3547 = vadd.f32 %v3386, %v3546
        %v3548 = vpop.f32.mrf.mxu0
        %3549 = vdwg.mxu0
        %3550 = vmatprep.subr.bf16.mxu0 0
        %3551 = vmatpush1.bf16.msra.mxu0 %v2833
        %3552 = vmatprep.subr.bf16.mxu0 0
        %3553 = vmatpush1.bf16.msra.mxu0 %v2832
        %3554 = vmatprep.subr.bf16.mxu0 0
        %3555 = vmatpush1.bf16.msra.mxu0 %v2831
        %3556 = vmatprep.subr.bf16.mxu0 0
        %3557 = vmatpush1.bf16.msra.mxu0 %v2830
        %3558 = vmatprep.subr.bf16.mxu0 0
        %3559 = vmatpush1.bf16.msra.mxu0 %v2829
        %3560 = vmatprep.subr.bf16.mxu0 0
        %3561 = vmatpush1.bf16.msra.mxu0 %v2828
        %3562 = vmatprep.subr.bf16.mxu0 0
        %3563 = vmatpush1.bf16.msra.mxu0 %v2827
        %3564 = vmatprep.subr.bf16.mxu0 0
        %3565 = vmatpush1.bf16.msra.mxu0 %v2826
        %3566 = vmatprep.subr.bf16.mxu0 0
        %3567 = vmatpush2.bf16.msra.mxu0 0
        %3568 = vmatprep.subr.bf16.mxu0 0
        %3569 = vmatpush2.bf16.msra.mxu0 0
        %3570 = vmatprep.subr.bf16.mxu0 0
        %3571 = vmatpush2.bf16.msra.mxu0 0
        %3572 = vmatprep.subr.bf16.mxu0 0
        %3573 = vmatpush2.bf16.msra.mxu0 0
        %3574 = vmatprep.subr.bf16.mxu0 0
        %3575 = vmatpush2.bf16.msra.mxu0 0
        %3576 = vmatprep.subr.bf16.mxu0 0
        %3577 = vmatpush2.bf16.msra.mxu0 0
        %3578 = vmatprep.subr.bf16.mxu0 0
        %3579 = vmatpush2.bf16.msra.mxu0 0
        %3580 = vmatprep.subr.bf16.mxu0 0
        %3581 = vmatpush2.bf16.msra.mxu0 0
        %3582 = vmatprep.mubr.bf16.mxu0 0
        %3583 = vmatmul.mubr.bf16.gmra.mxu0 %v2315
        %v3584 = vpop.f32.mrf.mxu0
        %v3585 = vadd.f32 %v3424, %v3584
        %v3586 = vpop.f32.mrf.mxu0
        %v3587 = vpop.f32.mrf.mxu0
        %v3588 = vadd.f32 %v3427, %v3587
        %v3589 = vpop.f32.mrf.mxu0
        %3590 = vmatprep.mubr.bf16.mxu0 0
        %3591 = vmatmul.mubr.bf16.gmra.mxu0 %v2316
        %v3592 = vpop.f32.mrf.mxu0
        %v3593 = vadd.f32 %v3432, %v3592
        %v3594 = vpop.f32.mrf.mxu0
        %v3595 = vpop.f32.mrf.mxu0
        %v3596 = vadd.f32 %v3435, %v3595
        %v3597 = vpop.f32.mrf.mxu0
        %3598 = vmatprep.mubr.bf16.mxu0 0
        %3599 = vmatmul.mubr.bf16.gmra.mxu0 %v2317
        %v3600 = vpop.f32.mrf.mxu0
        %v3601 = vadd.f32 %v3440, %v3600
        %v3602 = vpop.f32.mrf.mxu0
        %v3603 = vpop.f32.mrf.mxu0
        %v3604 = vadd.f32 %v3443, %v3603
        %v3605 = vpop.f32.mrf.mxu0
        %3606 = vmatprep.mubr.bf16.mxu0 0
        %3607 = vmatmul.mubr.bf16.gmra.mxu0 %v2318
        %v3608 = vpop.f32.mrf.mxu0
        %v3609 = vadd.f32 %v3448, %v3608
        %v3610 = vpop.f32.mrf.mxu0
        %v3611 = vpop.f32.mrf.mxu0
        %v3612 = vadd.f32 %v3451, %v3611
        %v3613 = vpop.f32.mrf.mxu0
        %3614 = vmatprep.mubr.bf16.mxu0 0
        %3615 = vmatmul.mubr.bf16.gmra.mxu0 %v2319
        %v3616 = vpop.f32.mrf.mxu0
        %v3617 = vadd.f32 %v3456, %v3616
        %v3618 = vpop.f32.mrf.mxu0
        %v3619 = vpop.f32.mrf.mxu0
        %v3620 = vadd.f32 %v3459, %v3619
        %v3621 = vpop.f32.mrf.mxu0
        %3622 = vmatprep.mubr.bf16.mxu0 0
        %3623 = vmatmul.mubr.bf16.gmra.mxu0 %v2320
        %v3624 = vpop.f32.mrf.mxu0
        %v3625 = vadd.f32 %v3464, %v3624
        %v3626 = vpop.f32.mrf.mxu0
        %v3627 = vpop.f32.mrf.mxu0
        %v3628 = vadd.f32 %v3467, %v3627
        %v3629 = vpop.f32.mrf.mxu0
        %3630 = vmatprep.mubr.bf16.mxu0 0
        %3631 = vmatmul.mubr.bf16.gmra.mxu0 %v2321
        %v3632 = vpop.f32.mrf.mxu0
        %v3633 = vadd.f32 %v3472, %v3632
        %v3634 = vpop.f32.mrf.mxu0
        %v3635 = vpop.f32.mrf.mxu0
        %v3636 = vadd.f32 %v3475, %v3635
        %v3637 = vpop.f32.mrf.mxu0
        %3638 = vmatprep.mubr.bf16.mxu0 0
        %3639 = vmatmul.mubr.bf16.gmra.mxu0 %v2322
        %v3640 = vpop.f32.mrf.mxu0
        %v3641 = vadd.f32 %v3480, %v3640
        %v3642 = vpop.f32.mrf.mxu0
        %v3643 = vpop.f32.mrf.mxu0
        %v3644 = vadd.f32 %v3483, %v3643
        %v3645 = vpop.f32.mrf.mxu0
        %3646 = vmatprep.mubr.bf16.mxu0 0
        %3647 = vmatmul.mubr.bf16.gmra.mxu0 %v2323
        %v3648 = vpop.f32.mrf.mxu0
        %v3649 = vadd.f32 %v3488, %v3648
        %v3650 = vpop.f32.mrf.mxu0
        %v3651 = vpop.f32.mrf.mxu0
        %v3652 = vadd.f32 %v3491, %v3651
        %v3653 = vpop.f32.mrf.mxu0
        %3654 = vmatprep.mubr.bf16.mxu0 0
        %3655 = vmatmul.mubr.bf16.gmra.mxu0 %v2324
        %v3656 = vpop.f32.mrf.mxu0
        %v3657 = vadd.f32 %v3496, %v3656
        %v3658 = vpop.f32.mrf.mxu0
        %v3659 = vpop.f32.mrf.mxu0
        %v3660 = vadd.f32 %v3499, %v3659
        %v3661 = vpop.f32.mrf.mxu0
        %3662 = vmatprep.mubr.bf16.mxu0 0
        %3663 = vmatmul.mubr.bf16.gmra.mxu0 %v2325
        %v3664 = vpop.f32.mrf.mxu0
        %v3665 = vadd.f32 %v3504, %v3664
        %v3666 = vpop.f32.mrf.mxu0
        %v3667 = vpop.f32.mrf.mxu0
        %v3668 = vadd.f32 %v3507, %v3667
        %v3669 = vpop.f32.mrf.mxu0
        %3670 = vmatprep.mubr.bf16.mxu0 0
        %3671 = vmatmul.mubr.bf16.gmra.mxu0 %v2326
        %v3672 = vpop.f32.mrf.mxu0
        %v3673 = vadd.f32 %v3512, %v3672
        %v3674 = vpop.f32.mrf.mxu0
        %v3675 = vpop.f32.mrf.mxu0
        %v3676 = vadd.f32 %v3515, %v3675
        %v3677 = vpop.f32.mrf.mxu0
        %3678 = vmatprep.mubr.bf16.mxu0 0
        %3679 = vmatmul.mubr.bf16.gmra.mxu0 %v2327
        %v3680 = vpop.f32.mrf.mxu0
        %v3681 = vadd.f32 %v3520, %v3680
        %v3682 = vpop.f32.mrf.mxu0
        %v3683 = vpop.f32.mrf.mxu0
        %v3684 = vadd.f32 %v3523, %v3683
        %v3685 = vpop.f32.mrf.mxu0
        %3686 = vmatprep.mubr.bf16.mxu0 0
        %3687 = vmatmul.mubr.bf16.gmra.mxu0 %v2328
        %v3688 = vpop.f32.mrf.mxu0
        %v3689 = vadd.f32 %v3528, %v3688
        %v3690 = vpop.f32.mrf.mxu0
        %v3691 = vpop.f32.mrf.mxu0
        %v3692 = vadd.f32 %v3531, %v3691
        %v3693 = vpop.f32.mrf.mxu0
        %3694 = vmatprep.mubr.bf16.mxu0 0
        %3695 = vmatmul.mubr.bf16.gmra.mxu0 %v2329
        %v3696 = vpop.f32.mrf.mxu0
        %v3697 = vadd.f32 %v3536, %v3696
        %v3698 = vpop.f32.mrf.mxu0
        %v3699 = vpop.f32.mrf.mxu0
        %v3700 = vadd.f32 %v3539, %v3699
        %v3701 = vpop.f32.mrf.mxu0
        %3702 = vmatprep.mubr.bf16.mxu0 0
        %3703 = vmatmul.mubr.bf16.gmra.mxu0 %v2328
        %v3704 = vpop.f32.mrf.mxu0
        %v3705 = vadd.f32 %v3544, %v3704
        %v3706 = vpop.f32.mrf.mxu0
        %v3707 = vpop.f32.mrf.mxu0
        %v3708 = vadd.f32 %v3547, %v3707
        %v3709 = vpop.f32.mrf.mxu0
        %3710 = vdwg.mxu0
        %v3711 = vadd.f32 %v3585, %v3588
        %v3712 = vadd.f32 %v3711, %v3593
        %v3713 = vadd.f32 %v3712, %v3596
        %v3714 = vadd.f32 %v3713, %v3601
        %v3715 = vadd.f32 %v3714, %v3604
        %v3716 = vadd.f32 %v3715, %v3609
        %v3717 = vadd.f32 %v3716, %v3612
        %v3718 = vadd.f32 %v3717, %v3617
        %v3719 = vadd.f32 %v3718, %v3620
        %v3720 = vadd.f32 %v3719, %v3625
        %v3721 = vadd.f32 %v3720, %v3628
        %v3722 = vadd.f32 %v3721, %v3633
        %v3723 = vadd.f32 %v3722, %v3636
        %v3724 = vadd.f32 %v3723, %v3641
        %v3725 = vadd.f32 %v3724, %v3644
        %v3726 = vadd.f32 %v3725, %v3649
        %v3727 = vadd.f32 %v3726, %v3652
        %v3728 = vadd.f32 %v3727, %v3657
        %v3729 = vadd.f32 %v3728, %v3660
        %v3730 = vadd.f32 %v3729, %v3665
        %v3731 = vadd.f32 %v3730, %v3668
        %v3732 = vadd.f32 %v3731, %v3673
        %v3733 = vadd.f32 %v3732, %v3676
        %v3734 = vadd.f32 %v3733, %v3681
        %v3735 = vadd.f32 %v3734, %v3684
        %v3736 = vadd.f32 %v3735, %v3689
        %v3737 = vadd.f32 %v3736, %v3692
        %v3738 = vadd.f32 %v3737, %v3697
        %v3739 = vadd.f32 %v3738, %v3700
        %v3740 = vadd.f32 %v3739, %v3705
        %v3741 = vadd.f32 %v3740, %v3708
        %v3742 = vrot.slane %v3741, 4
        %v3743 = vadd.f32 %v3741, %v3742
        %v3744 = vrot.slane %v3743, 2
        %v3745 = vadd.f32 %v3743, %v3744
        %v3746 = vrot.slane %v3745, 1
        %v3747 = vadd.f32 %v3745, %v3746
        %v3748 = vmul.f32 %v3747, %v1918
        %v3749 = vmul.f32 %v3585, %v3585
        %v3750 = vmul.f32 %v3588, %v3588
        %v3751 = vmul.f32 %v3593, %v3593
        %v3752 = vmul.f32 %v3596, %v3596
        %v3753 = vmul.f32 %v3601, %v3601
        %v3754 = vmul.f32 %v3604, %v3604
        %v3755 = vmul.f32 %v3609, %v3609
        %v3756 = vmul.f32 %v3612, %v3612
        %v3757 = vmul.f32 %v3617, %v3617
        %v3758 = vmul.f32 %v3620, %v3620
        %v3759 = vmul.f32 %v3625, %v3625
        %v3760 = vmul.f32 %v3628, %v3628
        %v3761 = vmul.f32 %v3633, %v3633
        %v3762 = vmul.f32 %v3636, %v3636
        %v3763 = vmul.f32 %v3641, %v3641
        %v3764 = vmul.f32 %v3644, %v3644
        %v3765 = vmul.f32 %v3649, %v3649
        %v3766 = vmul.f32 %v3652, %v3652
        %v3767 = vmul.f32 %v3657, %v3657
        %v3768 = vmul.f32 %v3660, %v3660
        %v3769 = vmul.f32 %v3665, %v3665
        %v3770 = vmul.f32 %v3668, %v3668
        %v3771 = vmul.f32 %v3673, %v3673
        %v3772 = vmul.f32 %v3676, %v3676
        %v3773 = vmul.f32 %v3681, %v3681
        %v3774 = vmul.f32 %v3684, %v3684
        %v3775 = vmul.f32 %v3689, %v3689
        %v3776 = vmul.f32 %v3692, %v3692
        %v3777 = vmul.f32 %v3697, %v3697
        %v3778 = vmul.f32 %v3700, %v3700
        %v3779 = vmul.f32 %v3705, %v3705
        %v3780 = vmul.f32 %v3708, %v3708
        %v3781 = vadd.f32 %v3749, %v3750
        %v3782 = vadd.f32 %v3781, %v3751
        %v3783 = vadd.f32 %v3782, %v3752
        %v3784 = vadd.f32 %v3783, %v3753
        %v3785 = vadd.f32 %v3784, %v3754
        %v3786 = vadd.f32 %v3785, %v3755
        %v3787 = vadd.f32 %v3786, %v3756
        %v3788 = vadd.f32 %v3787, %v3757
        %v3789 = vadd.f32 %v3788, %v3758
        %v3790 = vadd.f32 %v3789, %v3759
        %v3791 = vadd.f32 %v3790, %v3760
        %v3792 = vadd.f32 %v3791, %v3761
        %v3793 = vadd.f32 %v3792, %v3762
        %v3794 = vadd.f32 %v3793, %v3763
        %v3795 = vadd.f32 %v3794, %v3764
        %v3796 = vadd.f32 %v3795, %v3765
        %v3797 = vadd.f32 %v3796, %v3766
        %v3798 = vadd.f32 %v3797, %v3767
        %v3799 = vadd.f32 %v3798, %v3768
        %v3800 = vadd.f32 %v3799, %v3769
        %v3801 = vadd.f32 %v3800, %v3770
        %v3802 = vadd.f32 %v3801, %v3771
        %v3803 = vadd.f32 %v3802, %v3772
        %v3804 = vadd.f32 %v3803, %v3773
        %v3805 = vadd.f32 %v3804, %v3774
        %v3806 = vadd.f32 %v3805, %v3775
        %v3807 = vadd.f32 %v3806, %v3776
        %v3808 = vadd.f32 %v3807, %v3777
        %v3809 = vadd.f32 %v3808, %v3778
        %v3810 = vadd.f32 %v3809, %v3779
        %v3811 = vadd.f32 %v3810, %v3780
        %v3812 = vrot.slane %v3811, 4
        %v3813 = vadd.f32 %v3811, %v3812
        %v3814 = vrot.slane %v3813, 2
        %v3815 = vadd.f32 %v3813, %v3814
        %v3816 = vrot.slane %v3815, 1
        %v3817 = vadd.f32 %v3815, %v3816
        %v3818 = vmul.f32 %v3817, %v1918
        %v3819 = vsub.f32 %v3585, %v3748
        %v3820 = vsub.f32 %v3588, %v3748
        %v3821 = vsub.f32 %v3593, %v3748
        %v3822 = vsub.f32 %v3596, %v3748
        %v3823 = vsub.f32 %v3601, %v3748
        %v3824 = vsub.f32 %v3604, %v3748
        %v3825 = vsub.f32 %v3609, %v3748
        %v3826 = vsub.f32 %v3612, %v3748
        %v3827 = vsub.f32 %v3617, %v3748
        %v3828 = vsub.f32 %v3620, %v3748
        %v3829 = vsub.f32 %v3625, %v3748
        %v3830 = vsub.f32 %v3628, %v3748
        %v3831 = vsub.f32 %v3633, %v3748
        %v3832 = vsub.f32 %v3636, %v3748
        %v3833 = vsub.f32 %v3641, %v3748
        %v3834 = vsub.f32 %v3644, %v3748
        %v3835 = vsub.f32 %v3649, %v3748
        %v3836 = vsub.f32 %v3652, %v3748
        %v3837 = vsub.f32 %v3657, %v3748
        %v3838 = vsub.f32 %v3660, %v3748
        %v3839 = vsub.f32 %v3665, %v3748
        %v3840 = vsub.f32 %v3668, %v3748
        %v3841 = vsub.f32 %v3673, %v3748
        %v3842 = vsub.f32 %v3676, %v3748
        %v3843 = vsub.f32 %v3681, %v3748
        %v3844 = vsub.f32 %v3684, %v3748
        %v3845 = vsub.f32 %v3689, %v3748
        %v3846 = vsub.f32 %v3692, %v3748
        %v3847 = vsub.f32 %v3697, %v3748
        %v3848 = vsub.f32 %v3700, %v3748
        %v3849 = vsub.f32 %v3705, %v3748
        %v3850 = vsub.f32 %v3708, %v3748
        %v3851 = vmul.f32 %v3748, %v3748
        %v3852 = vsub.f32 %v3818, %v3851
        %v3853 = vadd.f32 %v3852, 1e-05
        %v3854 = vrsqrt.pop %v3853
        %v3855 = vmul.f32 %v3819, %v3854
        %v3856 = vmul.f32 %v3820, %v3854
        %v3857 = vmul.f32 %v3821, %v3854
        %v3858 = vmul.f32 %v3822, %v3854
        %v3859 = vmul.f32 %v3823, %v3854
        %v3860 = vmul.f32 %v3824, %v3854
        %v3861 = vmul.f32 %v3825, %v3854
        %v3862 = vmul.f32 %v3826, %v3854
        %v3863 = vmul.f32 %v3827, %v3854
        %v3864 = vmul.f32 %v3828, %v3854
        %v3865 = vmul.f32 %v3829, %v3854
        %v3866 = vmul.f32 %v3830, %v3854
        %v3867 = vmul.f32 %v3831, %v3854
        %v3868 = vmul.f32 %v3832, %v3854
        %v3869 = vmul.f32 %v3833, %v3854
        %v3870 = vmul.f32 %v3834, %v3854
        %v3871 = vmul.f32 %v3835, %v3854
        %v3872 = vmul.f32 %v3836, %v3854
        %v3873 = vmul.f32 %v3837, %v3854
        %v3874 = vmul.f32 %v3838, %v3854
        %v3875 = vmul.f32 %v3839, %v3854
        %v3876 = vmul.f32 %v3840, %v3854
        %v3877 = vmul.f32 %v3841, %v3854
        %v3878 = vmul.f32 %v3842, %v3854
        %v3879 = vmul.f32 %v3843, %v3854
        %v3880 = vmul.f32 %v3844, %v3854
        %v3881 = vmul.f32 %v3845, %v3854
        %v3882 = vmul.f32 %v3846, %v3854
        %v3883 = vmul.f32 %v3847, %v3854
        %v3884 = vmul.f32 %v3848, %v3854
        %v3885 = vmul.f32 %v3849, %v3854
        %v3886 = vmul.f32 %v3850, %v3854
        %v3887 = vadd.f32 %v219, %v3855
        %v3888 = vadd.f32 %v220, %v3856
        %v3889 = vadd.f32 %v221, %v3857
        %v3890 = vadd.f32 %v222, %v3858
        %v3891 = vadd.f32 %v223, %v3859
        %v3892 = vadd.f32 %v224, %v3860
        %v3893 = vadd.f32 %v225, %v3861
        %v3894 = vadd.f32 %v226, %v3862
        %v3895 = vadd.f32 %v227, %v3863
        %v3896 = vadd.f32 %v228, %v3864
        %v3897 = vadd.f32 %v229, %v3865
        %v3898 = vadd.f32 %v230, %v3866
        %v3899 = vadd.f32 %v231, %v3867
        %v3900 = vadd.f32 %v232, %v3868
        %v3901 = vadd.f32 %v233, %v3869
        %v3902 = vadd.f32 %v234, %v3870
        %v3903 = vadd.f32 %v235, %v3871
        %v3904 = vadd.f32 %v236, %v3872
        %v3905 = vadd.f32 %v237, %v3873
        %v3906 = vadd.f32 %v238, %v3874
        %v3907 = vadd.f32 %v239, %v3875
        %v3908 = vadd.f32 %v240, %v3876
        %v3909 = vadd.f32 %v241, %v3877
        %v3910 = vadd.f32 %v242, %v3878
        %v3911 = vadd.f32 %v243, %v3879
        %v3912 = vadd.f32 %v244, %v3880
        %v3913 = vadd.f32 %v245, %v3881
        %v3914 = vadd.f32 %v246, %v3882
        %v3915 = vadd.f32 %v247, %v3883
        %v3916 = vadd.f32 %v248, %v3884
        %v3917 = vadd.f32 %v249, %v3885
        %v3918 = vadd.f32 %v250, %v3886
        %3919 = vst [vmem:[%s217] sm:$0xff] %v3887
        %3920 = vst [vmem:[%s217 + $0x8] sm:$0xff] %v3888
        %3921 = vst [vmem:[%s217 + $0x10] sm:$0xff] %v3889
        %3922 = vst [vmem:[%s217 + $0x18] sm:$0xff] %v3890
        %3923 = vst [vmem:[%s217 + $0x20] sm:$0xff] %v3891
        %3924 = vst [vmem:[%s217 + $0x28] sm:$0xff] %v3892
        %3925 = vst [vmem:[%s217 + $0x30] sm:$0xff] %v3893
        %3926 = vst [vmem:[%s217 + $0x38] sm:$0xff] %v3894
        %3927 = vst [vmem:[%s217 + $0x40] sm:$0xff] %v3895
        %3928 = vst [vmem:[%s217 + $0x48] sm:$0xff] %v3896
        %3929 = vst [vmem:[%s217 + $0x50] sm:$0xff] %v3897
        %3930 = vst [vmem:[%s217 + $0x58] sm:$0xff] %v3898
        %3931 = vst [vmem:[%s217 + $0x60] sm:$0xff] %v3899
        %3932 = vst [vmem:[%s217 + $0x68] sm:$0xff] %v3900
        %3933 = vst [vmem:[%s217 + $0x70] sm:$0xff] %v3901
        %3934 = vst [vmem:[%s217 + $0x78] sm:$0xff] %v3902
        %3935 = vst [vmem:[%s217 + $0x80] sm:$0xff] %v3903
        %3936 = vst [vmem:[%s217 + $0x88] sm:$0xff] %v3904
        %3937 = vst [vmem:[%s217 + $0x90] sm:$0xff] %v3905
        %3938 = vst [vmem:[%s217 + $0x98] sm:$0xff] %v3906
        %3939 = vst [vmem:[%s217 + $0xa0] sm:$0xff] %v3907
        %3940 = vst [vmem:[%s217 + $0xa8] sm:$0xff] %v3908
        %3941 = vst [vmem:[%s217 + $0xb0] sm:$0xff] %v3909
        %3942 = vst [vmem:[%s217 + $0xb8] sm:$0xff] %v3910
        %3943 = vst [vmem:[%s217 + $0xc0] sm:$0xff] %v3911
        %3944 = vst [vmem:[%s217 + $0xc8] sm:$0xff] %v3912
        %3945 = vst [vmem:[%s217 + $0xd0] sm:$0xff] %v3913
        %3946 = vst [vmem:[%s217 + $0xd8] sm:$0xff] %v3914
        %3947 = vst [vmem:[%s217 + $0xe0] sm:$0xff] %v3915
        %3948 = vst [vmem:[%s217 + $0xe8] sm:$0xff] %v3916
        %3949 = vst [vmem:[%s217 + $0xf0] sm:$0xff] %v3917
        %3950 = vst [vmem:[%s217 + $0xf8] sm:$0xff] %v3918
        %s3951 = sand.u32 %s97, 1
        %s3952 = scalar_lea.sflag [#allocation4], %s3951
        %s3953 = sand.u32 %s97, 1
        %s3954 = smul.addr %s3953, 256
        %s3955 = scalar_lea.vmem [#allocation8], %s3954
        // Predicated region
        $region45: #{tpu_custom_call.1} parent=31 // pred_check
          %p3956 = pneg %p107
        $region46: #{tpu_custom_call.1} parent=31 // pred_check_branch
          %3958 = sbr.rel (%p3956) target = $region48
        $region47: #{tpu_custom_call.1} parent=31 // pred_region
          %s3960 = ssub.s32 4096, 4096
          %3961 = vsyncadd %s3952, %s3960
          %s3962 = smul.addr %s21, 32
          %s3963 = smul.addr %s3962, 128
          %s3964 = scalar_lea.hbm %s3, %s3963
          %s3965 = sshll.u32 %s3955, 4
          %s3966 = int_to_ptr.vmem [resolvable:$true] %s3965
          %3971 = dma.vmem_to_hbm [thread:$0]  %s3966, 4096, %s3964, %s3952, 128, 128, 8
        $region48: #{tpu_custom_call.1} parent=31 // pred_fallthru
          _
      $region32: #{tpu_custom_call.1} parent=5 // pred_fallthru
        _
      %p3972 = scmp.le.s32.totalorder 2, %s16
      // Predicated region
      $region49: #{tpu_custom_call.1} parent=5 // pred_check
        %p3973 = pneg %p3972
      $region50: #{tpu_custom_call.1} parent=5 // pred_check_branch
        %3975 = sbr.rel (%p3973) target = $region52
      $region51: #{tpu_custom_call.1} parent=5 // pred_region
        %s3976 = ssub.s32 %s16, 2
        // Predicated region
        $region53: #{tpu_custom_call.1} parent=51 // pred_check
          %p3977 = pneg %p113
        $region54: #{tpu_custom_call.1} parent=51 // pred_check_branch
          %3979 = sbr.rel (%p3977) target = $region56
        $region55: #{tpu_custom_call.1} parent=51 // pred_region
          %s3980 = sand.u32 %s98, 1
          %s3981 = scalar_lea.sflag [#allocation4], %s3980
          %s3982 = sand.u32 %s98, 1
          %s3983 = smul.addr %s3982, 256
          %s3984 = scalar_lea.vmem [#allocation8], %s3983
          %3985 = dma.done %s3981, 4096
        $region56: #{tpu_custom_call.1} parent=51 // pred_fallthru
          _
      $region52: #{tpu_custom_call.1} parent=5 // pred_fallthru
        _
    $region6: #{tpu_custom_call.1} parent=1 // loop_footer
      %s20 = sadd.s32 1, %s16
    $region7: #{tpu_custom_call.1} parent=1 // loop_footer_branch
      %15 = sbr.rel target = $region3
    $region8: #{tpu_custom_call.1} parent=1 // loop_exit
      _
    %3986 = vsyncpa [#allocation3], 1
    %s3987 = scalar_lea.sflag [#allocation3], 1
    %3988 = vsyncpa %s3987, 1
    %3989 = vsyncpa [#allocation6], 1
    %3990 = vsyncpa [#allocation4], 1
    %s3991 = scalar_lea.sflag [#allocation4], 1
    %3992 = vsyncpa %s3991, 1

</llo_original>
